<compile_context>
chip_gen: v7x
topology: tpu7x:2x2x1
jax: 0.10.0
libtpu: 0.0.40
codegen_flags: <defaults>
</compile_context>

<pallas_src>
import functools
import math

import numpy as np
import jax
import jax.numpy as jnp
from jax import lax
from jax.experimental import pallas as pl
from jax.experimental.pallas import tpu as pltpu

_INV_SQRT2 = 1.0 / math.sqrt(2.0)


def _mbconv_kernel(x_ref, w1_ref, dw_ref, fc1_ref, fc2_ref, w2_ref,
                   bias_ref, mask_ref, o_ref, *, H, W, bt):
    """One lane tile (bt images, N = bt*H*W lanes) per grid step.

    x_ref    : (Cin, N)        f32   input (also residual)
    w1_ref   : (hidden, Cin)   bf16  1x1 expand conv, BN0/BN1 folded in
    dw_ref   : (2, hidden, 9)  f32   depthwise 3x3 SK taps (taps on lanes), BN scale folded
    fc1_ref  : (d, hidden)     bf16  SK attention squeeze, BN folded in
    fc2_ref  : (2*hidden, d)   bf16  stacked per-branch attention logits
    w2_ref   : (oup, hidden)   bf16  1x1 project conv, BN2 folded in
    bias_ref : (hidden, 8)     f32   packed biases: [b1, bsk0, bsk1, bfc1, b2, ...]
    mask_ref : (2, 9, N)       f32   precomputed conv border masks (grid-invariant)
    o_ref    : (oup, N)        f32
    """
    HW = H * W
    N = bt * HW
    hidden = w1_ref.shape[0]
    d = fc1_ref.shape[0]
    oup = w2_ref.shape[0]

    x2 = x_ref[...]                                      # (Cin, N) f32 residual
    xb = x2.astype(jnp.bfloat16)

    b1 = bias_ref[:, 0:1]                                # (hidden, 1)
    bsk = (bias_ref[:, 1:2], bias_ref[:, 2:3])
    bfc1 = bias_ref[:d, 3:4]                             # (d, 1)
    b2 = bias_ref[:oup, 4:5]                             # (oup, 1)

    # --- 1x1 expand conv (+ folded BN0/BN1) + exact (erf) GELU --------------
    h = jnp.dot(w1_ref[...], xb, preferred_element_type=jnp.float32) + b1
    h = 0.5 * h * (1.0 + lax.erf(h * _INV_SQRT2))        # (hidden, N) f32
    # TODO(synk): tanh-approx GELU would move this onto the EUP, but changes
    # numerics vs PyTorch nn.GELU() (exact erf) semantics -> not applied.

    # --- SKConv: two depthwise 3x3 branches (dilation 1 and 2) --------------
    # tap = XLU lane-roll of h, precomputed border mask, per-channel VPU FMA.
    # Cross-image wrap-around reads always land on mask-zeroed lanes.
    branches = []
    for bi, dil in enumerate((1, 2)):
        acc = dw_ref[bi, :, 4:5] * h                     # centre tap (dh=dc=0)
        for t in range(9):
            if t == 4:
                continue
            dh = (t // 3 - 1) * dil
            dc = (t % 3 - 1) * dil
            off = dh * W + dc
            shifted = pltpu.roll(h, shift=(-off) % N, axis=1)
            tap_w = dw_ref[bi, :, t:t + 1]               # (hidden, 1)
            acc = acc + tap_w * (mask_ref[bi, t:t + 1, :] * shifted)
        branches.append(jnp.maximum(acc + bsk[bi], 0.0)) # folded BN shift + ReLU
    br0, br1 = branches                                  # (hidden, N) each

    # --- SK attention + 1x1 project (+ folded BN2) + residual, per image ----
    fc1w = fc1_ref[...]
    fc2w = fc2_ref[...]                                  # stacked (2*hidden, d)
    w2w = w2_ref[...]
    inv_hw = 1.0 / HW
    for b in range(bt):                                  # static, bt is small
        lo, hi = b * HW, (b + 1) * HW                    # 128-aligned lane slices
        v0 = br0[:, lo:hi]
        v1 = br1[:, lo:hi]
        s = jnp.sum(v0 + v1, axis=1, keepdims=True) * inv_hw        # (hidden, 1)
        z = jnp.dot(fc1w, s.astype(jnp.bfloat16),
                    preferred_element_type=jnp.float32) + bfc1
        z = jnp.maximum(z, 0.0)                                      # (d, 1)
        lg = jnp.dot(fc2w, z.astype(jnp.bfloat16),
                     preferred_element_type=jnp.float32)             # (2*hidden, 1)
        a0 = jax.nn.sigmoid(lg[:hidden] - lg[hidden:])               # 2-way softmax
        v = v1 + a0 * (v0 - v1)                                      # (hidden, HW)
        out = jnp.dot(w2w, v.astype(jnp.bfloat16),
                      preferred_element_type=jnp.float32) + b2       # (oup, HW)
        o_ref[:, lo:hi] = (x2[:, lo:hi] + out).astype(o_ref.dtype)


# ------------------- host-side, one-time parameter preparation ---------------
def fold_params(p):
    """Fold inference-mode BN into conv weights / biases; pack biases; cast MXU
    operands to bf16.  Called ONCE, outside the per-forward path."""
    s0, t0 = p['bn0']
    s1, t1 = p['bn1']
    w1 = p['w1']                                        # (hidden, inp)
    hidden = w1.shape[0]
    w1f = s1[:, None] * w1 * s0[None, :]
    b1f = s1 * (w1 @ t0) + t1                           # (hidden,)

    ssk = p['bnsk'][:, 0]                               # (2, hidden)
    tsk = p['bnsk'][:, 1]
    taps = p['dw'].reshape(2, hidden, 9)                # tap index = kh*3 + kw
    dwf = ssk[:, :, None] * taps                        # (2, hidden, 9), taps on lanes

    sf, tf = p['bnfc1']
    fc1f = sf[:, None] * p['fc1']                       # (d, hidden)
    d = fc1f.shape[0]

    s2, t2 = p['bn2']
    w2f = s2[:, None] * p['w2']                         # (oup, hidden)
    oup = w2f.shape[0]

    assert d <= hidden and oup <= hidden, "bias packing assumes d, oup <= hidden"
    bias = jnp.zeros((hidden, 8), jnp.float32)
    bias = bias.at[:, 0].set(b1f)
    bias = bias.at[:, 1].set(tsk[0])
    bias = bias.at[:, 2].set(tsk[1])
    bias = bias.at[:d, 3].set(tf)
    bias = bias.at[:oup, 4].set(t2)

    return {
        'w1': w1f.astype(jnp.bfloat16),
        'dw': dwf.astype(jnp.float32),
        'fc1': fc1f.astype(jnp.bfloat16),
        'fc2s': p['fc2'].reshape(2 * hidden, d).astype(jnp.bfloat16),
        'w2': w2f.astype(jnp.bfloat16),
        'bias': bias,
    }


def make_masks(H, W, bt):
    """Grid-invariant conv border masks, (2, 9, bt*H*W) f32, computed once."""
    HW = H * W
    q = np.arange(HW)
    row = q // W
    col = q % W
    masks = np.zeros((2, 9, HW), np.float32)
    for bi, dil in enumerate((1, 2)):
        for t in range(9):
            dh = (t // 3 - 1) * dil
            dc = (t % 3 - 1) * dil
            valid = ((row + dh >= 0) & (row + dh < H) &
                     (col + dc >= 0) & (col + dc < W))
            masks[bi, t] = valid.astype(np.float32)
    return jnp.asarray(np.tile(masks, (1, 1, bt)))      # tiles with period HW


# ------------------------------- forward wrapper -----------------------------
def mbconv_forward(x_nchw, fp, masks, *, bt):
    x = x_nchw.astype(jnp.float32)
    B, Cin, H, W = x.shape
    HW = H * W
    hidden = fp['w1'].shape[0]
    d = fp['fc1'].shape[0]
    oup = fp['w2'].shape[0]
    assert oup == Cin, "residual branch requires oup == inp"
    assert B % bt == 0, "batch must be divisible by the lane-tile batch factor"
    n_tile = bt * HW

    # batch folded onto the lane axis: (B,C,HW) -> (C, B*HW)
    xf = x.reshape(B, Cin, HW).transpose(1, 0, 2).reshape(Cin, B * HW)

    kernel = functools.partial(_mbconv_kernel, H=H, W=W, bt=bt)
    out = pl.pallas_call(
        kernel,
        out_shape=jax.ShapeDtypeStruct((oup, B * HW), jnp.float32),
        grid=(B // bt,),
        in_specs=[
            pl.BlockSpec((Cin, n_tile), lambda g: (0, g)),
            pl.BlockSpec((hidden, Cin), lambda g: (0, 0)),
            pl.BlockSpec((2, hidden, 9), lambda g: (0, 0, 0)),
            pl.BlockSpec((d, hidden), lambda g: (0, 0)),
            pl.BlockSpec((2 * hidden, d), lambda g: (0, 0)),
            pl.BlockSpec((oup, hidden), lambda g: (0, 0)),
            pl.BlockSpec((hidden, 8), lambda g: (0, 0)),
            pl.BlockSpec((2, 9, n_tile), lambda g: (0, 0, 0)),
        ],
        out_specs=pl.BlockSpec((oup, n_tile), lambda g: (0, g)),
        compiler_params=pltpu.CompilerParams(
            dimension_semantics=("parallel",),           # lane tiles shard across TCs
            vmem_limit_bytes=32 * 1024 * 1024),
    )(xf, fp['w1'], fp['dw'], fp['fc1'], fp['fc2s'], fp['w2'], fp['bias'], masks)

    return out.reshape(oup, B, HW).transpose(1, 0, 2).reshape(B, oup, H, W)


# ----------------------------- parameter setup (glue) ------------------------
def make_params(key, inp, oup, expansion=4, r=16, L=32, groups=32):
    hidden = inp * expansion
    assert hidden == groups, (
        "implemented SK path is depthwise: requires hidden == groups == 32")
    d = max(hidden // r, L)
    ks = jax.random.split(key, 13)

    def bn_ss(k, c):
        k1, k2, k3, k4 = jax.random.split(k, 4)
        gamma = 1.0 + 0.1 * jax.random.normal(k1, (c,), jnp.float32)
        beta = 0.1 * jax.random.normal(k2, (c,), jnp.float32)
        mean = 0.1 * jax.random.normal(k3, (c,), jnp.float32)
        var = jax.random.uniform(k4, (c,), jnp.float32, 0.5, 1.5)
        scale = gamma * jax.lax.rsqrt(var + 1e-5)
        shift = beta - mean * scale
        return jnp.stack([scale, shift])                 # (2, c)

    def conv1x1(k, cout, cin):
        return jax.random.normal(k, (cout, cin), jnp.float32) / np.sqrt(cin)

    def dwise3x3(k):                                     # PyTorch (C,1,3,3) -> (C,3,3)
        return jax.random.normal(k, (hidden, 3, 3), jnp.float32) / 3.0

    return {
        'bn0': bn_ss(ks[0], inp),                        # PreNorm BN
        'w1': conv1x1(ks[1], hidden, inp),
        'bn1': bn_ss(ks[2], hidden),
        'dw': jnp.stack([dwise3x3(ks[3]), dwise3x3(ks[4])]),           # (2,hidden,3,3)
        'bnsk': jnp.stack([bn_ss(ks[5], hidden), bn_ss(ks[6], hidden)]),
        'fc1': conv1x1(ks[7], d, hidden),
        'bnfc1': bn_ss(ks[8], d),
        'fc2': jnp.stack([conv1x1(ks[9], hidden, d),
                          conv1x1(ks[10], hidden, d)]),                # (2,hidden,d)
        'w2': conv1x1(ks[11], oup, hidden),
        'bn2': bn_ss(ks[12], oup),
    }


# ----------------------------- pure-JAX reference ----------------------------
def mbconv_reference(x_nchw, p):
    x = jnp.transpose(x_nchw, (0, 2, 3, 1)).astype(jnp.float32)       # NHWC
    hidden = p['w1'].shape[0]
    xn = x * p['bn0'][0] + p['bn0'][1]
    h = jnp.einsum('bhwc,oc->bhwo', xn, p['w1'])
    h = h * p['bn1'][0] + p['bn1'][1]
    h = 0.5 * h * (1.0 + jax.lax.erf(h * _INV_SQRT2))
    outs = []
    for bi, dil in enumerate((1, 2)):
        wk = jnp.transpose(p['dw'][bi], (1, 2, 0))[:, :, None, :]      # (3,3,1,hidden)
        y = jax.lax.conv_general_dilated(
            h, wk, window_strides=(1, 1),
            padding=((dil, dil), (dil, dil)), rhs_dilation=(dil, dil),
            dimension_numbers=('NHWC', 'HWIO', 'NHWC'),
            feature_group_count=hidden)
        y = y * p['bnsk'][bi, 0] + p['bnsk'][bi, 1]
        outs.append(jnp.maximum(y, 0.0))
    U = outs[0] + outs[1]
    s = jnp.mean(U, axis=(1, 2))                                       # (B, hidden)
    z = jnp.einsum('bc,dc->bd', s, p['fc1'])
    z = jnp.maximum(z * p['bnfc1'][0] + p['bnfc1'][1], 0.0)
    logits = jnp.stack([jnp.einsum('bd,cd->bc', z, p['fc2'][0]),
                        jnp.einsum('bd,cd->bc', z, p['fc2'][1])], axis=1)
    a = jax.nn.softmax(logits, axis=1)                                 # (B, 2, hidden)
    V = (outs[0] * a[:, 0][:, None, None, :]
         + outs[1] * a[:, 1][:, None, None, :])
    out = jnp.einsum('bhwc,oc->bhwo', V, p['w2'])
    out = out * p['bn2'][0] + p['bn2'][1]
    return jnp.transpose(x + out, (0, 3, 1, 2))


if __name__ == "__main__":
    key = jax.random.PRNGKey(0)
    kx, kp = jax.random.split(key)

    B, inp, H, W = 2, 8, 16, 16     # hidden = 32 -> groups=32 depthwise SK conv
    oup = 8                         # residual requires oup == inp
    BT = 2                          # images folded onto lanes per grid step -> N = 512

    x_nchw = jax.random.normal(kx, (B, inp, H, W), jnp.float32)        # PyTorch NCHW
    params = make_params(kp, inp, oup)

    fp = fold_params(params)        # BN folding: once, outside the per-call path
    masks = make_masks(H, W, BT)    # grid-invariant conv border masks

    fwd = jax.jit(functools.partial(mbconv_forward, bt=BT))
    y = jax.block_until_ready(fwd(x_nchw, fp, masks))
    assert y.shape == (B, oup, H, W)

    y_ref = np.asarray(mbconv_reference(x_nchw, params))
    err = np.max(np.abs(np.asarray(y) - y_ref))
    # Tolerance accounts for the bf16 MXU operand path vs the f32 reference.
    if not np.allclose(np.asarray(y), y_ref, rtol=5e-2, atol=5e-2):
        raise AssertionError(
            f"kernel/reference mismatch (bf16 MXU path), max abs err {err}")
    print("KERNEL_OK")
</pallas_src>

<mosaic_0001>
module attributes {stable_mosaic.version = 11 : i64} {
  func.func @_mbconv_kernel(%arg0: i32, %arg1: memref<8x512xf32, #tpu.memory_space<vmem>>, %arg2: memref<32x8xbf16, #tpu.memory_space<vmem>>, %arg3: memref<2x32x9xf32, #tpu.memory_space<vmem>>, %arg4: memref<32x32xbf16, #tpu.memory_space<vmem>>, %arg5: memref<64x32xbf16, #tpu.memory_space<vmem>>, %arg6: memref<8x32xbf16, #tpu.memory_space<vmem>>, %arg7: memref<32x8xf32, #tpu.memory_space<vmem>>, %arg8: memref<2x9x512xf32, #tpu.memory_space<vmem>>, %arg9: memref<8x512xf32, #tpu.memory_space<vmem>>) attributes {dimension_semantics = [#tpu.dimension_semantics<parallel>], iteration_bounds = array<i64: 1>, scalar_prefetch = 0 : i64, scratch_operands = 0 : i64, tpu.core_type = #tpu.core_type<tc>, window_params = [{transform_indices = @transform_0, window_bounds = array<i64: 8, 512>}, {pipeline_mode = #tpu.pipeline_mode<synchronous>, transform_indices = @transform_1, window_bounds = array<i64: 32, 8>}, {pipeline_mode = #tpu.pipeline_mode<synchronous>, transform_indices = @transform_2, window_bounds = array<i64: 2, 32, 9>}, {pipeline_mode = #tpu.pipeline_mode<synchronous>, transform_indices = @transform_3, window_bounds = array<i64: 32, 32>}, {pipeline_mode = #tpu.pipeline_mode<synchronous>, transform_indices = @transform_4, window_bounds = array<i64: 64, 32>}, {pipeline_mode = #tpu.pipeline_mode<synchronous>, transform_indices = @transform_5, window_bounds = array<i64: 8, 32>}, {pipeline_mode = #tpu.pipeline_mode<synchronous>, transform_indices = @transform_6, window_bounds = array<i64: 32, 8>}, {pipeline_mode = #tpu.pipeline_mode<synchronous>, transform_indices = @transform_7, window_bounds = array<i64: 2, 9, 512>}, {transform_indices = @transform_8, window_bounds = array<i64: 8, 512>}]} {
    %c0 = arith.constant 0 : index
    %c0_0 = arith.constant 0 : index
    %0 = vector.load %arg1[%c0, %c0_0] : memref<8x512xf32, #tpu.memory_space<vmem>>, vector<8x512xf32>
    %1 = arith.truncf %0 : vector<8x512xf32> to vector<8x512xbf16>
    %c0_1 = arith.constant 0 : index
    %c0_2 = arith.constant 0 : index
    %2 = vector.load %arg7[%c0_1, %c0_2] : memref<32x8xf32, #tpu.memory_space<vmem>>, vector<32x1xf32>
    %c0_3 = arith.constant 0 : index
    %c1 = arith.constant 1 : index
    %3 = vector.load %arg7[%c0_3, %c1] : memref<32x8xf32, #tpu.memory_space<vmem>>, vector<32x1xf32>
    %c0_4 = arith.constant 0 : index
    %c2 = arith.constant 2 : index
    %4 = vector.load %arg7[%c0_4, %c2] : memref<32x8xf32, #tpu.memory_space<vmem>>, vector<32x1xf32>
    %c0_5 = arith.constant 0 : index
    %c3 = arith.constant 3 : index
    %5 = vector.load %arg7[%c0_5, %c3] : memref<32x8xf32, #tpu.memory_space<vmem>>, vector<32x1xf32>
    %c0_6 = arith.constant 0 : index
    %c4 = arith.constant 4 : index
    %6 = vector.load %arg7[%c0_6, %c4] : memref<32x8xf32, #tpu.memory_space<vmem>>, vector<8x1xf32>
    %c0_7 = arith.constant 0 : index
    %c0_8 = arith.constant 0 : index
    %7 = vector.load %arg2[%c0_7, %c0_8] : memref<32x8xbf16, #tpu.memory_space<vmem>>, vector<32x8xbf16>
    %cst = arith.constant dense<0.000000e+00> : vector<32x512xf32>
    %8 = tpu.matmul %7, %1, %cst {dimension_numbers = #tpu.dot_dimension_numbers<[1], [0], [0], [1], [0, 0, 1, 1], [], []>} : vector<32x8xbf16>, vector<8x512xbf16>, vector<32x512xf32> -> vector<32x512xf32>
    %9 = vector.broadcast %2 : vector<32x1xf32> to vector<32x512xf32>
    %10 = arith.addf %8, %9 : vector<32x512xf32>
    %cst_9 = arith.constant 5.000000e-01 : f32
    %11 = vector.broadcast %cst_9 : f32 to vector<32x512xf32>
    %12 = arith.mulf %11, %10 : vector<32x512xf32>
    %cst_10 = arith.constant 0.707106769 : f32
    %13 = vector.broadcast %cst_10 : f32 to vector<32x512xf32>
    %14 = arith.mulf %10, %13 : vector<32x512xf32>
    %15 = math.erf %14 : vector<32x512xf32>
    %cst_11 = arith.constant 1.000000e+00 : f32
    %16 = vector.broadcast %cst_11 : f32 to vector<32x512xf32>
    %17 = arith.addf %16, %15 : vector<32x512xf32>
    %18 = arith.mulf %12, %17 : vector<32x512xf32>
    %c0_12 = arith.constant 0 : index
    %c0_13 = arith.constant 0 : index
    %c4_14 = arith.constant 4 : index
    %19 = vector.load %arg3[%c0_12, %c0_13, %c4_14] : memref<2x32x9xf32, #tpu.memory_space<vmem>>, vector<1x32x1xf32>
    %20 = vector.shape_cast %19 : vector<1x32x1xf32> to vector<32x1xf32>
    %21 = vector.broadcast %20 : vector<32x1xf32> to vector<32x512xf32>
    %22 = arith.mulf %21, %18 : vector<32x512xf32>
    %c17_i32 = arith.constant 17 : i32
    %23 = tpu.dynamic_rotate %18 by %c17_i32 dim 1 : vector<32x512xf32>, i32 -> vector<32x512xf32>
    %c0_15 = arith.constant 0 : index
    %c0_16 = arith.constant 0 : index
    %c0_17 = arith.constant 0 : index
    %24 = vector.load %arg3[%c0_15, %c0_16, %c0_17] : memref<2x32x9xf32, #tpu.memory_space<vmem>>, vector<1x32x1xf32>
    %25 = vector.shape_cast %24 : vector<1x32x1xf32> to vector<32x1xf32>
    %c0_18 = arith.constant 0 : index
    %c0_19 = arith.constant 0 : index
    %c0_20 = arith.constant 0 : index
    %26 = vector.load %arg8[%c0_18, %c0_19, %c0_20] : memref<2x9x512xf32, #tpu.memory_space<vmem>>, vector<1x1x512xf32>
    %27 = vector.shape_cast %26 : vector<1x1x512xf32> to vector<1x512xf32>
    %28 = vector.broadcast %27 : vector<1x512xf32> to vector<32x512xf32>
    %29 = arith.mulf %28, %23 : vector<32x512xf32>
    %30 = vector.broadcast %25 : vector<32x1xf32> to vector<32x512xf32>
    %31 = arith.mulf %30, %29 : vector<32x512xf32>
    %32 = arith.addf %22, %31 : vector<32x512xf32>
    %c16_i32 = arith.constant 16 : i32
    %33 = tpu.dynamic_rotate %18 by %c16_i32 dim 1 : vector<32x512xf32>, i32 -> vector<32x512xf32>
    %c0_21 = arith.constant 0 : index
    %c0_22 = arith.constant 0 : index
    %c1_23 = arith.constant 1 : index
    %34 = vector.load %arg3[%c0_21, %c0_22, %c1_23] : memref<2x32x9xf32, #tpu.memory_space<vmem>>, vector<1x32x1xf32>
    %35 = vector.shape_cast %34 : vector<1x32x1xf32> to vector<32x1xf32>
    %c0_24 = arith.constant 0 : index
    %c1_25 = arith.constant 1 : index
    %c0_26 = arith.constant 0 : index
    %36 = vector.load %arg8[%c0_24, %c1_25, %c0_26] : memref<2x9x512xf32, #tpu.memory_space<vmem>>, vector<1x1x512xf32>
    %37 = vector.shape_cast %36 : vector<1x1x512xf32> to vector<1x512xf32>
    %38 = vector.broadcast %37 : vector<1x512xf32> to vector<32x512xf32>
    %39 = arith.mulf %38, %33 : vector<32x512xf32>
    %40 = vector.broadcast %35 : vector<32x1xf32> to vector<32x512xf32>
    %41 = arith.mulf %40, %39 : vector<32x512xf32>
    %42 = arith.addf %32, %41 : vector<32x512xf32>
    %c15_i32 = arith.constant 15 : i32
    %43 = tpu.dynamic_rotate %18 by %c15_i32 dim 1 : vector<32x512xf32>, i32 -> vector<32x512xf32>
    %c0_27 = arith.constant 0 : index
    %c0_28 = arith.constant 0 : index
    %c2_29 = arith.constant 2 : index
    %44 = vector.load %arg3[%c0_27, %c0_28, %c2_29] : memref<2x32x9xf32, #tpu.memory_space<vmem>>, vector<1x32x1xf32>
    %45 = vector.shape_cast %44 : vector<1x32x1xf32> to vector<32x1xf32>
    %c0_30 = arith.constant 0 : index
    %c2_31 = arith.constant 2 : index
    %c0_32 = arith.constant 0 : index
    %46 = vector.load %arg8[%c0_30, %c2_31, %c0_32] : memref<2x9x512xf32, #tpu.memory_space<vmem>>, vector<1x1x512xf32>
    %47 = vector.shape_cast %46 : vector<1x1x512xf32> to vector<1x512xf32>
    %48 = vector.broadcast %47 : vector<1x512xf32> to vector<32x512xf32>
    %49 = arith.mulf %48, %43 : vector<32x512xf32>
    %50 = vector.broadcast %45 : vector<32x1xf32> to vector<32x512xf32>
    %51 = arith.mulf %50, %49 : vector<32x512xf32>
    %52 = arith.addf %42, %51 : vector<32x512xf32>
    %c1_i32 = arith.constant 1 : i32
    %53 = tpu.dynamic_rotate %18 by %c1_i32 dim 1 : vector<32x512xf32>, i32 -> vector<32x512xf32>
    %c0_33 = arith.constant 0 : index
    %c0_34 = arith.constant 0 : index
    %c3_35 = arith.constant 3 : index
    %54 = vector.load %arg3[%c0_33, %c0_34, %c3_35] : memref<2x32x9xf32, #tpu.memory_space<vmem>>, vector<1x32x1xf32>
    %55 = vector.shape_cast %54 : vector<1x32x1xf32> to vector<32x1xf32>
    %c0_36 = arith.constant 0 : index
    %c3_37 = arith.constant 3 : index
    %c0_38 = arith.constant 0 : index
    %56 = vector.load %arg8[%c0_36, %c3_37, %c0_38] : memref<2x9x512xf32, #tpu.memory_space<vmem>>, vector<1x1x512xf32>
    %57 = vector.shape_cast %56 : vector<1x1x512xf32> to vector<1x512xf32>
    %58 = vector.broadcast %57 : vector<1x512xf32> to vector<32x512xf32>
    %59 = arith.mulf %58, %53 : vector<32x512xf32>
    %60 = vector.broadcast %55 : vector<32x1xf32> to vector<32x512xf32>
    %61 = arith.mulf %60, %59 : vector<32x512xf32>
    %62 = arith.addf %52, %61 : vector<32x512xf32>
    %c511_i32 = arith.constant 511 : i32
    %63 = tpu.dynamic_rotate %18 by %c511_i32 dim 1 : vector<32x512xf32>, i32 -> vector<32x512xf32>
    %c0_39 = arith.constant 0 : index
    %c0_40 = arith.constant 0 : index
    %c5 = arith.constant 5 : index
    %64 = vector.load %arg3[%c0_39, %c0_40, %c5] : memref<2x32x9xf32, #tpu.memory_space<vmem>>, vector<1x32x1xf32>
    %65 = vector.shape_cast %64 : vector<1x32x1xf32> to vector<32x1xf32>
    %c0_41 = arith.constant 0 : index
    %c5_42 = arith.constant 5 : index
    %c0_43 = arith.constant 0 : index
    %66 = vector.load %arg8[%c0_41, %c5_42, %c0_43] : memref<2x9x512xf32, #tpu.memory_space<vmem>>, vector<1x1x512xf32>
    %67 = vector.shape_cast %66 : vector<1x1x512xf32> to vector<1x512xf32>
    %68 = vector.broadcast %67 : vector<1x512xf32> to vector<32x512xf32>
    %69 = arith.mulf %68, %63 : vector<32x512xf32>
    %70 = vector.broadcast %65 : vector<32x1xf32> to vector<32x512xf32>
    %71 = arith.mulf %70, %69 : vector<32x512xf32>
    %72 = arith.addf %62, %71 : vector<32x512xf32>
    %c497_i32 = arith.constant 497 : i32
    %73 = tpu.dynamic_rotate %18 by %c497_i32 dim 1 : vector<32x512xf32>, i32 -> vector<32x512xf32>
    %c0_44 = arith.constant 0 : index
    %c0_45 = arith.constant 0 : index
    %c6 = arith.constant 6 : index
    %74 = vector.load %arg3[%c0_44, %c0_45, %c6] : memref<2x32x9xf32, #tpu.memory_space<vmem>>, vector<1x32x1xf32>
    %75 = vector.shape_cast %74 : vector<1x32x1xf32> to vector<32x1xf32>
    %c0_46 = arith.constant 0 : index
    %c6_47 = arith.constant 6 : index
    %c0_48 = arith.constant 0 : index
    %76 = vector.load %arg8[%c0_46, %c6_47, %c0_48] : memref<2x9x512xf32, #tpu.memory_space<vmem>>, vector<1x1x512xf32>
    %77 = vector.shape_cast %76 : vector<1x1x512xf32> to vector<1x512xf32>
    %78 = vector.broadcast %77 : vector<1x512xf32> to vector<32x512xf32>
    %79 = arith.mulf %78, %73 : vector<32x512xf32>
    %80 = vector.broadcast %75 : vector<32x1xf32> to vector<32x512xf32>
    %81 = arith.mulf %80, %79 : vector<32x512xf32>
    %82 = arith.addf %72, %81 : vector<32x512xf32>
    %c496_i32 = arith.constant 496 : i32
    %83 = tpu.dynamic_rotate %18 by %c496_i32 dim 1 : vector<32x512xf32>, i32 -> vector<32x512xf32>
    %c0_49 = arith.constant 0 : index
    %c0_50 = arith.constant 0 : index
    %c7 = arith.constant 7 : index
    %84 = vector.load %arg3[%c0_49, %c0_50, %c7] : memref<2x32x9xf32, #tpu.memory_space<vmem>>, vector<1x32x1xf32>
    %85 = vector.shape_cast %84 : vector<1x32x1xf32> to vector<32x1xf32>
    %c0_51 = arith.constant 0 : index
    %c7_52 = arith.constant 7 : index
    %c0_53 = arith.constant 0 : index
    %86 = vector.load %arg8[%c0_51, %c7_52, %c0_53] : memref<2x9x512xf32, #tpu.memory_space<vmem>>, vector<1x1x512xf32>
    %87 = vector.shape_cast %86 : vector<1x1x512xf32> to vector<1x512xf32>
    %88 = vector.broadcast %87 : vector<1x512xf32> to vector<32x512xf32>
    %89 = arith.mulf %88, %83 : vector<32x512xf32>
    %90 = vector.broadcast %85 : vector<32x1xf32> to vector<32x512xf32>
    %91 = arith.mulf %90, %89 : vector<32x512xf32>
    %92 = arith.addf %82, %91 : vector<32x512xf32>
    %c495_i32 = arith.constant 495 : i32
    %93 = tpu.dynamic_rotate %18 by %c495_i32 dim 1 : vector<32x512xf32>, i32 -> vector<32x512xf32>
    %c0_54 = arith.constant 0 : index
    %c0_55 = arith.constant 0 : index
    %c8 = arith.constant 8 : index
    %94 = vector.load %arg3[%c0_54, %c0_55, %c8] : memref<2x32x9xf32, #tpu.memory_space<vmem>>, vector<1x32x1xf32>
    %95 = vector.shape_cast %94 : vector<1x32x1xf32> to vector<32x1xf32>
    %c0_56 = arith.constant 0 : index
    %c8_57 = arith.constant 8 : index
    %c0_58 = arith.constant 0 : index
    %96 = vector.load %arg8[%c0_56, %c8_57, %c0_58] : memref<2x9x512xf32, #tpu.memory_space<vmem>>, vector<1x1x512xf32>
    %97 = vector.shape_cast %96 : vector<1x1x512xf32> to vector<1x512xf32>
    %98 = vector.broadcast %97 : vector<1x512xf32> to vector<32x512xf32>
    %99 = arith.mulf %98, %93 : vector<32x512xf32>
    %100 = vector.broadcast %95 : vector<32x1xf32> to vector<32x512xf32>
    %101 = arith.mulf %100, %99 : vector<32x512xf32>
    %102 = arith.addf %92, %101 : vector<32x512xf32>
    %103 = vector.broadcast %3 : vector<32x1xf32> to vector<32x512xf32>
    %104 = arith.addf %102, %103 : vector<32x512xf32>
    %cst_59 = arith.constant 0.000000e+00 : f32
    %105 = vector.broadcast %cst_59 : f32 to vector<32x512xf32>
    %106 = arith.maximumf %104, %105 : vector<32x512xf32>
    %c1_60 = arith.constant 1 : index
    %c0_61 = arith.constant 0 : index
    %c4_62 = arith.constant 4 : index
    %107 = vector.load %arg3[%c1_60, %c0_61, %c4_62] : memref<2x32x9xf32, #tpu.memory_space<vmem>>, vector<1x32x1xf32>
    %108 = vector.shape_cast %107 : vector<1x32x1xf32> to vector<32x1xf32>
    %109 = vector.broadcast %108 : vector<32x1xf32> to vector<32x512xf32>
    %110 = arith.mulf %109, %18 : vector<32x512xf32>
    %c34_i32 = arith.constant 34 : i32
    %111 = tpu.dynamic_rotate %18 by %c34_i32 dim 1 : vector<32x512xf32>, i32 -> vector<32x512xf32>
    %c1_63 = arith.constant 1 : index
    %c0_64 = arith.constant 0 : index
    %c0_65 = arith.constant 0 : index
    %112 = vector.load %arg3[%c1_63, %c0_64, %c0_65] : memref<2x32x9xf32, #tpu.memory_space<vmem>>, vector<1x32x1xf32>
    %113 = vector.shape_cast %112 : vector<1x32x1xf32> to vector<32x1xf32>
    %c1_66 = arith.constant 1 : index
    %c0_67 = arith.constant 0 : index
    %c0_68 = arith.constant 0 : index
    %114 = vector.load %arg8[%c1_66, %c0_67, %c0_68] : memref<2x9x512xf32, #tpu.memory_space<vmem>>, vector<1x1x512xf32>
    %115 = vector.shape_cast %114 : vector<1x1x512xf32> to vector<1x512xf32>
    %116 = vector.broadcast %115 : vector<1x512xf32> to vector<32x512xf32>
    %117 = arith.mulf %116, %111 : vector<32x512xf32>
    %118 = vector.broadcast %113 : vector<32x1xf32> to vector<32x512xf32>
    %119 = arith.mulf %118, %117 : vector<32x512xf32>
    %120 = arith.addf %110, %119 : vector<32x512xf32>
    %c32_i32 = arith.constant 32 : i32
    %121 = tpu.dynamic_rotate %18 by %c32_i32 dim 1 : vector<32x512xf32>, i32 -> vector<32x512xf32>
    %c1_69 = arith.constant 1 : index
    %c0_70 = arith.constant 0 : index
    %c1_71 = arith.constant 1 : index
    %122 = vector.load %arg3[%c1_69, %c0_70, %c1_71] : memref<2x32x9xf32, #tpu.memory_space<vmem>>, vector<1x32x1xf32>
    %123 = vector.shape_cast %122 : vector<1x32x1xf32> to vector<32x1xf32>
    %c1_72 = arith.constant 1 : index
    %c1_73 = arith.constant 1 : index
    %c0_74 = arith.constant 0 : index
    %124 = vector.load %arg8[%c1_72, %c1_73, %c0_74] : memref<2x9x512xf32, #tpu.memory_space<vmem>>, vector<1x1x512xf32>
    %125 = vector.shape_cast %124 : vector<1x1x512xf32> to vector<1x512xf32>
    %126 = vector.broadcast %125 : vector<1x512xf32> to vector<32x512xf32>
    %127 = arith.mulf %126, %121 : vector<32x512xf32>
    %128 = vector.broadcast %123 : vector<32x1xf32> to vector<32x512xf32>
    %129 = arith.mulf %128, %127 : vector<32x512xf32>
    %130 = arith.addf %120, %129 : vector<32x512xf32>
    %c30_i32 = arith.constant 30 : i32
    %131 = tpu.dynamic_rotate %18 by %c30_i32 dim 1 : vector<32x512xf32>, i32 -> vector<32x512xf32>
    %c1_75 = arith.constant 1 : index
    %c0_76 = arith.constant 0 : index
    %c2_77 = arith.constant 2 : index
    %132 = vector.load %arg3[%c1_75, %c0_76, %c2_77] : memref<2x32x9xf32, #tpu.memory_space<vmem>>, vector<1x32x1xf32>
    %133 = vector.shape_cast %132 : vector<1x32x1xf32> to vector<32x1xf32>
    %c1_78 = arith.constant 1 : index
    %c2_79 = arith.constant 2 : index
    %c0_80 = arith.constant 0 : index
    %134 = vector.load %arg8[%c1_78, %c2_79, %c0_80] : memref<2x9x512xf32, #tpu.memory_space<vmem>>, vector<1x1x512xf32>
    %135 = vector.shape_cast %134 : vector<1x1x512xf32> to vector<1x512xf32>
    %136 = vector.broadcast %135 : vector<1x512xf32> to vector<32x512xf32>
    %137 = arith.mulf %136, %131 : vector<32x512xf32>
    %138 = vector.broadcast %133 : vector<32x1xf32> to vector<32x512xf32>
    %139 = arith.mulf %138, %137 : vector<32x512xf32>
    %140 = arith.addf %130, %139 : vector<32x512xf32>
    %c2_i32 = arith.constant 2 : i32
    %141 = tpu.dynamic_rotate %18 by %c2_i32 dim 1 : vector<32x512xf32>, i32 -> vector<32x512xf32>
    %c1_81 = arith.constant 1 : index
    %c0_82 = arith.constant 0 : index
    %c3_83 = arith.constant 3 : index
    %142 = vector.load %arg3[%c1_81, %c0_82, %c3_83] : memref<2x32x9xf32, #tpu.memory_space<vmem>>, vector<1x32x1xf32>
    %143 = vector.shape_cast %142 : vector<1x32x1xf32> to vector<32x1xf32>
    %c1_84 = arith.constant 1 : index
    %c3_85 = arith.constant 3 : index
    %c0_86 = arith.constant 0 : index
    %144 = vector.load %arg8[%c1_84, %c3_85, %c0_86] : memref<2x9x512xf32, #tpu.memory_space<vmem>>, vector<1x1x512xf32>
    %145 = vector.shape_cast %144 : vector<1x1x512xf32> to vector<1x512xf32>
    %146 = vector.broadcast %145 : vector<1x512xf32> to vector<32x512xf32>
    %147 = arith.mulf %146, %141 : vector<32x512xf32>
    %148 = vector.broadcast %143 : vector<32x1xf32> to vector<32x512xf32>
    %149 = arith.mulf %148, %147 : vector<32x512xf32>
    %150 = arith.addf %140, %149 : vector<32x512xf32>
    %c510_i32 = arith.constant 510 : i32
    %151 = tpu.dynamic_rotate %18 by %c510_i32 dim 1 : vector<32x512xf32>, i32 -> vector<32x512xf32>
    %c1_87 = arith.constant 1 : index
    %c0_88 = arith.constant 0 : index
    %c5_89 = arith.constant 5 : index
    %152 = vector.load %arg3[%c1_87, %c0_88, %c5_89] : memref<2x32x9xf32, #tpu.memory_space<vmem>>, vector<1x32x1xf32>
    %153 = vector.shape_cast %152 : vector<1x32x1xf32> to vector<32x1xf32>
    %c1_90 = arith.constant 1 : index
    %c5_91 = arith.constant 5 : index
    %c0_92 = arith.constant 0 : index
    %154 = vector.load %arg8[%c1_90, %c5_91, %c0_92] : memref<2x9x512xf32, #tpu.memory_space<vmem>>, vector<1x1x512xf32>
    %155 = vector.shape_cast %154 : vector<1x1x512xf32> to vector<1x512xf32>
    %156 = vector.broadcast %155 : vector<1x512xf32> to vector<32x512xf32>
    %157 = arith.mulf %156, %151 : vector<32x512xf32>
    %158 = vector.broadcast %153 : vector<32x1xf32> to vector<32x512xf32>
    %159 = arith.mulf %158, %157 : vector<32x512xf32>
    %160 = arith.addf %150, %159 : vector<32x512xf32>
    %c482_i32 = arith.constant 482 : i32
    %161 = tpu.dynamic_rotate %18 by %c482_i32 dim 1 : vector<32x512xf32>, i32 -> vector<32x512xf32>
    %c1_93 = arith.constant 1 : index
    %c0_94 = arith.constant 0 : index
    %c6_95 = arith.constant 6 : index
    %162 = vector.load %arg3[%c1_93, %c0_94, %c6_95] : memref<2x32x9xf32, #tpu.memory_space<vmem>>, vector<1x32x1xf32>
    %163 = vector.shape_cast %162 : vector<1x32x1xf32> to vector<32x1xf32>
    %c1_96 = arith.constant 1 : index
    %c6_97 = arith.constant 6 : index
    %c0_98 = arith.constant 0 : index
    %164 = vector.load %arg8[%c1_96, %c6_97, %c0_98] : memref<2x9x512xf32, #tpu.memory_space<vmem>>, vector<1x1x512xf32>
    %165 = vector.shape_cast %164 : vector<1x1x512xf32> to vector<1x512xf32>
    %166 = vector.broadcast %165 : vector<1x512xf32> to vector<32x512xf32>
    %167 = arith.mulf %166, %161 : vector<32x512xf32>
    %168 = vector.broadcast %163 : vector<32x1xf32> to vector<32x512xf32>
    %169 = arith.mulf %168, %167 : vector<32x512xf32>
    %170 = arith.addf %160, %169 : vector<32x512xf32>
    %c480_i32 = arith.constant 480 : i32
    %171 = tpu.dynamic_rotate %18 by %c480_i32 dim 1 : vector<32x512xf32>, i32 -> vector<32x512xf32>
    %c1_99 = arith.constant 1 : index
    %c0_100 = arith.constant 0 : index
    %c7_101 = arith.constant 7 : index
    %172 = vector.load %arg3[%c1_99, %c0_100, %c7_101] : memref<2x32x9xf32, #tpu.memory_space<vmem>>, vector<1x32x1xf32>
    %173 = vector.shape_cast %172 : vector<1x32x1xf32> to vector<32x1xf32>
    %c1_102 = arith.constant 1 : index
    %c7_103 = arith.constant 7 : index
    %c0_104 = arith.constant 0 : index
    %174 = vector.load %arg8[%c1_102, %c7_103, %c0_104] : memref<2x9x512xf32, #tpu.memory_space<vmem>>, vector<1x1x512xf32>
    %175 = vector.shape_cast %174 : vector<1x1x512xf32> to vector<1x512xf32>
    %176 = vector.broadcast %175 : vector<1x512xf32> to vector<32x512xf32>
    %177 = arith.mulf %176, %171 : vector<32x512xf32>
    %178 = vector.broadcast %173 : vector<32x1xf32> to vector<32x512xf32>
    %179 = arith.mulf %178, %177 : vector<32x512xf32>
    %180 = arith.addf %170, %179 : vector<32x512xf32>
    %c478_i32 = arith.constant 478 : i32
    %181 = tpu.dynamic_rotate %18 by %c478_i32 dim 1 : vector<32x512xf32>, i32 -> vector<32x512xf32>
    %c1_105 = arith.constant 1 : index
    %c0_106 = arith.constant 0 : index
    %c8_107 = arith.constant 8 : index
    %182 = vector.load %arg3[%c1_105, %c0_106, %c8_107] : memref<2x32x9xf32, #tpu.memory_space<vmem>>, vector<1x32x1xf32>
    %183 = vector.shape_cast %182 : vector<1x32x1xf32> to vector<32x1xf32>
    %c1_108 = arith.constant 1 : index
    %c8_109 = arith.constant 8 : index
    %c0_110 = arith.constant 0 : index
    %184 = vector.load %arg8[%c1_108, %c8_109, %c0_110] : memref<2x9x512xf32, #tpu.memory_space<vmem>>, vector<1x1x512xf32>
    %185 = vector.shape_cast %184 : vector<1x1x512xf32> to vector<1x512xf32>
    %186 = vector.broadcast %185 : vector<1x512xf32> to vector<32x512xf32>
    %187 = arith.mulf %186, %181 : vector<32x512xf32>
    %188 = vector.broadcast %183 : vector<32x1xf32> to vector<32x512xf32>
    %189 = arith.mulf %188, %187 : vector<32x512xf32>
    %190 = arith.addf %180, %189 : vector<32x512xf32>
    %191 = vector.broadcast %4 : vector<32x1xf32> to vector<32x512xf32>
    %192 = arith.addf %190, %191 : vector<32x512xf32>
    %cst_111 = arith.constant 0.000000e+00 : f32
    %193 = vector.broadcast %cst_111 : f32 to vector<32x512xf32>
    %194 = arith.maximumf %192, %193 : vector<32x512xf32>
    %c0_112 = arith.constant 0 : index
    %c0_113 = arith.constant 0 : index
    %195 = vector.load %arg4[%c0_112, %c0_113] : memref<32x32xbf16, #tpu.memory_space<vmem>>, vector<32x32xbf16>
    %c0_114 = arith.constant 0 : index
    %c0_115 = arith.constant 0 : index
    %196 = vector.load %arg5[%c0_114, %c0_115] : memref<64x32xbf16, #tpu.memory_space<vmem>>, vector<64x32xbf16>
    %c0_116 = arith.constant 0 : index
    %c0_117 = arith.constant 0 : index
    %197 = vector.load %arg6[%c0_116, %c0_117] : memref<8x32xbf16, #tpu.memory_space<vmem>>, vector<8x32xbf16>
    %198 = vector.extract_strided_slice %106 {offsets = [0, 0], sizes = [32, 256], strides = [1, 1]} : vector<32x512xf32> to vector<32x256xf32>
    %199 = vector.extract_strided_slice %194 {offsets = [0, 0], sizes = [32, 256], strides = [1, 1]} : vector<32x512xf32> to vector<32x256xf32>
    %200 = arith.addf %198, %199 : vector<32x256xf32>
    %cst_118 = arith.constant dense<0.000000e+00> : vector<32xf32>
    %201 = vector.multi_reduction <add>, %200, %cst_118 [1] : vector<32x256xf32> to vector<32xf32>
    %202 = vector.shape_cast %201 : vector<32xf32> to vector<32x1xf32>
    %cst_119 = arith.constant 3.906250e-03 : f32
    %203 = vector.broadcast %cst_119 : f32 to vector<32x1xf32>
    %204 = arith.mulf %202, %203 : vector<32x1xf32>
    %205 = arith.truncf %204 : vector<32x1xf32> to vector<32x1xbf16>
    %cst_120 = arith.constant dense<0.000000e+00> : vector<32x1xf32>
    %206 = tpu.matmul %195, %205, %cst_120 {dimension_numbers = #tpu.dot_dimension_numbers<[1], [0], [0], [1], [0, 0, 1, 1], [], []>} : vector<32x32xbf16>, vector<32x1xbf16>, vector<32x1xf32> -> vector<32x1xf32>
    %207 = arith.addf %206, %5 : vector<32x1xf32>
    %cst_121 = arith.constant 0.000000e+00 : f32
    %208 = vector.broadcast %cst_121 : f32 to vector<32x1xf32>
    %209 = arith.maximumf %207, %208 : vector<32x1xf32>
    %210 = arith.truncf %209 : vector<32x1xf32> to vector<32x1xbf16>
    %cst_122 = arith.constant dense<0.000000e+00> : vector<64x1xf32>
    %211 = tpu.matmul %196, %210, %cst_122 {dimension_numbers = #tpu.dot_dimension_numbers<[1], [0], [0], [1], [0, 0, 1, 1], [], []>} : vector<64x32xbf16>, vector<32x1xbf16>, vector<64x1xf32> -> vector<64x1xf32>
    %212 = vector.extract_strided_slice %211 {offsets = [0, 0], sizes = [32, 1], strides = [1, 1]} : vector<64x1xf32> to vector<32x1xf32>
    %213 = vector.extract_strided_slice %211 {offsets = [32, 0], sizes = [32, 1], strides = [1, 1]} : vector<64x1xf32> to vector<32x1xf32>
    %214 = arith.subf %212, %213 : vector<32x1xf32>
    %215 = arith.negf %214 : vector<32x1xf32>
    %216 = math.exp %215 : vector<32x1xf32>
    %cst_123 = arith.constant 1.000000e+00 : f32
    %217 = vector.broadcast %cst_123 : f32 to vector<32x1xf32>
    %218 = arith.addf %217, %216 : vector<32x1xf32>
    %219 = arith.divf %217, %218 : vector<32x1xf32>
    %220 = arith.subf %198, %199 : vector<32x256xf32>
    %221 = vector.broadcast %219 : vector<32x1xf32> to vector<32x256xf32>
    %222 = arith.mulf %221, %220 : vector<32x256xf32>
    %223 = arith.addf %199, %222 : vector<32x256xf32>
    %224 = arith.truncf %223 : vector<32x256xf32> to vector<32x256xbf16>
    %cst_124 = arith.constant dense<0.000000e+00> : vector<8x256xf32>
    %225 = tpu.matmul %197, %224, %cst_124 {dimension_numbers = #tpu.dot_dimension_numbers<[1], [0], [0], [1], [0, 0, 1, 1], [], []>} : vector<8x32xbf16>, vector<32x256xbf16>, vector<8x256xf32> -> vector<8x256xf32>
    %226 = vector.broadcast %6 : vector<8x1xf32> to vector<8x256xf32>
    %227 = arith.addf %225, %226 : vector<8x256xf32>
    %228 = vector.extract_strided_slice %0 {offsets = [0, 0], sizes = [8, 256], strides = [1, 1]} : vector<8x512xf32> to vector<8x256xf32>
    %229 = arith.addf %228, %227 : vector<8x256xf32>
    %c0_125 = arith.constant 0 : index
    %c0_126 = arith.constant 0 : index
    %230 = vector.load %arg9[%c0_125, %c0_126] : memref<8x512xf32, #tpu.memory_space<vmem>>, vector<8x256xf32>
    tpu.vector_store %arg9[%c0_125, %c0_126], %229 {strides = array<i32>} : memref<8x512xf32, #tpu.memory_space<vmem>>, vector<8x256xf32>,
    %231 = vector.extract_strided_slice %106 {offsets = [0, 256], sizes = [32, 256], strides = [1, 1]} : vector<32x512xf32> to vector<32x256xf32>
    %232 = vector.extract_strided_slice %194 {offsets = [0, 256], sizes = [32, 256], strides = [1, 1]} : vector<32x512xf32> to vector<32x256xf32>
    %233 = arith.addf %231, %232 : vector<32x256xf32>
    %cst_127 = arith.constant dense<0.000000e+00> : vector<32xf32>
    %234 = vector.multi_reduction <add>, %233, %cst_127 [1] : vector<32x256xf32> to vector<32xf32>
    %235 = vector.shape_cast %234 : vector<32xf32> to vector<32x1xf32>
    %cst_128 = arith.constant 3.906250e-03 : f32
    %236 = vector.broadcast %cst_128 : f32 to vector<32x1xf32>
    %237 = arith.mulf %235, %236 : vector<32x1xf32>
    %238 = arith.truncf %237 : vector<32x1xf32> to vector<32x1xbf16>
    %cst_129 = arith.constant dense<0.000000e+00> : vector<32x1xf32>
    %239 = tpu.matmul %195, %238, %cst_129 {dimension_numbers = #tpu.dot_dimension_numbers<[1], [0], [0], [1], [0, 0, 1, 1], [], []>} : vector<32x32xbf16>, vector<32x1xbf16>, vector<32x1xf32> -> vector<32x1xf32>
    %240 = arith.addf %239, %5 : vector<32x1xf32>
    %cst_130 = arith.constant 0.000000e+00 : f32
    %241 = vector.broadcast %cst_130 : f32 to vector<32x1xf32>
    %242 = arith.maximumf %240, %241 : vector<32x1xf32>
    %243 = arith.truncf %242 : vector<32x1xf32> to vector<32x1xbf16>
    %cst_131 = arith.constant dense<0.000000e+00> : vector<64x1xf32>
    %244 = tpu.matmul %196, %243, %cst_131 {dimension_numbers = #tpu.dot_dimension_numbers<[1], [0], [0], [1], [0, 0, 1, 1], [], []>} : vector<64x32xbf16>, vector<32x1xbf16>, vector<64x1xf32> -> vector<64x1xf32>
    %245 = vector.extract_strided_slice %244 {offsets = [0, 0], sizes = [32, 1], strides = [1, 1]} : vector<64x1xf32> to vector<32x1xf32>
    %246 = vector.extract_strided_slice %244 {offsets = [32, 0], sizes = [32, 1], strides = [1, 1]} : vector<64x1xf32> to vector<32x1xf32>
    %247 = arith.subf %245, %246 : vector<32x1xf32>
    %248 = arith.negf %247 : vector<32x1xf32>
    %249 = math.exp %248 : vector<32x1xf32>
    %cst_132 = arith.constant 1.000000e+00 : f32
    %250 = vector.broadcast %cst_132 : f32 to vector<32x1xf32>
    %251 = arith.addf %250, %249 : vector<32x1xf32>
    %252 = arith.divf %250, %251 : vector<32x1xf32>
    %253 = arith.subf %231, %232 : vector<32x256xf32>
    %254 = vector.broadcast %252 : vector<32x1xf32> to vector<32x256xf32>
    %255 = arith.mulf %254, %253 : vector<32x256xf32>
    %256 = arith.addf %232, %255 : vector<32x256xf32>
    %257 = arith.truncf %256 : vector<32x256xf32> to vector<32x256xbf16>
    %cst_133 = arith.constant dense<0.000000e+00> : vector<8x256xf32>
    %258 = tpu.matmul %197, %257, %cst_133 {dimension_numbers = #tpu.dot_dimension_numbers<[1], [0], [0], [1], [0, 0, 1, 1], [], []>} : vector<8x32xbf16>, vector<32x256xbf16>, vector<8x256xf32> -> vector<8x256xf32>
    %259 = vector.broadcast %6 : vector<8x1xf32> to vector<8x256xf32>
    %260 = arith.addf %258, %259 : vector<8x256xf32>
    %261 = vector.extract_strided_slice %0 {offsets = [0, 256], sizes = [8, 256], strides = [1, 1]} : vector<8x512xf32> to vector<8x256xf32>
    %262 = arith.addf %261, %260 : vector<8x256xf32>
    %c0_134 = arith.constant 0 : index
    %c256 = arith.constant 256 : index
    %263 = vector.load %arg9[%c0_134, %c256] : memref<8x512xf32, #tpu.memory_space<vmem>>, vector<8x256xf32>
    tpu.vector_store %arg9[%c0_134, %c256], %262 {strides = array<i32>} : memref<8x512xf32, #tpu.memory_space<vmem>>, vector<8x256xf32>,
    return
  }
  func.func @transform_0(%arg0: i32) -> (i32, i32) {
    %c0_i32 = arith.constant 0 : i32
    %c0_i32_0 = arith.constant 0 : i32
    return %c0_i32, %arg0 : i32, i32
  }
  func.func @transform_1(%arg0: i32) -> (i32, i32) {
    %c0_i32 = arith.constant 0 : i32
    %c0_i32_0 = arith.constant 0 : i32
    %c0_i32_1 = arith.constant 0 : i32
    return %c0_i32, %c0_i32_0 : i32, i32
  }
  func.func @transform_2(%arg0: i32) -> (i32, i32, i32) {
    %c0_i32 = arith.constant 0 : i32
    %c0_i32_0 = arith.constant 0 : i32
    %c0_i32_1 = arith.constant 0 : i32
    %c0_i32_2 = arith.constant 0 : i32
    return %c0_i32, %c0_i32_0, %c0_i32_1 : i32, i32, i32
  }
  func.func @transform_3(%arg0: i32) -> (i32, i32) {
    %c0_i32 = arith.constant 0 : i32
    %c0_i32_0 = arith.constant 0 : i32
    %c0_i32_1 = arith.constant 0 : i32
    return %c0_i32, %c0_i32_0 : i32, i32
  }
  func.func @transform_4(%arg0: i32) -> (i32, i32) {
    %c0_i32 = arith.constant 0 : i32
    %c0_i32_0 = arith.constant 0 : i32
    %c0_i32_1 = arith.constant 0 : i32
    return %c0_i32, %c0_i32_0 : i32, i32
  }
  func.func @transform_5(%arg0: i32) -> (i32, i32) {
    %c0_i32 = arith.constant 0 : i32
    %c0_i32_0 = arith.constant 0 : i32
    %c0_i32_1 = arith.constant 0 : i32
    return %c0_i32, %c0_i32_0 : i32, i32
  }
  func.func @transform_6(%arg0: i32) -> (i32, i32) {
    %c0_i32 = arith.constant 0 : i32
    %c0_i32_0 = arith.constant 0 : i32
    %c0_i32_1 = arith.constant 0 : i32
    return %c0_i32, %c0_i32_0 : i32, i32
  }
  func.func @transform_7(%arg0: i32) -> (i32, i32, i32) {
    %c0_i32 = arith.constant 0 : i32
    %c0_i32_0 = arith.constant 0 : i32
    %c0_i32_1 = arith.constant 0 : i32
    %c0_i32_2 = arith.constant 0 : i32
    return %c0_i32, %c0_i32_0, %c0_i32_1 : i32, i32, i32
  }
  func.func @transform_8(%arg0: i32) -> (i32, i32) {
    %c0_i32 = arith.constant 0 : i32
    %c0_i32_0 = arith.constant 0 : i32
    return %c0_i32, %arg0 : i32, i32
  }
}

</mosaic_0001>

<llo_original>
// kernel: mbconv_forward.1
$region0: #{mbconv_forward.1}
  #allocation0 [shape = 'u32[]', space=smem, size = 0x4, offset = 0x4, fixed_abs, tag = 'smem constant byte address 0x4 - core index']
  #allocation1 [shape = 'u32[144,128]{1,0:T(1,128)}', space=vmem, size = 0x12000, scoped, tag = 'internal scratch']
  %s0 = inlined_call_operand.vmem [shape: f32[8,512], index: 0, kind: input, shape index: {}]
  %s1 = inlined_call_operand.vmem [shape: bf16[32,8], index: 1, kind: input, shape index: {}]
  %s2 = inlined_call_operand.vmem [shape: f32[2,32,9], index: 2, kind: input, shape index: {}]
  %s3 = inlined_call_operand.vmem [shape: bf16[32,32], index: 3, kind: input, shape index: {}]
  %s4 = inlined_call_operand.vmem [shape: bf16[64,32], index: 4, kind: input, shape index: {}]
  %s5 = inlined_call_operand.vmem [shape: bf16[8,32], index: 5, kind: input, shape index: {}]
  %s6 = inlined_call_operand.vmem [shape: f32[32,8], index: 6, kind: input, shape index: {}]
  %s7 = inlined_call_operand.vmem [shape: f32[2,9,512], index: 7, kind: input, shape index: {}]
  %s8 = inlined_call_operand.vmem [shape: f32[8,512], index: 8, kind: output, shape index: {}]
  %s9 = sld [smem:[#allocation0]]
  $region42: #{mbconv_forward.1} parent=0
    _
  %s11 = ssub.s32 1, %s9
  %s12 = scalar_select 0, %s11, %s9
  // Predicated region
  $region2: #{mbconv_forward.1} parent=0 // pred_check
    _
  $region3: #{mbconv_forward.1} parent=0 // pred_check_branch
    %14 = sbr.rel (0) target = $region5
  $region4: #{mbconv_forward.1} parent=0 // pred_region
    _
  $region5: #{mbconv_forward.1} parent=0 // pred_fallthru
    _
  // Predicated region
  $region6: #{mbconv_forward.1} parent=0 // pred_check
    _
  $region7: #{mbconv_forward.1} parent=0 // pred_check_branch
    %16 = sbr.rel (0) target = $region9
  $region8: #{mbconv_forward.1} parent=0 // pred_region
    _
  $region9: #{mbconv_forward.1} parent=0 // pred_fallthru
    _
  // Predicated region
  $region10: #{mbconv_forward.1} parent=0 // pred_check
    _
  $region11: #{mbconv_forward.1} parent=0 // pred_check_branch
    %18 = sbr.rel (0) target = $region13
  $region12: #{mbconv_forward.1} parent=0 // pred_region
    _
  $region13: #{mbconv_forward.1} parent=0 // pred_fallthru
    _
  // Predicated region
  $region14: #{mbconv_forward.1} parent=0 // pred_check
    _
  $region15: #{mbconv_forward.1} parent=0 // pred_check_branch
    %20 = sbr.rel (0) target = $region17
  $region16: #{mbconv_forward.1} parent=0 // pred_region
    _
  $region17: #{mbconv_forward.1} parent=0 // pred_fallthru
    _
  // Predicated region
  $region18: #{mbconv_forward.1} parent=0 // pred_check
    _
  $region19: #{mbconv_forward.1} parent=0 // pred_check_branch
    %22 = sbr.rel (0) target = $region21
  $region20: #{mbconv_forward.1} parent=0 // pred_region
    _
  $region21: #{mbconv_forward.1} parent=0 // pred_fallthru
    _
  // Predicated region
  $region22: #{mbconv_forward.1} parent=0 // pred_check
    _
  $region23: #{mbconv_forward.1} parent=0 // pred_check_branch
    %24 = sbr.rel (0) target = $region25
  $region24: #{mbconv_forward.1} parent=0 // pred_region
    _
  $region25: #{mbconv_forward.1} parent=0 // pred_fallthru
    _
  // Predicated region
  $region26: #{mbconv_forward.1} parent=0 // pred_check
    _
  $region27: #{mbconv_forward.1} parent=0 // pred_check_branch
    %26 = sbr.rel (0) target = $region29
  $region28: #{mbconv_forward.1} parent=0 // pred_region
    _
  $region29: #{mbconv_forward.1} parent=0 // pred_fallthru
    _
  // Predicated region
  $region30: #{mbconv_forward.1} parent=0 // pred_check
    _
  $region31: #{mbconv_forward.1} parent=0 // pred_check_branch
    %28 = sbr.rel (0) target = $region33
  $region32: #{mbconv_forward.1} parent=0 // pred_region
    _
  $region33: #{mbconv_forward.1} parent=0 // pred_fallthru
    _
  %v30 = vld [vmem:[%s0] sm:$0xff]
  %v31 = vld [vmem:[%s0 + $0x8] sm:$0xff]
  %v32 = vld [vmem:[%s0 + $0x10] sm:$0xff]
  %v33 = vld [vmem:[%s0 + $0x18] sm:$0xff]
  %v34 = vpack.c.bf16 %v30, %v30
  %v35 = vpack.c.bf16 %v31, %v31
  %v36 = vpack.c.bf16 %v32, %v32
  %v37 = vpack.c.bf16 %v33, %v33
  %v38 = vld [vmem:[%s6] sm:$0xff]
  %v39 = vld [vmem:[%s6 + $0x8] sm:$0xff]
  %v40 = vld [vmem:[%s6 + $0x10] sm:$0xff]
  %v41 = vld [vmem:[%s6 + $0x18] sm:$0xff]
  %v42 = vld [vmem:[%s1] sm:$0xf]
  %v43 = vld [vmem:[%s1 + $0x4] sm:$0xf]
  %v44 = vld [vmem:[%s1 + $0x8] sm:$0xf]
  %v45 = vld [vmem:[%s1 + $0xc] sm:$0xf]
  %47 = vset.pattern.permute.xlu0 0
  %48 = vperm.xlu0 %47, %v38
  %v49 = vpop.permute.xlu0 %48
  %52 = vset.pattern.permute.xlu0 0
  %53 = vperm.xlu0 %52, %v39
  %v54 = vpop.permute.xlu0 %53
  %57 = vset.pattern.permute.xlu0 0
  %58 = vperm.xlu0 %57, %v40
  %v59 = vpop.permute.xlu0 %58
  %62 = vset.pattern.permute.xlu0 0
  %63 = vperm.xlu0 %62, %v41
  %v64 = vpop.permute.xlu0 %63
  %v70 = vunpack.c.l.b16 %v42
  %v71 = vunpack.c.l.b16 %v43
  %v72 = vunpack.c.l.b16 %v44
  %v73 = vunpack.c.l.b16 %v45
  %v74 = vpack.c.b16 %v71, %v70
  %v75 = vpack.c.b16 %v73, %v72
  %vm76 = vcmask 64512
  %v78 = vsel %vm76, %v74, 0
  %v81 = vsel %vm76, %v75, 0
  %vm83 = vcmask 1043456
  %v85 = vsel %vm83, %v34, 0
  %v88 = vsel %vm83, %v35, 0
  %v91 = vsel %vm83, %v36, 0
  %v94 = vsel %vm83, %v37, 0
  %96 = vmatprep.subr.bf16.mxu0 %v88
  %97 = vmatpush1.bf16.msra.mxu0 %v85
  %98 = vmatprep.subr.bf16.mxu0 0
  %99 = vmatpush1.bf16.msra.mxu0 0
  %100 = vmatprep.subr.bf16.mxu0 0
  %101 = vmatpush1.bf16.msra.mxu0 0
  %102 = vmatprep.subr.bf16.mxu0 0
  %103 = vmatpush1.bf16.msra.mxu0 0
  %104 = vmatprep.subr.bf16.mxu0 0
  %105 = vmatpush1.bf16.msra.mxu0 0
  %106 = vmatprep.subr.bf16.mxu0 0
  %107 = vmatpush1.bf16.msra.mxu0 0
  %108 = vmatprep.subr.bf16.mxu0 0
  %109 = vmatpush1.bf16.msra.mxu0 0
  %110 = vmatprep.subr.bf16.mxu0 0
  %111 = vmatpush1.bf16.msra.mxu0 0
  %112 = vmatprep.subr.bf16.mxu0 0
  %113 = vmatpush1.bf16.msra.mxu0 0
  %114 = vmatprep.subr.bf16.mxu0 0
  %115 = vmatpush1.bf16.msra.mxu0 0
  %116 = vmatprep.subr.bf16.mxu0 0
  %117 = vmatpush1.bf16.msra.mxu0 0
  %118 = vmatprep.subr.bf16.mxu0 0
  %119 = vmatpush1.bf16.msra.mxu0 0
  %120 = vmatprep.subr.bf16.mxu0 0
  %121 = vmatpush1.bf16.msra.mxu0 0
  %122 = vmatprep.subr.bf16.mxu0 0
  %123 = vmatpush1.bf16.msra.mxu0 0
  %124 = vmatprep.subr.bf16.mxu0 0
  %125 = vmatpush1.bf16.msra.mxu0 0
  %126 = vmatprep.subr.bf16.mxu0 0
  %127 = vmatpush1.bf16.msra.mxu0 0
  %128 = vmatprep.mubr.bf16.mxu0 0
  %129 = vmatmul.mubr.bf16.gmra.mrb[0].mxu0 %v78
  %v130 = vpop.f32.mrb[0].mxu0
  %v131 = vadd.f32 %v49, %v130
  %v132 = vpop.f32.mrb[0].mxu0
  %v133 = vadd.f32 %v49, %v132
  %v134 = vpop.f32.mrb[0].mxu0
  %v135 = vadd.f32 %v54, %v134
  %v136 = vpop.f32.mrb[0].mxu0
  %v137 = vadd.f32 %v54, %v136
  %138 = vmatprep.mubr.bf16.mxu0 0
  %139 = vmatmul.mubr.bf16.gmra.mrb[0].mxu0 %v81
  %v140 = vpop.f32.mrb[0].mxu0
  %v141 = vadd.f32 %v59, %v140
  %v142 = vpop.f32.mrb[0].mxu0
  %v143 = vadd.f32 %v59, %v142
  %v144 = vpop.f32.mrb[0].mxu0
  %v145 = vadd.f32 %v64, %v144
  %v146 = vpop.f32.mrb[0].mxu0
  %v147 = vadd.f32 %v64, %v146
  %148 = vdwg.mxu0
  %149 = vmatprep.subr.bf16.mxu0 %v94
  %150 = vmatpush1.bf16.msra.mxu0 %v91
  %151 = vmatprep.subr.bf16.mxu0 0
  %152 = vmatpush1.bf16.msra.mxu0 0
  %153 = vmatprep.subr.bf16.mxu0 0
  %154 = vmatpush1.bf16.msra.mxu0 0
  %155 = vmatprep.subr.bf16.mxu0 0
  %156 = vmatpush1.bf16.msra.mxu0 0
  %157 = vmatprep.subr.bf16.mxu0 0
  %158 = vmatpush1.bf16.msra.mxu0 0
  %159 = vmatprep.subr.bf16.mxu0 0
  %160 = vmatpush1.bf16.msra.mxu0 0
  %161 = vmatprep.subr.bf16.mxu0 0
  %162 = vmatpush1.bf16.msra.mxu0 0
  %163 = vmatprep.subr.bf16.mxu0 0
  %164 = vmatpush1.bf16.msra.mxu0 0
  %165 = vmatprep.subr.bf16.mxu0 0
  %166 = vmatpush1.bf16.msra.mxu0 0
  %167 = vmatprep.subr.bf16.mxu0 0
  %168 = vmatpush1.bf16.msra.mxu0 0
  %169 = vmatprep.subr.bf16.mxu0 0
  %170 = vmatpush1.bf16.msra.mxu0 0
  %171 = vmatprep.subr.bf16.mxu0 0
  %172 = vmatpush1.bf16.msra.mxu0 0
  %173 = vmatprep.subr.bf16.mxu0 0
  %174 = vmatpush1.bf16.msra.mxu0 0
  %175 = vmatprep.subr.bf16.mxu0 0
  %176 = vmatpush1.bf16.msra.mxu0 0
  %177 = vmatprep.subr.bf16.mxu0 0
  %178 = vmatpush1.bf16.msra.mxu0 0
  %179 = vmatprep.subr.bf16.mxu0 0
  %180 = vmatpush1.bf16.msra.mxu0 0
  %181 = vmatprep.mubr.bf16.mxu0 0
  %182 = vmatmul.mubr.bf16.gmra.mrb[0].mxu0 %v78
  %v183 = vpop.f32.mrb[0].mxu0
  %v184 = vadd.f32 %v49, %v183
  %v185 = vpop.f32.mrb[0].mxu0
  %v186 = vadd.f32 %v49, %v185
  %v187 = vpop.f32.mrb[0].mxu0
  %v188 = vadd.f32 %v54, %v187
  %v189 = vpop.f32.mrb[0].mxu0
  %v190 = vadd.f32 %v54, %v189
  %191 = vmatprep.mubr.bf16.mxu0 0
  %192 = vmatmul.mubr.bf16.gmra.mrb[0].mxu0 %v81
  %v193 = vpop.f32.mrb[0].mxu0
  %v194 = vadd.f32 %v59, %v193
  %v195 = vpop.f32.mrb[0].mxu0
  %v196 = vadd.f32 %v59, %v195
  %v197 = vpop.f32.mrb[0].mxu0
  %v198 = vadd.f32 %v64, %v197
  %v199 = vpop.f32.mrb[0].mxu0
  %v200 = vadd.f32 %v64, %v199
  %201 = vdwg.mxu0
  %v202 = vmul.f32 %v131, 0.5
  %v203 = vmul.f32 %v133, 0.5
  %v204 = vmul.f32 %v184, 0.5
  %v205 = vmul.f32 %v186, 0.5
  %v206 = vmul.f32 %v135, 0.5
  %v207 = vmul.f32 %v137, 0.5
  %v208 = vmul.f32 %v188, 0.5
  %v209 = vmul.f32 %v190, 0.5
  %v210 = vmul.f32 %v141, 0.5
  %v211 = vmul.f32 %v143, 0.5
  %v212 = vmul.f32 %v194, 0.5
  %v213 = vmul.f32 %v196, 0.5
  %v214 = vmul.f32 %v145, 0.5
  %v215 = vmul.f32 %v147, 0.5
  %v216 = vmul.f32 %v198, 0.5
  %v217 = vmul.f32 %v200, 0.5
  %v218 = vmul.f32 %v131, 0.70710677
  %v219 = vmul.f32 %v133, 0.70710677
  %v220 = vmul.f32 %v184, 0.70710677
  %v221 = vmul.f32 %v186, 0.70710677
  %v222 = vmul.f32 %v135, 0.70710677
  %v223 = vmul.f32 %v137, 0.70710677
  %v224 = vmul.f32 %v188, 0.70710677
  %v225 = vmul.f32 %v190, 0.70710677
  %v226 = vmul.f32 %v141, 0.70710677
  %v227 = vmul.f32 %v143, 0.70710677
  %v228 = vmul.f32 %v194, 0.70710677
  %v229 = vmul.f32 %v196, 0.70710677
  %v230 = vmul.f32 %v145, 0.70710677
  %v231 = vmul.f32 %v147, 0.70710677
  %v232 = vmul.f32 %v198, 0.70710677
  %v233 = vmul.f32 %v200, 0.70710677
  %v234 = verf.f32.pop %v218
  %v235 = verf.f32.pop %v219
  %v236 = verf.f32.pop %v220
  %v237 = verf.f32.pop %v221
  %v238 = verf.f32.pop %v222
  %v239 = verf.f32.pop %v223
  %v240 = verf.f32.pop %v224
  %v241 = verf.f32.pop %v225
  %v242 = verf.f32.pop %v226
  %v243 = verf.f32.pop %v227
  %v244 = verf.f32.pop %v228
  %v245 = verf.f32.pop %v229
  %v246 = verf.f32.pop %v230
  %v247 = verf.f32.pop %v231
  %v248 = verf.f32.pop %v232
  %v249 = verf.f32.pop %v233
  %v250 = vadd.f32 %v234, 1.0
  %v251 = vadd.f32 %v235, 1.0
  %v252 = vadd.f32 %v236, 1.0
  %v253 = vadd.f32 %v237, 1.0
  %v254 = vadd.f32 %v238, 1.0
  %v255 = vadd.f32 %v239, 1.0
  %v256 = vadd.f32 %v240, 1.0
  %v257 = vadd.f32 %v241, 1.0
  %v258 = vadd.f32 %v242, 1.0
  %v259 = vadd.f32 %v243, 1.0
  %v260 = vadd.f32 %v244, 1.0
  %v261 = vadd.f32 %v245, 1.0
  %v262 = vadd.f32 %v246, 1.0
  %v263 = vadd.f32 %v247, 1.0
  %v264 = vadd.f32 %v248, 1.0
  %v265 = vadd.f32 %v249, 1.0
  %v266 = vmul.f32 %v202, %v250
  %v267 = vmul.f32 %v203, %v251
  %v268 = vmul.f32 %v204, %v252
  %v269 = vmul.f32 %v205, %v253
  %v270 = vmul.f32 %v206, %v254
  %v271 = vmul.f32 %v207, %v255
  %v272 = vmul.f32 %v208, %v256
  %v273 = vmul.f32 %v209, %v257
  %v274 = vmul.f32 %v210, %v258
  %v275 = vmul.f32 %v211, %v259
  %v276 = vmul.f32 %v212, %v260
  %v277 = vmul.f32 %v213, %v261
  %v278 = vmul.f32 %v214, %v262
  %v279 = vmul.f32 %v215, %v263
  %v280 = vmul.f32 %v216, %v264
  %v281 = vmul.f32 %v217, %v265
  %v282 = vld [vmem:[%s2] sm:$0xff]
  %v283 = vld [vmem:[%s2 + $0x8] sm:$0xff]
  %v284 = vld [vmem:[%s2 + $0x10] sm:$0xff]
  %v285 = vld [vmem:[%s2 + $0x18] sm:$0xff]
  %287 = vset.pattern.permute.xlu0 4
  %288 = vperm.xlu0 %287, %v282
  %v289 = vpop.permute.xlu0 %288
  %292 = vset.pattern.permute.xlu0 4
  %293 = vperm.xlu0 %292, %v283
  %v294 = vpop.permute.xlu0 %293
  %297 = vset.pattern.permute.xlu0 4
  %298 = vperm.xlu0 %297, %v284
  %v299 = vpop.permute.xlu0 %298
  %302 = vset.pattern.permute.xlu0 4
  %303 = vperm.xlu0 %302, %v285
  %v304 = vpop.permute.xlu0 %303
  %v306 = vmul.f32 %v289, %v266
  %v307 = vmul.f32 %v289, %v267
  %v308 = vmul.f32 %v289, %v268
  %v309 = vmul.f32 %v289, %v269
  %v310 = vmul.f32 %v294, %v270
  %v311 = vmul.f32 %v294, %v271
  %v312 = vmul.f32 %v294, %v272
  %v313 = vmul.f32 %v294, %v273
  %v314 = vmul.f32 %v299, %v274
  %v315 = vmul.f32 %v299, %v275
  %v316 = vmul.f32 %v299, %v276
  %v317 = vmul.f32 %v299, %v277
  %v318 = vmul.f32 %v304, %v278
  %v319 = vmul.f32 %v304, %v279
  %v320 = vmul.f32 %v304, %v280
  %v321 = vmul.f32 %v304, %v281
  %322 = vrot.lane.b32.xlu0 %v266, 17
  %v323 = vpop.permute.xlu0 %322
  %324 = vrot.lane.b32.xlu0 %v270, 17
  %v325 = vpop.permute.xlu0 %324
  %326 = vrot.lane.b32.xlu0 %v274, 17
  %v327 = vpop.permute.xlu0 %326
  %328 = vrot.lane.b32.xlu0 %v278, 17
  %v329 = vpop.permute.xlu0 %328
  %330 = vrot.lane.b32.xlu0 %v267, 17
  %v331 = vpop.permute.xlu0 %330
  %332 = vrot.lane.b32.xlu0 %v271, 17
  %v333 = vpop.permute.xlu0 %332
  %334 = vrot.lane.b32.xlu0 %v275, 17
  %v335 = vpop.permute.xlu0 %334
  %336 = vrot.lane.b32.xlu0 %v279, 17
  %v337 = vpop.permute.xlu0 %336
  %338 = vrot.lane.b32.xlu0 %v268, 17
  %v339 = vpop.permute.xlu0 %338
  %340 = vrot.lane.b32.xlu0 %v272, 17
  %v341 = vpop.permute.xlu0 %340
  %342 = vrot.lane.b32.xlu0 %v276, 17
  %v343 = vpop.permute.xlu0 %342
  %344 = vrot.lane.b32.xlu0 %v280, 17
  %v345 = vpop.permute.xlu0 %344
  %346 = vrot.lane.b32.xlu0 %v269, 17
  %v347 = vpop.permute.xlu0 %346
  %348 = vrot.lane.b32.xlu0 %v273, 17
  %v349 = vpop.permute.xlu0 %348
  %350 = vrot.lane.b32.xlu0 %v277, 17
  %v351 = vpop.permute.xlu0 %350
  %352 = vrot.lane.b32.xlu0 %v281, 17
  %v353 = vpop.permute.xlu0 %352
  %v354 = vlaneseq
  %v355 = vand.u32 %v354, 127
  %vm356 = vcmp.lt.s32.totalorder %v355, 17
  %v357 = vsel %vm356, %v339, %v347
  %v358 = vsel %vm356, %v341, %v349
  %v359 = vsel %vm356, %v343, %v351
  %v360 = vsel %vm356, %v345, %v353
  %v361 = vsel %vm356, %v331, %v339
  %v362 = vsel %vm356, %v333, %v341
  %v363 = vsel %vm356, %v335, %v343
  %v364 = vsel %vm356, %v337, %v345
  %v365 = vsel %vm356, %v323, %v331
  %v366 = vsel %vm356, %v325, %v333
  %v367 = vsel %vm356, %v327, %v335
  %v368 = vsel %vm356, %v329, %v337
  %v369 = vsel %vm356, %v347, %v323
  %v370 = vsel %vm356, %v349, %v325
  %v371 = vsel %vm356, %v351, %v327
  %v372 = vsel %vm356, %v353, %v329
  %v373 = vld [vmem:[%s7] ss:$8 sm:$0xf]
  %v375 = vlaneseq
  %v376 = vshrl.u32 %v375, 7
  %v377 = vsub.s32 0, %v376
  %v378 = vrot.slane %v373, %v377
  %v379 = vlaneseq
  %v380 = vshrl.u32 %v379, 7
  %v381 = vsub.s32 1, %v380
  %v382 = vrot.slane %v373, %v381
  %v383 = vlaneseq
  %v384 = vshrl.u32 %v383, 7
  %v385 = vsub.s32 2, %v384
  %v386 = vrot.slane %v373, %v385
  %v387 = vlaneseq
  %v388 = vshrl.u32 %v387, 7
  %v389 = vsub.s32 3, %v388
  %v390 = vrot.slane %v373, %v389
  %v395 = vmul.f32 %v378, %v369
  %v396 = vmul.f32 %v382, %v365
  %v397 = vmul.f32 %v386, %v361
  %v398 = vmul.f32 %v390, %v357
  %v399 = vmul.f32 %v378, %v370
  %v400 = vmul.f32 %v382, %v366
  %v401 = vmul.f32 %v386, %v362
  %v402 = vmul.f32 %v390, %v358
  %v403 = vmul.f32 %v378, %v371
  %v404 = vmul.f32 %v382, %v367
  %v405 = vmul.f32 %v386, %v363
  %v406 = vmul.f32 %v390, %v359
  %v407 = vmul.f32 %v378, %v372
  %v408 = vmul.f32 %v382, %v368
  %v409 = vmul.f32 %v386, %v364
  %v410 = vmul.f32 %v390, %v360
  %411 = vset.pattern.permute.xlu0 0
  %412 = vperm.xlu0 %411, %v282
  %v413 = vpop.permute.xlu0 %412
  %415 = vset.pattern.permute.xlu0 0
  %416 = vperm.xlu0 %415, %v283
  %v417 = vpop.permute.xlu0 %416
  %419 = vset.pattern.permute.xlu0 0
  %420 = vperm.xlu0 %419, %v284
  %v421 = vpop.permute.xlu0 %420
  %423 = vset.pattern.permute.xlu0 0
  %424 = vperm.xlu0 %423, %v285
  %v425 = vpop.permute.xlu0 %424
  %v427 = vmul.f32 %v413, %v395
  %v428 = vmul.f32 %v413, %v396
  %v429 = vmul.f32 %v413, %v397
  %v430 = vmul.f32 %v413, %v398
  %v431 = vmul.f32 %v417, %v399
  %v432 = vmul.f32 %v417, %v400
  %v433 = vmul.f32 %v417, %v401
  %v434 = vmul.f32 %v417, %v402
  %v435 = vmul.f32 %v421, %v403
  %v436 = vmul.f32 %v421, %v404
  %v437 = vmul.f32 %v421, %v405
  %v438 = vmul.f32 %v421, %v406
  %v439 = vmul.f32 %v425, %v407
  %v440 = vmul.f32 %v425, %v408
  %v441 = vmul.f32 %v425, %v409
  %v442 = vmul.f32 %v425, %v410
  %v443 = vadd.f32 %v306, %v427
  %v444 = vadd.f32 %v307, %v428
  %v445 = vadd.f32 %v308, %v429
  %v446 = vadd.f32 %v309, %v430
  %v447 = vadd.f32 %v310, %v431
  %v448 = vadd.f32 %v311, %v432
  %v449 = vadd.f32 %v312, %v433
  %v450 = vadd.f32 %v313, %v434
  %v451 = vadd.f32 %v314, %v435
  %v452 = vadd.f32 %v315, %v436
  %v453 = vadd.f32 %v316, %v437
  %v454 = vadd.f32 %v317, %v438
  %v455 = vadd.f32 %v318, %v439
  %v456 = vadd.f32 %v319, %v440
  %v457 = vadd.f32 %v320, %v441
  %v458 = vadd.f32 %v321, %v442
  %459 = vrot.lane.b32.xlu0 %v266, 16
  %v460 = vpop.permute.xlu0 %459
  %461 = vrot.lane.b32.xlu0 %v270, 16
  %v462 = vpop.permute.xlu0 %461
  %463 = vrot.lane.b32.xlu0 %v274, 16
  %v464 = vpop.permute.xlu0 %463
  %465 = vrot.lane.b32.xlu0 %v278, 16
  %v466 = vpop.permute.xlu0 %465
  %467 = vrot.lane.b32.xlu0 %v267, 16
  %v468 = vpop.permute.xlu0 %467
  %469 = vrot.lane.b32.xlu0 %v271, 16
  %v470 = vpop.permute.xlu0 %469
  %471 = vrot.lane.b32.xlu0 %v275, 16
  %v472 = vpop.permute.xlu0 %471
  %473 = vrot.lane.b32.xlu0 %v279, 16
  %v474 = vpop.permute.xlu0 %473
  %475 = vrot.lane.b32.xlu0 %v268, 16
  %v476 = vpop.permute.xlu0 %475
  %477 = vrot.lane.b32.xlu0 %v272, 16
  %v478 = vpop.permute.xlu0 %477
  %479 = vrot.lane.b32.xlu0 %v276, 16
  %v480 = vpop.permute.xlu0 %479
  %481 = vrot.lane.b32.xlu0 %v280, 16
  %v482 = vpop.permute.xlu0 %481
  %483 = vrot.lane.b32.xlu0 %v269, 16
  %v484 = vpop.permute.xlu0 %483
  %485 = vrot.lane.b32.xlu0 %v273, 16
  %v486 = vpop.permute.xlu0 %485
  %487 = vrot.lane.b32.xlu0 %v277, 16
  %v488 = vpop.permute.xlu0 %487
  %489 = vrot.lane.b32.xlu0 %v281, 16
  %v490 = vpop.permute.xlu0 %489
  %vm491 = vcmp.lt.s32.totalorder %v355, 16
  %v492 = vsel %vm491, %v476, %v484
  %v493 = vsel %vm491, %v478, %v486
  %v494 = vsel %vm491, %v480, %v488
  %v495 = vsel %vm491, %v482, %v490
  %v496 = vsel %vm491, %v468, %v476
  %v497 = vsel %vm491, %v470, %v478
  %v498 = vsel %vm491, %v472, %v480
  %v499 = vsel %vm491, %v474, %v482
  %v500 = vsel %vm491, %v460, %v468
  %v501 = vsel %vm491, %v462, %v470
  %v502 = vsel %vm491, %v464, %v472
  %v503 = vsel %vm491, %v466, %v474
  %v504 = vsel %vm491, %v484, %v460
  %v505 = vsel %vm491, %v486, %v462
  %v506 = vsel %vm491, %v488, %v464
  %v507 = vsel %vm491, %v490, %v466
  %s508 = scalar_lea.vmem %s7, 1
  %v509 = vld [vmem:[%s508] ss:$8 sm:$0xf]
  %v511 = vlaneseq
  %v512 = vshrl.u32 %v511, 7
  %v513 = vsub.s32 0, %v512
  %v514 = vrot.slane %v509, %v513
  %v515 = vlaneseq
  %v516 = vshrl.u32 %v515, 7
  %v517 = vsub.s32 1, %v516
  %v518 = vrot.slane %v509, %v517
  %v519 = vlaneseq
  %v520 = vshrl.u32 %v519, 7
  %v521 = vsub.s32 2, %v520
  %v522 = vrot.slane %v509, %v521
  %v523 = vlaneseq
  %v524 = vshrl.u32 %v523, 7
  %v525 = vsub.s32 3, %v524
  %v526 = vrot.slane %v509, %v525
  %v531 = vmul.f32 %v514, %v504
  %v532 = vmul.f32 %v518, %v500
  %v533 = vmul.f32 %v522, %v496
  %v534 = vmul.f32 %v526, %v492
  %v535 = vmul.f32 %v514, %v505
  %v536 = vmul.f32 %v518, %v501
  %v537 = vmul.f32 %v522, %v497
  %v538 = vmul.f32 %v526, %v493
  %v539 = vmul.f32 %v514, %v506
  %v540 = vmul.f32 %v518, %v502
  %v541 = vmul.f32 %v522, %v498
  %v542 = vmul.f32 %v526, %v494
  %v543 = vmul.f32 %v514, %v507
  %v544 = vmul.f32 %v518, %v503
  %v545 = vmul.f32 %v522, %v499
  %v546 = vmul.f32 %v526, %v495
  %547 = vset.pattern.permute.xlu0 1
  %548 = vperm.xlu0 %547, %v282
  %v549 = vpop.permute.xlu0 %548
  %551 = vset.pattern.permute.xlu0 1
  %552 = vperm.xlu0 %551, %v283
  %v553 = vpop.permute.xlu0 %552
  %555 = vset.pattern.permute.xlu0 1
  %556 = vperm.xlu0 %555, %v284
  %v557 = vpop.permute.xlu0 %556
  %559 = vset.pattern.permute.xlu0 1
  %560 = vperm.xlu0 %559, %v285
  %v561 = vpop.permute.xlu0 %560
  %v563 = vmul.f32 %v549, %v531
  %v564 = vmul.f32 %v549, %v532
  %v565 = vmul.f32 %v549, %v533
  %v566 = vmul.f32 %v549, %v534
  %v567 = vmul.f32 %v553, %v535
  %v568 = vmul.f32 %v553, %v536
  %v569 = vmul.f32 %v553, %v537
  %v570 = vmul.f32 %v553, %v538
  %v571 = vmul.f32 %v557, %v539
  %v572 = vmul.f32 %v557, %v540
  %v573 = vmul.f32 %v557, %v541
  %v574 = vmul.f32 %v557, %v542
  %v575 = vmul.f32 %v561, %v543
  %v576 = vmul.f32 %v561, %v544
  %v577 = vmul.f32 %v561, %v545
  %v578 = vmul.f32 %v561, %v546
  %v579 = vadd.f32 %v443, %v563
  %v580 = vadd.f32 %v444, %v564
  %v581 = vadd.f32 %v445, %v565
  %v582 = vadd.f32 %v446, %v566
  %v583 = vadd.f32 %v447, %v567
  %v584 = vadd.f32 %v448, %v568
  %v585 = vadd.f32 %v449, %v569
  %v586 = vadd.f32 %v450, %v570
  %v587 = vadd.f32 %v451, %v571
  %v588 = vadd.f32 %v452, %v572
  %v589 = vadd.f32 %v453, %v573
  %v590 = vadd.f32 %v454, %v574
  %v591 = vadd.f32 %v455, %v575
  %v592 = vadd.f32 %v456, %v576
  %v593 = vadd.f32 %v457, %v577
  %v594 = vadd.f32 %v458, %v578
  %595 = vrot.lane.b32.xlu0 %v266, 15
  %v596 = vpop.permute.xlu0 %595
  %597 = vrot.lane.b32.xlu0 %v270, 15
  %v598 = vpop.permute.xlu0 %597
  %599 = vrot.lane.b32.xlu0 %v274, 15
  %v600 = vpop.permute.xlu0 %599
  %601 = vrot.lane.b32.xlu0 %v278, 15
  %v602 = vpop.permute.xlu0 %601
  %603 = vrot.lane.b32.xlu0 %v267, 15
  %v604 = vpop.permute.xlu0 %603
  %605 = vrot.lane.b32.xlu0 %v271, 15
  %v606 = vpop.permute.xlu0 %605
  %607 = vrot.lane.b32.xlu0 %v275, 15
  %v608 = vpop.permute.xlu0 %607
  %609 = vrot.lane.b32.xlu0 %v279, 15
  %v610 = vpop.permute.xlu0 %609
  %611 = vrot.lane.b32.xlu0 %v268, 15
  %v612 = vpop.permute.xlu0 %611
  %613 = vrot.lane.b32.xlu0 %v272, 15
  %v614 = vpop.permute.xlu0 %613
  %615 = vrot.lane.b32.xlu0 %v276, 15
  %v616 = vpop.permute.xlu0 %615
  %617 = vrot.lane.b32.xlu0 %v280, 15
  %v618 = vpop.permute.xlu0 %617
  %619 = vrot.lane.b32.xlu0 %v269, 15
  %v620 = vpop.permute.xlu0 %619
  %621 = vrot.lane.b32.xlu0 %v273, 15
  %v622 = vpop.permute.xlu0 %621
  %623 = vrot.lane.b32.xlu0 %v277, 15
  %v624 = vpop.permute.xlu0 %623
  %625 = vrot.lane.b32.xlu0 %v281, 15
  %v626 = vpop.permute.xlu0 %625
  %vm627 = vcmp.lt.s32.totalorder %v355, 15
  %v628 = vsel %vm627, %v612, %v620
  %v629 = vsel %vm627, %v614, %v622
  %v630 = vsel %vm627, %v616, %v624
  %v631 = vsel %vm627, %v618, %v626
  %v632 = vsel %vm627, %v604, %v612
  %v633 = vsel %vm627, %v606, %v614
  %v634 = vsel %vm627, %v608, %v616
  %v635 = vsel %vm627, %v610, %v618
  %v636 = vsel %vm627, %v596, %v604
  %v637 = vsel %vm627, %v598, %v606
  %v638 = vsel %vm627, %v600, %v608
  %v639 = vsel %vm627, %v602, %v610
  %v640 = vsel %vm627, %v620, %v596
  %v641 = vsel %vm627, %v622, %v598
  %v642 = vsel %vm627, %v624, %v600
  %v643 = vsel %vm627, %v626, %v602
  %s644 = scalar_lea.vmem %s7, 2
  %v645 = vld [vmem:[%s644] ss:$8 sm:$0xf]
  %v647 = vlaneseq
  %v648 = vshrl.u32 %v647, 7
  %v649 = vsub.s32 0, %v648
  %v650 = vrot.slane %v645, %v649
  %v651 = vlaneseq
  %v652 = vshrl.u32 %v651, 7
  %v653 = vsub.s32 1, %v652
  %v654 = vrot.slane %v645, %v653
  %v655 = vlaneseq
  %v656 = vshrl.u32 %v655, 7
  %v657 = vsub.s32 2, %v656
  %v658 = vrot.slane %v645, %v657
  %v659 = vlaneseq
  %v660 = vshrl.u32 %v659, 7
  %v661 = vsub.s32 3, %v660
  %v662 = vrot.slane %v645, %v661
  %v667 = vmul.f32 %v650, %v640
  %v668 = vmul.f32 %v654, %v636
  %v669 = vmul.f32 %v658, %v632
  %v670 = vmul.f32 %v662, %v628
  %v671 = vmul.f32 %v650, %v641
  %v672 = vmul.f32 %v654, %v637
  %v673 = vmul.f32 %v658, %v633
  %v674 = vmul.f32 %v662, %v629
  %v675 = vmul.f32 %v650, %v642
  %v676 = vmul.f32 %v654, %v638
  %v677 = vmul.f32 %v658, %v634
  %v678 = vmul.f32 %v662, %v630
  %v679 = vmul.f32 %v650, %v643
  %v680 = vmul.f32 %v654, %v639
  %v681 = vmul.f32 %v658, %v635
  %v682 = vmul.f32 %v662, %v631
  %683 = vset.pattern.permute.xlu0 2
  %684 = vperm.xlu0 %683, %v282
  %v685 = vpop.permute.xlu0 %684
  %687 = vset.pattern.permute.xlu0 2
  %688 = vperm.xlu0 %687, %v283
  %v689 = vpop.permute.xlu0 %688
  %691 = vset.pattern.permute.xlu0 2
  %692 = vperm.xlu0 %691, %v284
  %v693 = vpop.permute.xlu0 %692
  %695 = vset.pattern.permute.xlu0 2
  %696 = vperm.xlu0 %695, %v285
  %v697 = vpop.permute.xlu0 %696
  %v699 = vmul.f32 %v685, %v667
  %v700 = vmul.f32 %v685, %v668
  %v701 = vmul.f32 %v685, %v669
  %v702 = vmul.f32 %v685, %v670
  %v703 = vmul.f32 %v689, %v671
  %v704 = vmul.f32 %v689, %v672
  %v705 = vmul.f32 %v689, %v673
  %v706 = vmul.f32 %v689, %v674
  %v707 = vmul.f32 %v693, %v675
  %v708 = vmul.f32 %v693, %v676
  %v709 = vmul.f32 %v693, %v677
  %v710 = vmul.f32 %v693, %v678
  %v711 = vmul.f32 %v697, %v679
  %v712 = vmul.f32 %v697, %v680
  %v713 = vmul.f32 %v697, %v681
  %v714 = vmul.f32 %v697, %v682
  %v715 = vadd.f32 %v579, %v699
  %v716 = vadd.f32 %v580, %v700
  %v717 = vadd.f32 %v581, %v701
  %v718 = vadd.f32 %v582, %v702
  %v719 = vadd.f32 %v583, %v703
  %v720 = vadd.f32 %v584, %v704
  %v721 = vadd.f32 %v585, %v705
  %v722 = vadd.f32 %v586, %v706
  %v723 = vadd.f32 %v587, %v707
  %v724 = vadd.f32 %v588, %v708
  %v725 = vadd.f32 %v589, %v709
  %v726 = vadd.f32 %v590, %v710
  %v727 = vadd.f32 %v591, %v711
  %v728 = vadd.f32 %v592, %v712
  %v729 = vadd.f32 %v593, %v713
  %v730 = vadd.f32 %v594, %v714
  %731 = vrot.lane.b32.xlu0 %v266, 1
  %v732 = vpop.permute.xlu0 %731
  %733 = vrot.lane.b32.xlu0 %v270, 1
  %v734 = vpop.permute.xlu0 %733
  %735 = vrot.lane.b32.xlu0 %v274, 1
  %v736 = vpop.permute.xlu0 %735
  %737 = vrot.lane.b32.xlu0 %v278, 1
  %v738 = vpop.permute.xlu0 %737
  %739 = vrot.lane.b32.xlu0 %v267, 1
  %v740 = vpop.permute.xlu0 %739
  %741 = vrot.lane.b32.xlu0 %v271, 1
  %v742 = vpop.permute.xlu0 %741
  %743 = vrot.lane.b32.xlu0 %v275, 1
  %v744 = vpop.permute.xlu0 %743
  %745 = vrot.lane.b32.xlu0 %v279, 1
  %v746 = vpop.permute.xlu0 %745
  %747 = vrot.lane.b32.xlu0 %v268, 1
  %v748 = vpop.permute.xlu0 %747
  %749 = vrot.lane.b32.xlu0 %v272, 1
  %v750 = vpop.permute.xlu0 %749
  %751 = vrot.lane.b32.xlu0 %v276, 1
  %v752 = vpop.permute.xlu0 %751
  %753 = vrot.lane.b32.xlu0 %v280, 1
  %v754 = vpop.permute.xlu0 %753
  %755 = vrot.lane.b32.xlu0 %v269, 1
  %v756 = vpop.permute.xlu0 %755
  %757 = vrot.lane.b32.xlu0 %v273, 1
  %v758 = vpop.permute.xlu0 %757
  %759 = vrot.lane.b32.xlu0 %v277, 1
  %v760 = vpop.permute.xlu0 %759
  %761 = vrot.lane.b32.xlu0 %v281, 1
  %v762 = vpop.permute.xlu0 %761
  %vm763 = vcmp.lt.s32.totalorder %v355, 1
  %v764 = vsel %vm763, %v748, %v756
  %v765 = vsel %vm763, %v750, %v758
  %v766 = vsel %vm763, %v752, %v760
  %v767 = vsel %vm763, %v754, %v762
  %v768 = vsel %vm763, %v740, %v748
  %v769 = vsel %vm763, %v742, %v750
  %v770 = vsel %vm763, %v744, %v752
  %v771 = vsel %vm763, %v746, %v754
  %v772 = vsel %vm763, %v732, %v740
  %v773 = vsel %vm763, %v734, %v742
  %v774 = vsel %vm763, %v736, %v744
  %v775 = vsel %vm763, %v738, %v746
  %v776 = vsel %vm763, %v756, %v732
  %v777 = vsel %vm763, %v758, %v734
  %v778 = vsel %vm763, %v760, %v736
  %v779 = vsel %vm763, %v762, %v738
  %s780 = scalar_lea.vmem %s7, 3
  %v781 = vld [vmem:[%s780] ss:$8 sm:$0xf]
  %v783 = vlaneseq
  %v784 = vshrl.u32 %v783, 7
  %v785 = vsub.s32 0, %v784
  %v786 = vrot.slane %v781, %v785
  %v787 = vlaneseq
  %v788 = vshrl.u32 %v787, 7
  %v789 = vsub.s32 1, %v788
  %v790 = vrot.slane %v781, %v789
  %v791 = vlaneseq
  %v792 = vshrl.u32 %v791, 7
  %v793 = vsub.s32 2, %v792
  %v794 = vrot.slane %v781, %v793
  %v795 = vlaneseq
  %v796 = vshrl.u32 %v795, 7
  %v797 = vsub.s32 3, %v796
  %v798 = vrot.slane %v781, %v797
  %v803 = vmul.f32 %v786, %v776
  %v804 = vmul.f32 %v790, %v772
  %v805 = vmul.f32 %v794, %v768
  %v806 = vmul.f32 %v798, %v764
  %v807 = vmul.f32 %v786, %v777
  %v808 = vmul.f32 %v790, %v773
  %v809 = vmul.f32 %v794, %v769
  %v810 = vmul.f32 %v798, %v765
  %v811 = vmul.f32 %v786, %v778
  %v812 = vmul.f32 %v790, %v774
  %v813 = vmul.f32 %v794, %v770
  %v814 = vmul.f32 %v798, %v766
  %v815 = vmul.f32 %v786, %v779
  %v816 = vmul.f32 %v790, %v775
  %v817 = vmul.f32 %v794, %v771
  %v818 = vmul.f32 %v798, %v767
  %819 = vset.pattern.permute.xlu0 3
  %820 = vperm.xlu0 %819, %v282
  %v821 = vpop.permute.xlu0 %820
  %823 = vset.pattern.permute.xlu0 3
  %824 = vperm.xlu0 %823, %v283
  %v825 = vpop.permute.xlu0 %824
  %827 = vset.pattern.permute.xlu0 3
  %828 = vperm.xlu0 %827, %v284
  %v829 = vpop.permute.xlu0 %828
  %831 = vset.pattern.permute.xlu0 3
  %832 = vperm.xlu0 %831, %v285
  %v833 = vpop.permute.xlu0 %832
  %v835 = vmul.f32 %v821, %v803
  %v836 = vmul.f32 %v821, %v804
  %v837 = vmul.f32 %v821, %v805
  %v838 = vmul.f32 %v821, %v806
  %v839 = vmul.f32 %v825, %v807
  %v840 = vmul.f32 %v825, %v808
  %v841 = vmul.f32 %v825, %v809
  %v842 = vmul.f32 %v825, %v810
  %v843 = vmul.f32 %v829, %v811
  %v844 = vmul.f32 %v829, %v812
  %v845 = vmul.f32 %v829, %v813
  %v846 = vmul.f32 %v829, %v814
  %v847 = vmul.f32 %v833, %v815
  %v848 = vmul.f32 %v833, %v816
  %v849 = vmul.f32 %v833, %v817
  %v850 = vmul.f32 %v833, %v818
  %v851 = vadd.f32 %v715, %v835
  %v852 = vadd.f32 %v716, %v836
  %v853 = vadd.f32 %v717, %v837
  %v854 = vadd.f32 %v718, %v838
  %v855 = vadd.f32 %v719, %v839
  %v856 = vadd.f32 %v720, %v840
  %v857 = vadd.f32 %v721, %v841
  %v858 = vadd.f32 %v722, %v842
  %v859 = vadd.f32 %v723, %v843
  %v860 = vadd.f32 %v724, %v844
  %v861 = vadd.f32 %v725, %v845
  %v862 = vadd.f32 %v726, %v846
  %v863 = vadd.f32 %v727, %v847
  %v864 = vadd.f32 %v728, %v848
  %v865 = vadd.f32 %v729, %v849
  %v866 = vadd.f32 %v730, %v850
  %867 = vrot.lane.b32.xlu0 %v266, 127
  %v868 = vpop.permute.xlu0 %867
  %869 = vrot.lane.b32.xlu0 %v270, 127
  %v870 = vpop.permute.xlu0 %869
  %871 = vrot.lane.b32.xlu0 %v274, 127
  %v872 = vpop.permute.xlu0 %871
  %873 = vrot.lane.b32.xlu0 %v278, 127
  %v874 = vpop.permute.xlu0 %873
  %875 = vrot.lane.b32.xlu0 %v267, 127
  %v876 = vpop.permute.xlu0 %875
  %877 = vrot.lane.b32.xlu0 %v271, 127
  %v878 = vpop.permute.xlu0 %877
  %879 = vrot.lane.b32.xlu0 %v275, 127
  %v880 = vpop.permute.xlu0 %879
  %881 = vrot.lane.b32.xlu0 %v279, 127
  %v882 = vpop.permute.xlu0 %881
  %883 = vrot.lane.b32.xlu0 %v268, 127
  %v884 = vpop.permute.xlu0 %883
  %885 = vrot.lane.b32.xlu0 %v272, 127
  %v886 = vpop.permute.xlu0 %885
  %887 = vrot.lane.b32.xlu0 %v276, 127
  %v888 = vpop.permute.xlu0 %887
  %889 = vrot.lane.b32.xlu0 %v280, 127
  %v890 = vpop.permute.xlu0 %889
  %891 = vrot.lane.b32.xlu0 %v269, 127
  %v892 = vpop.permute.xlu0 %891
  %893 = vrot.lane.b32.xlu0 %v273, 127
  %v894 = vpop.permute.xlu0 %893
  %895 = vrot.lane.b32.xlu0 %v277, 127
  %v896 = vpop.permute.xlu0 %895
  %897 = vrot.lane.b32.xlu0 %v281, 127
  %v898 = vpop.permute.xlu0 %897
  %vm899 = vcmp.lt.s32.totalorder %v355, 127
  %v900 = vsel %vm899, %v884, %v892
  %v901 = vsel %vm899, %v886, %v894
  %v902 = vsel %vm899, %v888, %v896
  %v903 = vsel %vm899, %v890, %v898
  %v904 = vsel %vm899, %v876, %v884
  %v905 = vsel %vm899, %v878, %v886
  %v906 = vsel %vm899, %v880, %v888
  %v907 = vsel %vm899, %v882, %v890
  %v908 = vsel %vm899, %v868, %v876
  %v909 = vsel %vm899, %v870, %v878
  %v910 = vsel %vm899, %v872, %v880
  %v911 = vsel %vm899, %v874, %v882
  %v912 = vsel %vm899, %v892, %v868
  %v913 = vsel %vm899, %v894, %v870
  %v914 = vsel %vm899, %v896, %v872
  %v915 = vsel %vm899, %v898, %v874
  %s916 = scalar_lea.vmem %s7, 5
  %v917 = vld [vmem:[%s916] ss:$8 sm:$0xf]
  %v919 = vlaneseq
  %v920 = vshrl.u32 %v919, 7
  %v921 = vsub.s32 0, %v920
  %v922 = vrot.slane %v917, %v921
  %v923 = vlaneseq
  %v924 = vshrl.u32 %v923, 7
  %v925 = vsub.s32 1, %v924
  %v926 = vrot.slane %v917, %v925
  %v927 = vlaneseq
  %v928 = vshrl.u32 %v927, 7
  %v929 = vsub.s32 2, %v928
  %v930 = vrot.slane %v917, %v929
  %v931 = vlaneseq
  %v932 = vshrl.u32 %v931, 7
  %v933 = vsub.s32 3, %v932
  %v934 = vrot.slane %v917, %v933
  %v939 = vmul.f32 %v922, %v908
  %v940 = vmul.f32 %v926, %v904
  %v941 = vmul.f32 %v930, %v900
  %v942 = vmul.f32 %v934, %v912
  %v943 = vmul.f32 %v922, %v909
  %v944 = vmul.f32 %v926, %v905
  %v945 = vmul.f32 %v930, %v901
  %v946 = vmul.f32 %v934, %v913
  %v947 = vmul.f32 %v922, %v910
  %v948 = vmul.f32 %v926, %v906
  %v949 = vmul.f32 %v930, %v902
  %v950 = vmul.f32 %v934, %v914
  %v951 = vmul.f32 %v922, %v911
  %v952 = vmul.f32 %v926, %v907
  %v953 = vmul.f32 %v930, %v903
  %v954 = vmul.f32 %v934, %v915
  %955 = vset.pattern.permute.xlu0 5
  %956 = vperm.xlu0 %955, %v282
  %v957 = vpop.permute.xlu0 %956
  %959 = vset.pattern.permute.xlu0 5
  %960 = vperm.xlu0 %959, %v283
  %v961 = vpop.permute.xlu0 %960
  %963 = vset.pattern.permute.xlu0 5
  %964 = vperm.xlu0 %963, %v284
  %v965 = vpop.permute.xlu0 %964
  %967 = vset.pattern.permute.xlu0 5
  %968 = vperm.xlu0 %967, %v285
  %v969 = vpop.permute.xlu0 %968
  %v971 = vmul.f32 %v957, %v939
  %v972 = vmul.f32 %v957, %v940
  %v973 = vmul.f32 %v957, %v941
  %v974 = vmul.f32 %v957, %v942
  %v975 = vmul.f32 %v961, %v943
  %v976 = vmul.f32 %v961, %v944
  %v977 = vmul.f32 %v961, %v945
  %v978 = vmul.f32 %v961, %v946
  %v979 = vmul.f32 %v965, %v947
  %v980 = vmul.f32 %v965, %v948
  %v981 = vmul.f32 %v965, %v949
  %v982 = vmul.f32 %v965, %v950
  %v983 = vmul.f32 %v969, %v951
  %v984 = vmul.f32 %v969, %v952
  %v985 = vmul.f32 %v969, %v953
  %v986 = vmul.f32 %v969, %v954
  %v987 = vadd.f32 %v851, %v971
  %v988 = vadd.f32 %v852, %v972
  %v989 = vadd.f32 %v853, %v973
  %v990 = vadd.f32 %v854, %v974
  %v991 = vadd.f32 %v855, %v975
  %v992 = vadd.f32 %v856, %v976
  %v993 = vadd.f32 %v857, %v977
  %v994 = vadd.f32 %v858, %v978
  %v995 = vadd.f32 %v859, %v979
  %v996 = vadd.f32 %v860, %v980
  %v997 = vadd.f32 %v861, %v981
  %v998 = vadd.f32 %v862, %v982
  %v999 = vadd.f32 %v863, %v983
  %v1000 = vadd.f32 %v864, %v984
  %v1001 = vadd.f32 %v865, %v985
  %v1002 = vadd.f32 %v866, %v986
  %1003 = vrot.lane.b32.xlu0 %v266, 113
  %v1004 = vpop.permute.xlu0 %1003
  %1005 = vrot.lane.b32.xlu0 %v270, 113
  %v1006 = vpop.permute.xlu0 %1005
  %1007 = vrot.lane.b32.xlu0 %v274, 113
  %v1008 = vpop.permute.xlu0 %1007
  %1009 = vrot.lane.b32.xlu0 %v278, 113
  %v1010 = vpop.permute.xlu0 %1009
  %1011 = vrot.lane.b32.xlu0 %v267, 113
  %v1012 = vpop.permute.xlu0 %1011
  %1013 = vrot.lane.b32.xlu0 %v271, 113
  %v1014 = vpop.permute.xlu0 %1013
  %1015 = vrot.lane.b32.xlu0 %v275, 113
  %v1016 = vpop.permute.xlu0 %1015
  %1017 = vrot.lane.b32.xlu0 %v279, 113
  %v1018 = vpop.permute.xlu0 %1017
  %1019 = vrot.lane.b32.xlu0 %v268, 113
  %v1020 = vpop.permute.xlu0 %1019
  %1021 = vrot.lane.b32.xlu0 %v272, 113
  %v1022 = vpop.permute.xlu0 %1021
  %1023 = vrot.lane.b32.xlu0 %v276, 113
  %v1024 = vpop.permute.xlu0 %1023
  %1025 = vrot.lane.b32.xlu0 %v280, 113
  %v1026 = vpop.permute.xlu0 %1025
  %1027 = vrot.lane.b32.xlu0 %v269, 113
  %v1028 = vpop.permute.xlu0 %1027
  %1029 = vrot.lane.b32.xlu0 %v273, 113
  %v1030 = vpop.permute.xlu0 %1029
  %1031 = vrot.lane.b32.xlu0 %v277, 113
  %v1032 = vpop.permute.xlu0 %1031
  %1033 = vrot.lane.b32.xlu0 %v281, 113
  %v1034 = vpop.permute.xlu0 %1033
  %vm1035 = vcmp.lt.s32.totalorder %v355, 113
  %v1036 = vsel %vm1035, %v1020, %v1028
  %v1037 = vsel %vm1035, %v1022, %v1030
  %v1038 = vsel %vm1035, %v1024, %v1032
  %v1039 = vsel %vm1035, %v1026, %v1034
  %v1040 = vsel %vm1035, %v1012, %v1020
  %v1041 = vsel %vm1035, %v1014, %v1022
  %v1042 = vsel %vm1035, %v1016, %v1024
  %v1043 = vsel %vm1035, %v1018, %v1026
  %v1044 = vsel %vm1035, %v1004, %v1012
  %v1045 = vsel %vm1035, %v1006, %v1014
  %v1046 = vsel %vm1035, %v1008, %v1016
  %v1047 = vsel %vm1035, %v1010, %v1018
  %v1048 = vsel %vm1035, %v1028, %v1004
  %v1049 = vsel %vm1035, %v1030, %v1006
  %v1050 = vsel %vm1035, %v1032, %v1008
  %v1051 = vsel %vm1035, %v1034, %v1010
  %s1052 = scalar_lea.vmem %s7, 6
  %v1053 = vld [vmem:[%s1052] ss:$8 sm:$0xf]
  %v1055 = vlaneseq
  %v1056 = vshrl.u32 %v1055, 7
  %v1057 = vsub.s32 0, %v1056
  %v1058 = vrot.slane %v1053, %v1057
  %v1059 = vlaneseq
  %v1060 = vshrl.u32 %v1059, 7
  %v1061 = vsub.s32 1, %v1060
  %v1062 = vrot.slane %v1053, %v1061
  %v1063 = vlaneseq
  %v1064 = vshrl.u32 %v1063, 7
  %v1065 = vsub.s32 2, %v1064
  %v1066 = vrot.slane %v1053, %v1065
  %v1067 = vlaneseq
  %v1068 = vshrl.u32 %v1067, 7
  %v1069 = vsub.s32 3, %v1068
  %v1070 = vrot.slane %v1053, %v1069
  %v1075 = vmul.f32 %v1058, %v1044
  %v1076 = vmul.f32 %v1062, %v1040
  %v1077 = vmul.f32 %v1066, %v1036
  %v1078 = vmul.f32 %v1070, %v1048
  %v1079 = vmul.f32 %v1058, %v1045
  %v1080 = vmul.f32 %v1062, %v1041
  %v1081 = vmul.f32 %v1066, %v1037
  %v1082 = vmul.f32 %v1070, %v1049
  %v1083 = vmul.f32 %v1058, %v1046
  %v1084 = vmul.f32 %v1062, %v1042
  %v1085 = vmul.f32 %v1066, %v1038
  %v1086 = vmul.f32 %v1070, %v1050
  %v1087 = vmul.f32 %v1058, %v1047
  %v1088 = vmul.f32 %v1062, %v1043
  %v1089 = vmul.f32 %v1066, %v1039
  %v1090 = vmul.f32 %v1070, %v1051
  %1091 = vset.pattern.permute.xlu0 6
  %1092 = vperm.xlu0 %1091, %v282
  %v1093 = vpop.permute.xlu0 %1092
  %1095 = vset.pattern.permute.xlu0 6
  %1096 = vperm.xlu0 %1095, %v283
  %v1097 = vpop.permute.xlu0 %1096
  %1099 = vset.pattern.permute.xlu0 6
  %1100 = vperm.xlu0 %1099, %v284
  %v1101 = vpop.permute.xlu0 %1100
  %1103 = vset.pattern.permute.xlu0 6
  %1104 = vperm.xlu0 %1103, %v285
  %v1105 = vpop.permute.xlu0 %1104
  %v1107 = vmul.f32 %v1093, %v1075
  %v1108 = vmul.f32 %v1093, %v1076
  %v1109 = vmul.f32 %v1093, %v1077
  %v1110 = vmul.f32 %v1093, %v1078
  %v1111 = vmul.f32 %v1097, %v1079
  %v1112 = vmul.f32 %v1097, %v1080
  %v1113 = vmul.f32 %v1097, %v1081
  %v1114 = vmul.f32 %v1097, %v1082
  %v1115 = vmul.f32 %v1101, %v1083
  %v1116 = vmul.f32 %v1101, %v1084
  %v1117 = vmul.f32 %v1101, %v1085
  %v1118 = vmul.f32 %v1101, %v1086
  %v1119 = vmul.f32 %v1105, %v1087
  %v1120 = vmul.f32 %v1105, %v1088
  %v1121 = vmul.f32 %v1105, %v1089
  %v1122 = vmul.f32 %v1105, %v1090
  %v1123 = vadd.f32 %v987, %v1107
  %v1124 = vadd.f32 %v988, %v1108
  %v1125 = vadd.f32 %v989, %v1109
  %v1126 = vadd.f32 %v990, %v1110
  %v1127 = vadd.f32 %v991, %v1111
  %v1128 = vadd.f32 %v992, %v1112
  %v1129 = vadd.f32 %v993, %v1113
  %v1130 = vadd.f32 %v994, %v1114
  %v1131 = vadd.f32 %v995, %v1115
  %v1132 = vadd.f32 %v996, %v1116
  %v1133 = vadd.f32 %v997, %v1117
  %v1134 = vadd.f32 %v998, %v1118
  %v1135 = vadd.f32 %v999, %v1119
  %v1136 = vadd.f32 %v1000, %v1120
  %v1137 = vadd.f32 %v1001, %v1121
  %v1138 = vadd.f32 %v1002, %v1122
  %1139 = vrot.lane.b32.xlu0 %v266, 112
  %v1140 = vpop.permute.xlu0 %1139
  %1141 = vrot.lane.b32.xlu0 %v270, 112
  %v1142 = vpop.permute.xlu0 %1141
  %1143 = vrot.lane.b32.xlu0 %v274, 112
  %v1144 = vpop.permute.xlu0 %1143
  %1145 = vrot.lane.b32.xlu0 %v278, 112
  %v1146 = vpop.permute.xlu0 %1145
  %1147 = vrot.lane.b32.xlu0 %v267, 112
  %v1148 = vpop.permute.xlu0 %1147
  %1149 = vrot.lane.b32.xlu0 %v271, 112
  %v1150 = vpop.permute.xlu0 %1149
  %1151 = vrot.lane.b32.xlu0 %v275, 112
  %v1152 = vpop.permute.xlu0 %1151
  %1153 = vrot.lane.b32.xlu0 %v279, 112
  %v1154 = vpop.permute.xlu0 %1153
  %1155 = vrot.lane.b32.xlu0 %v268, 112
  %v1156 = vpop.permute.xlu0 %1155
  %1157 = vrot.lane.b32.xlu0 %v272, 112
  %v1158 = vpop.permute.xlu0 %1157
  %1159 = vrot.lane.b32.xlu0 %v276, 112
  %v1160 = vpop.permute.xlu0 %1159
  %1161 = vrot.lane.b32.xlu0 %v280, 112
  %v1162 = vpop.permute.xlu0 %1161
  %1163 = vrot.lane.b32.xlu0 %v269, 112
  %v1164 = vpop.permute.xlu0 %1163
  %1165 = vrot.lane.b32.xlu0 %v273, 112
  %v1166 = vpop.permute.xlu0 %1165
  %1167 = vrot.lane.b32.xlu0 %v277, 112
  %v1168 = vpop.permute.xlu0 %1167
  %1169 = vrot.lane.b32.xlu0 %v281, 112
  %v1170 = vpop.permute.xlu0 %1169
  %vm1171 = vcmp.lt.s32.totalorder %v355, 112
  %v1172 = vsel %vm1171, %v1156, %v1164
  %v1173 = vsel %vm1171, %v1158, %v1166
  %v1174 = vsel %vm1171, %v1160, %v1168
  %v1175 = vsel %vm1171, %v1162, %v1170
  %v1176 = vsel %vm1171, %v1148, %v1156
  %v1177 = vsel %vm1171, %v1150, %v1158
  %v1178 = vsel %vm1171, %v1152, %v1160
  %v1179 = vsel %vm1171, %v1154, %v1162
  %v1180 = vsel %vm1171, %v1140, %v1148
  %v1181 = vsel %vm1171, %v1142, %v1150
  %v1182 = vsel %vm1171, %v1144, %v1152
  %v1183 = vsel %vm1171, %v1146, %v1154
  %v1184 = vsel %vm1171, %v1164, %v1140
  %v1185 = vsel %vm1171, %v1166, %v1142
  %v1186 = vsel %vm1171, %v1168, %v1144
  %v1187 = vsel %vm1171, %v1170, %v1146
  %s1188 = scalar_lea.vmem %s7, 7
  %v1189 = vld [vmem:[%s1188] ss:$8 sm:$0xf]
  %v1191 = vlaneseq
  %v1192 = vshrl.u32 %v1191, 7
  %v1193 = vsub.s32 0, %v1192
  %v1194 = vrot.slane %v1189, %v1193
  %v1195 = vlaneseq
  %v1196 = vshrl.u32 %v1195, 7
  %v1197 = vsub.s32 1, %v1196
  %v1198 = vrot.slane %v1189, %v1197
  %v1199 = vlaneseq
  %v1200 = vshrl.u32 %v1199, 7
  %v1201 = vsub.s32 2, %v1200
  %v1202 = vrot.slane %v1189, %v1201
  %v1203 = vlaneseq
  %v1204 = vshrl.u32 %v1203, 7
  %v1205 = vsub.s32 3, %v1204
  %v1206 = vrot.slane %v1189, %v1205
  %v1211 = vmul.f32 %v1194, %v1180
  %v1212 = vmul.f32 %v1198, %v1176
  %v1213 = vmul.f32 %v1202, %v1172
  %v1214 = vmul.f32 %v1206, %v1184
  %v1215 = vmul.f32 %v1194, %v1181
  %v1216 = vmul.f32 %v1198, %v1177
  %v1217 = vmul.f32 %v1202, %v1173
  %v1218 = vmul.f32 %v1206, %v1185
  %v1219 = vmul.f32 %v1194, %v1182
  %v1220 = vmul.f32 %v1198, %v1178
  %v1221 = vmul.f32 %v1202, %v1174
  %v1222 = vmul.f32 %v1206, %v1186
  %v1223 = vmul.f32 %v1194, %v1183
  %v1224 = vmul.f32 %v1198, %v1179
  %v1225 = vmul.f32 %v1202, %v1175
  %v1226 = vmul.f32 %v1206, %v1187
  %1227 = vset.pattern.permute.xlu0 7
  %1228 = vperm.xlu0 %1227, %v282
  %v1229 = vpop.permute.xlu0 %1228
  %1231 = vset.pattern.permute.xlu0 7
  %1232 = vperm.xlu0 %1231, %v283
  %v1233 = vpop.permute.xlu0 %1232
  %1235 = vset.pattern.permute.xlu0 7
  %1236 = vperm.xlu0 %1235, %v284
  %v1237 = vpop.permute.xlu0 %1236
  %1239 = vset.pattern.permute.xlu0 7
  %1240 = vperm.xlu0 %1239, %v285
  %v1241 = vpop.permute.xlu0 %1240
  %v1243 = vmul.f32 %v1229, %v1211
  %v1244 = vmul.f32 %v1229, %v1212
  %v1245 = vmul.f32 %v1229, %v1213
  %v1246 = vmul.f32 %v1229, %v1214
  %v1247 = vmul.f32 %v1233, %v1215
  %v1248 = vmul.f32 %v1233, %v1216
  %v1249 = vmul.f32 %v1233, %v1217
  %v1250 = vmul.f32 %v1233, %v1218
  %v1251 = vmul.f32 %v1237, %v1219
  %v1252 = vmul.f32 %v1237, %v1220
  %v1253 = vmul.f32 %v1237, %v1221
  %v1254 = vmul.f32 %v1237, %v1222
  %v1255 = vmul.f32 %v1241, %v1223
  %v1256 = vmul.f32 %v1241, %v1224
  %v1257 = vmul.f32 %v1241, %v1225
  %v1258 = vmul.f32 %v1241, %v1226
  %v1259 = vadd.f32 %v1123, %v1243
  %v1260 = vadd.f32 %v1124, %v1244
  %v1261 = vadd.f32 %v1125, %v1245
  %v1262 = vadd.f32 %v1126, %v1246
  %v1263 = vadd.f32 %v1127, %v1247
  %v1264 = vadd.f32 %v1128, %v1248
  %v1265 = vadd.f32 %v1129, %v1249
  %v1266 = vadd.f32 %v1130, %v1250
  %v1267 = vadd.f32 %v1131, %v1251
  %v1268 = vadd.f32 %v1132, %v1252
  %v1269 = vadd.f32 %v1133, %v1253
  %v1270 = vadd.f32 %v1134, %v1254
  %v1271 = vadd.f32 %v1135, %v1255
  %v1272 = vadd.f32 %v1136, %v1256
  %v1273 = vadd.f32 %v1137, %v1257
  %v1274 = vadd.f32 %v1138, %v1258
  %1275 = vrot.lane.b32.xlu0 %v266, 111
  %v1276 = vpop.permute.xlu0 %1275
  %1277 = vrot.lane.b32.xlu0 %v270, 111
  %v1278 = vpop.permute.xlu0 %1277
  %1279 = vrot.lane.b32.xlu0 %v274, 111
  %v1280 = vpop.permute.xlu0 %1279
  %1281 = vrot.lane.b32.xlu0 %v278, 111
  %v1282 = vpop.permute.xlu0 %1281
  %1283 = vrot.lane.b32.xlu0 %v267, 111
  %v1284 = vpop.permute.xlu0 %1283
  %1285 = vrot.lane.b32.xlu0 %v271, 111
  %v1286 = vpop.permute.xlu0 %1285
  %1287 = vrot.lane.b32.xlu0 %v275, 111
  %v1288 = vpop.permute.xlu0 %1287
  %1289 = vrot.lane.b32.xlu0 %v279, 111
  %v1290 = vpop.permute.xlu0 %1289
  %1291 = vrot.lane.b32.xlu0 %v268, 111
  %v1292 = vpop.permute.xlu0 %1291
  %1293 = vrot.lane.b32.xlu0 %v272, 111
  %v1294 = vpop.permute.xlu0 %1293
  %1295 = vrot.lane.b32.xlu0 %v276, 111
  %v1296 = vpop.permute.xlu0 %1295
  %1297 = vrot.lane.b32.xlu0 %v280, 111
  %v1298 = vpop.permute.xlu0 %1297
  %1299 = vrot.lane.b32.xlu0 %v269, 111
  %v1300 = vpop.permute.xlu0 %1299
  %1301 = vrot.lane.b32.xlu0 %v273, 111
  %v1302 = vpop.permute.xlu0 %1301
  %1303 = vrot.lane.b32.xlu0 %v277, 111
  %v1304 = vpop.permute.xlu0 %1303
  %1305 = vrot.lane.b32.xlu0 %v281, 111
  %v1306 = vpop.permute.xlu0 %1305
  %vm1307 = vcmp.lt.s32.totalorder %v355, 111
  %v1308 = vsel %vm1307, %v1292, %v1300
  %v1309 = vsel %vm1307, %v1294, %v1302
  %v1310 = vsel %vm1307, %v1296, %v1304
  %v1311 = vsel %vm1307, %v1298, %v1306
  %v1312 = vsel %vm1307, %v1284, %v1292
  %v1313 = vsel %vm1307, %v1286, %v1294
  %v1314 = vsel %vm1307, %v1288, %v1296
  %v1315 = vsel %vm1307, %v1290, %v1298
  %v1316 = vsel %vm1307, %v1276, %v1284
  %v1317 = vsel %vm1307, %v1278, %v1286
  %v1318 = vsel %vm1307, %v1280, %v1288
  %v1319 = vsel %vm1307, %v1282, %v1290
  %v1320 = vsel %vm1307, %v1300, %v1276
  %v1321 = vsel %vm1307, %v1302, %v1278
  %v1322 = vsel %vm1307, %v1304, %v1280
  %v1323 = vsel %vm1307, %v1306, %v1282
  %s1324 = scalar_lea.vmem %s7, 32
  %v1325 = vld [vmem:[%s1324] ss:$8 sm:$0xf]
  %v1327 = vlaneseq
  %v1328 = vshrl.u32 %v1327, 7
  %v1329 = vsub.s32 0, %v1328
  %v1330 = vrot.slane %v1325, %v1329
  %v1331 = vlaneseq
  %v1332 = vshrl.u32 %v1331, 7
  %v1333 = vsub.s32 1, %v1332
  %v1334 = vrot.slane %v1325, %v1333
  %v1335 = vlaneseq
  %v1336 = vshrl.u32 %v1335, 7
  %v1337 = vsub.s32 2, %v1336
  %v1338 = vrot.slane %v1325, %v1337
  %v1339 = vlaneseq
  %v1340 = vshrl.u32 %v1339, 7
  %v1341 = vsub.s32 3, %v1340
  %v1342 = vrot.slane %v1325, %v1341
  %v1347 = vmul.f32 %v1330, %v1316
  %v1348 = vmul.f32 %v1334, %v1312
  %v1349 = vmul.f32 %v1338, %v1308
  %v1350 = vmul.f32 %v1342, %v1320
  %v1351 = vmul.f32 %v1330, %v1317
  %v1352 = vmul.f32 %v1334, %v1313
  %v1353 = vmul.f32 %v1338, %v1309
  %v1354 = vmul.f32 %v1342, %v1321
  %v1355 = vmul.f32 %v1330, %v1318
  %v1356 = vmul.f32 %v1334, %v1314
  %v1357 = vmul.f32 %v1338, %v1310
  %v1358 = vmul.f32 %v1342, %v1322
  %v1359 = vmul.f32 %v1330, %v1319
  %v1360 = vmul.f32 %v1334, %v1315
  %v1361 = vmul.f32 %v1338, %v1311
  %v1362 = vmul.f32 %v1342, %v1323
  %1363 = vset.pattern.permute.xlu0 8
  %1364 = vperm.xlu0 %1363, %v282
  %v1365 = vpop.permute.xlu0 %1364
  %1367 = vset.pattern.permute.xlu0 8
  %1368 = vperm.xlu0 %1367, %v283
  %v1369 = vpop.permute.xlu0 %1368
  %1371 = vset.pattern.permute.xlu0 8
  %1372 = vperm.xlu0 %1371, %v284
  %v1373 = vpop.permute.xlu0 %1372
  %1375 = vset.pattern.permute.xlu0 8
  %1376 = vperm.xlu0 %1375, %v285
  %v1377 = vpop.permute.xlu0 %1376
  %v1379 = vmul.f32 %v1365, %v1347
  %v1380 = vmul.f32 %v1365, %v1348
  %v1381 = vmul.f32 %v1365, %v1349
  %v1382 = vmul.f32 %v1365, %v1350
  %v1383 = vmul.f32 %v1369, %v1351
  %v1384 = vmul.f32 %v1369, %v1352
  %v1385 = vmul.f32 %v1369, %v1353
  %v1386 = vmul.f32 %v1369, %v1354
  %v1387 = vmul.f32 %v1373, %v1355
  %v1388 = vmul.f32 %v1373, %v1356
  %v1389 = vmul.f32 %v1373, %v1357
  %v1390 = vmul.f32 %v1373, %v1358
  %v1391 = vmul.f32 %v1377, %v1359
  %v1392 = vmul.f32 %v1377, %v1360
  %v1393 = vmul.f32 %v1377, %v1361
  %v1394 = vmul.f32 %v1377, %v1362
  %v1395 = vadd.f32 %v1259, %v1379
  %v1396 = vadd.f32 %v1260, %v1380
  %v1397 = vadd.f32 %v1261, %v1381
  %v1398 = vadd.f32 %v1262, %v1382
  %v1399 = vadd.f32 %v1263, %v1383
  %v1400 = vadd.f32 %v1264, %v1384
  %v1401 = vadd.f32 %v1265, %v1385
  %v1402 = vadd.f32 %v1266, %v1386
  %v1403 = vadd.f32 %v1267, %v1387
  %v1404 = vadd.f32 %v1268, %v1388
  %v1405 = vadd.f32 %v1269, %v1389
  %v1406 = vadd.f32 %v1270, %v1390
  %v1407 = vadd.f32 %v1271, %v1391
  %v1408 = vadd.f32 %v1272, %v1392
  %v1409 = vadd.f32 %v1273, %v1393
  %v1410 = vadd.f32 %v1274, %v1394
  %1411 = vset.pattern.permute.xlu0 1
  %1412 = vperm.xlu0 %1411, %v38
  %v1413 = vpop.permute.xlu0 %1412
  %1415 = vset.pattern.permute.xlu0 1
  %1416 = vperm.xlu0 %1415, %v39
  %v1417 = vpop.permute.xlu0 %1416
  %1419 = vset.pattern.permute.xlu0 1
  %1420 = vperm.xlu0 %1419, %v40
  %v1421 = vpop.permute.xlu0 %1420
  %1423 = vset.pattern.permute.xlu0 1
  %1424 = vperm.xlu0 %1423, %v41
  %v1425 = vpop.permute.xlu0 %1424
  %v1427 = vadd.f32 %v1395, %v1413
  %v1428 = vadd.f32 %v1396, %v1413
  %v1429 = vadd.f32 %v1397, %v1413
  %v1430 = vadd.f32 %v1398, %v1413
  %v1431 = vadd.f32 %v1399, %v1417
  %v1432 = vadd.f32 %v1400, %v1417
  %v1433 = vadd.f32 %v1401, %v1417
  %v1434 = vadd.f32 %v1402, %v1417
  %v1435 = vadd.f32 %v1403, %v1421
  %v1436 = vadd.f32 %v1404, %v1421
  %v1437 = vadd.f32 %v1405, %v1421
  %v1438 = vadd.f32 %v1406, %v1421
  %v1439 = vadd.f32 %v1407, %v1425
  %v1440 = vadd.f32 %v1408, %v1425
  %v1441 = vadd.f32 %v1409, %v1425
  %v1442 = vadd.f32 %v1410, %v1425
  %v1443 = vmax.f32 %v1427, 0.0
  %v1444 = vmax.f32 %v1428, 0.0
  %v1445 = vmax.f32 %v1429, 0.0
  %v1446 = vmax.f32 %v1430, 0.0
  %v1447 = vmax.f32 %v1431, 0.0
  %v1448 = vmax.f32 %v1432, 0.0
  %v1449 = vmax.f32 %v1433, 0.0
  %v1450 = vmax.f32 %v1434, 0.0
  %v1451 = vmax.f32 %v1435, 0.0
  %v1452 = vmax.f32 %v1436, 0.0
  %v1453 = vmax.f32 %v1437, 0.0
  %v1454 = vmax.f32 %v1438, 0.0
  %v1455 = vmax.f32 %v1439, 0.0
  %v1456 = vmax.f32 %v1440, 0.0
  %v1457 = vmax.f32 %v1441, 0.0
  %v1458 = vmax.f32 %v1442, 0.0
  %s1459 = scalar_lea.vmem %s2, 32
  %v1460 = vld [vmem:[%s1459] sm:$0xff]
  %v1461 = vld [vmem:[%s1459 + $0x8] sm:$0xff]
  %v1462 = vld [vmem:[%s1459 + $0x10] sm:$0xff]
  %v1463 = vld [vmem:[%s1459 + $0x18] sm:$0xff]
  %1465 = vset.pattern.permute.xlu0 4
  %1466 = vperm.xlu0 %1465, %v1460
  %v1467 = vpop.permute.xlu0 %1466
  %1470 = vset.pattern.permute.xlu0 4
  %1471 = vperm.xlu0 %1470, %v1461
  %v1472 = vpop.permute.xlu0 %1471
  %1475 = vset.pattern.permute.xlu0 4
  %1476 = vperm.xlu0 %1475, %v1462
  %v1477 = vpop.permute.xlu0 %1476
  %1480 = vset.pattern.permute.xlu0 4
  %1481 = vperm.xlu0 %1480, %v1463
  %v1482 = vpop.permute.xlu0 %1481
  %v1484 = vmul.f32 %v1467, %v266
  %v1485 = vmul.f32 %v1467, %v267
  %v1486 = vmul.f32 %v1467, %v268
  %v1487 = vmul.f32 %v1467, %v269
  %v1488 = vmul.f32 %v1472, %v270
  %v1489 = vmul.f32 %v1472, %v271
  %v1490 = vmul.f32 %v1472, %v272
  %v1491 = vmul.f32 %v1472, %v273
  %v1492 = vmul.f32 %v1477, %v274
  %v1493 = vmul.f32 %v1477, %v275
  %v1494 = vmul.f32 %v1477, %v276
  %v1495 = vmul.f32 %v1477, %v277
  %v1496 = vmul.f32 %v1482, %v278
  %v1497 = vmul.f32 %v1482, %v279
  %v1498 = vmul.f32 %v1482, %v280
  %v1499 = vmul.f32 %v1482, %v281
  %1500 = vrot.lane.b32.xlu0 %v266, 34
  %v1501 = vpop.permute.xlu0 %1500
  %1502 = vrot.lane.b32.xlu0 %v270, 34
  %v1503 = vpop.permute.xlu0 %1502
  %1504 = vrot.lane.b32.xlu0 %v274, 34
  %v1505 = vpop.permute.xlu0 %1504
  %1506 = vrot.lane.b32.xlu0 %v278, 34
  %v1507 = vpop.permute.xlu0 %1506
  %1508 = vrot.lane.b32.xlu0 %v267, 34
  %v1509 = vpop.permute.xlu0 %1508
  %1510 = vrot.lane.b32.xlu0 %v271, 34
  %v1511 = vpop.permute.xlu0 %1510
  %1512 = vrot.lane.b32.xlu0 %v275, 34
  %v1513 = vpop.permute.xlu0 %1512
  %1514 = vrot.lane.b32.xlu0 %v279, 34
  %v1515 = vpop.permute.xlu0 %1514
  %1516 = vrot.lane.b32.xlu0 %v268, 34
  %v1517 = vpop.permute.xlu0 %1516
  %1518 = vrot.lane.b32.xlu0 %v272, 34
  %v1519 = vpop.permute.xlu0 %1518
  %1520 = vrot.lane.b32.xlu0 %v276, 34
  %v1521 = vpop.permute.xlu0 %1520
  %1522 = vrot.lane.b32.xlu0 %v280, 34
  %v1523 = vpop.permute.xlu0 %1522
  %1524 = vrot.lane.b32.xlu0 %v269, 34
  %v1525 = vpop.permute.xlu0 %1524
  %1526 = vrot.lane.b32.xlu0 %v273, 34
  %v1527 = vpop.permute.xlu0 %1526
  %1528 = vrot.lane.b32.xlu0 %v277, 34
  %v1529 = vpop.permute.xlu0 %1528
  %1530 = vrot.lane.b32.xlu0 %v281, 34
  %v1531 = vpop.permute.xlu0 %1530
  %vm1532 = vcmp.lt.s32.totalorder %v355, 34
  %v1533 = vsel %vm1532, %v1517, %v1525
  %v1534 = vsel %vm1532, %v1519, %v1527
  %v1535 = vsel %vm1532, %v1521, %v1529
  %v1536 = vsel %vm1532, %v1523, %v1531
  %v1537 = vsel %vm1532, %v1509, %v1517
  %v1538 = vsel %vm1532, %v1511, %v1519
  %v1539 = vsel %vm1532, %v1513, %v1521
  %v1540 = vsel %vm1532, %v1515, %v1523
  %v1541 = vsel %vm1532, %v1501, %v1509
  %v1542 = vsel %vm1532, %v1503, %v1511
  %v1543 = vsel %vm1532, %v1505, %v1513
  %v1544 = vsel %vm1532, %v1507, %v1515
  %v1545 = vsel %vm1532, %v1525, %v1501
  %v1546 = vsel %vm1532, %v1527, %v1503
  %v1547 = vsel %vm1532, %v1529, %v1505
  %v1548 = vsel %vm1532, %v1531, %v1507
  %s1549 = scalar_lea.vmem %s7, 64
  %v1550 = vld [vmem:[%s1549] ss:$8 sm:$0xf]
  %v1552 = vlaneseq
  %v1553 = vshrl.u32 %v1552, 7
  %v1554 = vsub.s32 0, %v1553
  %v1555 = vrot.slane %v1550, %v1554
  %v1556 = vlaneseq
  %v1557 = vshrl.u32 %v1556, 7
  %v1558 = vsub.s32 1, %v1557
  %v1559 = vrot.slane %v1550, %v1558
  %v1560 = vlaneseq
  %v1561 = vshrl.u32 %v1560, 7
  %v1562 = vsub.s32 2, %v1561
  %v1563 = vrot.slane %v1550, %v1562
  %v1564 = vlaneseq
  %v1565 = vshrl.u32 %v1564, 7
  %v1566 = vsub.s32 3, %v1565
  %v1567 = vrot.slane %v1550, %v1566
  %v1572 = vmul.f32 %v1555, %v1545
  %v1573 = vmul.f32 %v1559, %v1541
  %v1574 = vmul.f32 %v1563, %v1537
  %v1575 = vmul.f32 %v1567, %v1533
  %v1576 = vmul.f32 %v1555, %v1546
  %v1577 = vmul.f32 %v1559, %v1542
  %v1578 = vmul.f32 %v1563, %v1538
  %v1579 = vmul.f32 %v1567, %v1534
  %v1580 = vmul.f32 %v1555, %v1547
  %v1581 = vmul.f32 %v1559, %v1543
  %v1582 = vmul.f32 %v1563, %v1539
  %v1583 = vmul.f32 %v1567, %v1535
  %v1584 = vmul.f32 %v1555, %v1548
  %v1585 = vmul.f32 %v1559, %v1544
  %v1586 = vmul.f32 %v1563, %v1540
  %v1587 = vmul.f32 %v1567, %v1536
  %1588 = vset.pattern.permute.xlu0 0
  %1589 = vperm.xlu0 %1588, %v1460
  %v1590 = vpop.permute.xlu0 %1589
  %1592 = vset.pattern.permute.xlu0 0
  %1593 = vperm.xlu0 %1592, %v1461
  %v1594 = vpop.permute.xlu0 %1593
  %1596 = vset.pattern.permute.xlu0 0
  %1597 = vperm.xlu0 %1596, %v1462
  %v1598 = vpop.permute.xlu0 %1597
  %1600 = vset.pattern.permute.xlu0 0
  %1601 = vperm.xlu0 %1600, %v1463
  %v1602 = vpop.permute.xlu0 %1601
  %v1604 = vmul.f32 %v1590, %v1572
  %v1605 = vmul.f32 %v1590, %v1573
  %v1606 = vmul.f32 %v1590, %v1574
  %v1607 = vmul.f32 %v1590, %v1575
  %v1608 = vmul.f32 %v1594, %v1576
  %v1609 = vmul.f32 %v1594, %v1577
  %v1610 = vmul.f32 %v1594, %v1578
  %v1611 = vmul.f32 %v1594, %v1579
  %v1612 = vmul.f32 %v1598, %v1580
  %v1613 = vmul.f32 %v1598, %v1581
  %v1614 = vmul.f32 %v1598, %v1582
  %v1615 = vmul.f32 %v1598, %v1583
  %v1616 = vmul.f32 %v1602, %v1584
  %v1617 = vmul.f32 %v1602, %v1585
  %v1618 = vmul.f32 %v1602, %v1586
  %v1619 = vmul.f32 %v1602, %v1587
  %v1620 = vadd.f32 %v1484, %v1604
  %v1621 = vadd.f32 %v1485, %v1605
  %v1622 = vadd.f32 %v1486, %v1606
  %v1623 = vadd.f32 %v1487, %v1607
  %v1624 = vadd.f32 %v1488, %v1608
  %v1625 = vadd.f32 %v1489, %v1609
  %v1626 = vadd.f32 %v1490, %v1610
  %v1627 = vadd.f32 %v1491, %v1611
  %v1628 = vadd.f32 %v1492, %v1612
  %v1629 = vadd.f32 %v1493, %v1613
  %v1630 = vadd.f32 %v1494, %v1614
  %v1631 = vadd.f32 %v1495, %v1615
  %v1632 = vadd.f32 %v1496, %v1616
  %v1633 = vadd.f32 %v1497, %v1617
  %v1634 = vadd.f32 %v1498, %v1618
  %v1635 = vadd.f32 %v1499, %v1619
  %1636 = vrot.lane.b32.xlu0 %v266, 32
  %v1637 = vpop.permute.xlu0 %1636
  %1638 = vrot.lane.b32.xlu0 %v270, 32
  %v1639 = vpop.permute.xlu0 %1638
  %1640 = vrot.lane.b32.xlu0 %v274, 32
  %v1641 = vpop.permute.xlu0 %1640
  %1642 = vrot.lane.b32.xlu0 %v278, 32
  %v1643 = vpop.permute.xlu0 %1642
  %1644 = vrot.lane.b32.xlu0 %v267, 32
  %v1645 = vpop.permute.xlu0 %1644
  %1646 = vrot.lane.b32.xlu0 %v271, 32
  %v1647 = vpop.permute.xlu0 %1646
  %1648 = vrot.lane.b32.xlu0 %v275, 32
  %v1649 = vpop.permute.xlu0 %1648
  %1650 = vrot.lane.b32.xlu0 %v279, 32
  %v1651 = vpop.permute.xlu0 %1650
  %1652 = vrot.lane.b32.xlu0 %v268, 32
  %v1653 = vpop.permute.xlu0 %1652
  %1654 = vrot.lane.b32.xlu0 %v272, 32
  %v1655 = vpop.permute.xlu0 %1654
  %1656 = vrot.lane.b32.xlu0 %v276, 32
  %v1657 = vpop.permute.xlu0 %1656
  %1658 = vrot.lane.b32.xlu0 %v280, 32
  %v1659 = vpop.permute.xlu0 %1658
  %1660 = vrot.lane.b32.xlu0 %v269, 32
  %v1661 = vpop.permute.xlu0 %1660
  %1662 = vrot.lane.b32.xlu0 %v273, 32
  %v1663 = vpop.permute.xlu0 %1662
  %1664 = vrot.lane.b32.xlu0 %v277, 32
  %v1665 = vpop.permute.xlu0 %1664
  %1666 = vrot.lane.b32.xlu0 %v281, 32
  %v1667 = vpop.permute.xlu0 %1666
  %vm1668 = vcmp.lt.s32.totalorder %v355, 32
  %v1669 = vsel %vm1668, %v1653, %v1661
  %v1670 = vsel %vm1668, %v1655, %v1663
  %v1671 = vsel %vm1668, %v1657, %v1665
  %v1672 = vsel %vm1668, %v1659, %v1667
  %v1673 = vsel %vm1668, %v1645, %v1653
  %v1674 = vsel %vm1668, %v1647, %v1655
  %v1675 = vsel %vm1668, %v1649, %v1657
  %v1676 = vsel %vm1668, %v1651, %v1659
  %v1677 = vsel %vm1668, %v1637, %v1645
  %v1678 = vsel %vm1668, %v1639, %v1647
  %v1679 = vsel %vm1668, %v1641, %v1649
  %v1680 = vsel %vm1668, %v1643, %v1651
  %v1681 = vsel %vm1668, %v1661, %v1637
  %v1682 = vsel %vm1668, %v1663, %v1639
  %v1683 = vsel %vm1668, %v1665, %v1641
  %v1684 = vsel %vm1668, %v1667, %v1643
  %s1685 = scalar_lea.vmem %s1549, 1
  %v1686 = vld [vmem:[%s1685] ss:$8 sm:$0xf]
  %v1688 = vlaneseq
  %v1689 = vshrl.u32 %v1688, 7
  %v1690 = vsub.s32 0, %v1689
  %v1691 = vrot.slane %v1686, %v1690
  %v1692 = vlaneseq
  %v1693 = vshrl.u32 %v1692, 7
  %v1694 = vsub.s32 1, %v1693
  %v1695 = vrot.slane %v1686, %v1694
  %v1696 = vlaneseq
  %v1697 = vshrl.u32 %v1696, 7
  %v1698 = vsub.s32 2, %v1697
  %v1699 = vrot.slane %v1686, %v1698
  %v1700 = vlaneseq
  %v1701 = vshrl.u32 %v1700, 7
  %v1702 = vsub.s32 3, %v1701
  %v1703 = vrot.slane %v1686, %v1702
  %v1708 = vmul.f32 %v1691, %v1681
  %v1709 = vmul.f32 %v1695, %v1677
  %v1710 = vmul.f32 %v1699, %v1673
  %v1711 = vmul.f32 %v1703, %v1669
  %v1712 = vmul.f32 %v1691, %v1682
  %v1713 = vmul.f32 %v1695, %v1678
  %v1714 = vmul.f32 %v1699, %v1674
  %v1715 = vmul.f32 %v1703, %v1670
  %v1716 = vmul.f32 %v1691, %v1683
  %v1717 = vmul.f32 %v1695, %v1679
  %v1718 = vmul.f32 %v1699, %v1675
  %v1719 = vmul.f32 %v1703, %v1671
  %v1720 = vmul.f32 %v1691, %v1684
  %v1721 = vmul.f32 %v1695, %v1680
  %v1722 = vmul.f32 %v1699, %v1676
  %v1723 = vmul.f32 %v1703, %v1672
  %1724 = vset.pattern.permute.xlu0 1
  %1725 = vperm.xlu0 %1724, %v1460
  %v1726 = vpop.permute.xlu0 %1725
  %1728 = vset.pattern.permute.xlu0 1
  %1729 = vperm.xlu0 %1728, %v1461
  %v1730 = vpop.permute.xlu0 %1729
  %1732 = vset.pattern.permute.xlu0 1
  %1733 = vperm.xlu0 %1732, %v1462
  %v1734 = vpop.permute.xlu0 %1733
  %1736 = vset.pattern.permute.xlu0 1
  %1737 = vperm.xlu0 %1736, %v1463
  %v1738 = vpop.permute.xlu0 %1737
  %v1740 = vmul.f32 %v1726, %v1708
  %v1741 = vmul.f32 %v1726, %v1709
  %v1742 = vmul.f32 %v1726, %v1710
  %v1743 = vmul.f32 %v1726, %v1711
  %v1744 = vmul.f32 %v1730, %v1712
  %v1745 = vmul.f32 %v1730, %v1713
  %v1746 = vmul.f32 %v1730, %v1714
  %v1747 = vmul.f32 %v1730, %v1715
  %v1748 = vmul.f32 %v1734, %v1716
  %v1749 = vmul.f32 %v1734, %v1717
  %v1750 = vmul.f32 %v1734, %v1718
  %v1751 = vmul.f32 %v1734, %v1719
  %v1752 = vmul.f32 %v1738, %v1720
  %v1753 = vmul.f32 %v1738, %v1721
  %v1754 = vmul.f32 %v1738, %v1722
  %v1755 = vmul.f32 %v1738, %v1723
  %v1756 = vadd.f32 %v1620, %v1740
  %v1757 = vadd.f32 %v1621, %v1741
  %v1758 = vadd.f32 %v1622, %v1742
  %v1759 = vadd.f32 %v1623, %v1743
  %v1760 = vadd.f32 %v1624, %v1744
  %v1761 = vadd.f32 %v1625, %v1745
  %v1762 = vadd.f32 %v1626, %v1746
  %v1763 = vadd.f32 %v1627, %v1747
  %v1764 = vadd.f32 %v1628, %v1748
  %v1765 = vadd.f32 %v1629, %v1749
  %v1766 = vadd.f32 %v1630, %v1750
  %v1767 = vadd.f32 %v1631, %v1751
  %v1768 = vadd.f32 %v1632, %v1752
  %v1769 = vadd.f32 %v1633, %v1753
  %v1770 = vadd.f32 %v1634, %v1754
  %v1771 = vadd.f32 %v1635, %v1755
  %1772 = vrot.lane.b32.xlu0 %v266, 30
  %v1773 = vpop.permute.xlu0 %1772
  %1774 = vrot.lane.b32.xlu0 %v270, 30
  %v1775 = vpop.permute.xlu0 %1774
  %1776 = vrot.lane.b32.xlu0 %v274, 30
  %v1777 = vpop.permute.xlu0 %1776
  %1778 = vrot.lane.b32.xlu0 %v278, 30
  %v1779 = vpop.permute.xlu0 %1778
  %1780 = vrot.lane.b32.xlu0 %v267, 30
  %v1781 = vpop.permute.xlu0 %1780
  %1782 = vrot.lane.b32.xlu0 %v271, 30
  %v1783 = vpop.permute.xlu0 %1782
  %1784 = vrot.lane.b32.xlu0 %v275, 30
  %v1785 = vpop.permute.xlu0 %1784
  %1786 = vrot.lane.b32.xlu0 %v279, 30
  %v1787 = vpop.permute.xlu0 %1786
  %1788 = vrot.lane.b32.xlu0 %v268, 30
  %v1789 = vpop.permute.xlu0 %1788
  %1790 = vrot.lane.b32.xlu0 %v272, 30
  %v1791 = vpop.permute.xlu0 %1790
  %1792 = vrot.lane.b32.xlu0 %v276, 30
  %v1793 = vpop.permute.xlu0 %1792
  %1794 = vrot.lane.b32.xlu0 %v280, 30
  %v1795 = vpop.permute.xlu0 %1794
  %1796 = vrot.lane.b32.xlu0 %v269, 30
  %v1797 = vpop.permute.xlu0 %1796
  %1798 = vrot.lane.b32.xlu0 %v273, 30
  %v1799 = vpop.permute.xlu0 %1798
  %1800 = vrot.lane.b32.xlu0 %v277, 30
  %v1801 = vpop.permute.xlu0 %1800
  %1802 = vrot.lane.b32.xlu0 %v281, 30
  %v1803 = vpop.permute.xlu0 %1802
  %vm1804 = vcmp.lt.s32.totalorder %v355, 30
  %v1805 = vsel %vm1804, %v1789, %v1797
  %v1806 = vsel %vm1804, %v1791, %v1799
  %v1807 = vsel %vm1804, %v1793, %v1801
  %v1808 = vsel %vm1804, %v1795, %v1803
  %v1809 = vsel %vm1804, %v1781, %v1789
  %v1810 = vsel %vm1804, %v1783, %v1791
  %v1811 = vsel %vm1804, %v1785, %v1793
  %v1812 = vsel %vm1804, %v1787, %v1795
  %v1813 = vsel %vm1804, %v1773, %v1781
  %v1814 = vsel %vm1804, %v1775, %v1783
  %v1815 = vsel %vm1804, %v1777, %v1785
  %v1816 = vsel %vm1804, %v1779, %v1787
  %v1817 = vsel %vm1804, %v1797, %v1773
  %v1818 = vsel %vm1804, %v1799, %v1775
  %v1819 = vsel %vm1804, %v1801, %v1777
  %v1820 = vsel %vm1804, %v1803, %v1779
  %s1821 = scalar_lea.vmem %s1549, 2
  %v1822 = vld [vmem:[%s1821] ss:$8 sm:$0xf]
  %v1824 = vlaneseq
  %v1825 = vshrl.u32 %v1824, 7
  %v1826 = vsub.s32 0, %v1825
  %v1827 = vrot.slane %v1822, %v1826
  %v1828 = vlaneseq
  %v1829 = vshrl.u32 %v1828, 7
  %v1830 = vsub.s32 1, %v1829
  %v1831 = vrot.slane %v1822, %v1830
  %v1832 = vlaneseq
  %v1833 = vshrl.u32 %v1832, 7
  %v1834 = vsub.s32 2, %v1833
  %v1835 = vrot.slane %v1822, %v1834
  %v1836 = vlaneseq
  %v1837 = vshrl.u32 %v1836, 7
  %v1838 = vsub.s32 3, %v1837
  %v1839 = vrot.slane %v1822, %v1838
  %v1844 = vmul.f32 %v1827, %v1817
  %v1845 = vmul.f32 %v1831, %v1813
  %v1846 = vmul.f32 %v1835, %v1809
  %v1847 = vmul.f32 %v1839, %v1805
  %v1848 = vmul.f32 %v1827, %v1818
  %v1849 = vmul.f32 %v1831, %v1814
  %v1850 = vmul.f32 %v1835, %v1810
  %v1851 = vmul.f32 %v1839, %v1806
  %v1852 = vmul.f32 %v1827, %v1819
  %v1853 = vmul.f32 %v1831, %v1815
  %v1854 = vmul.f32 %v1835, %v1811
  %v1855 = vmul.f32 %v1839, %v1807
  %v1856 = vmul.f32 %v1827, %v1820
  %v1857 = vmul.f32 %v1831, %v1816
  %v1858 = vmul.f32 %v1835, %v1812
  %v1859 = vmul.f32 %v1839, %v1808
  %1860 = vset.pattern.permute.xlu0 2
  %1861 = vperm.xlu0 %1860, %v1460
  %v1862 = vpop.permute.xlu0 %1861
  %1864 = vset.pattern.permute.xlu0 2
  %1865 = vperm.xlu0 %1864, %v1461
  %v1866 = vpop.permute.xlu0 %1865
  %1868 = vset.pattern.permute.xlu0 2
  %1869 = vperm.xlu0 %1868, %v1462
  %v1870 = vpop.permute.xlu0 %1869
  %1872 = vset.pattern.permute.xlu0 2
  %1873 = vperm.xlu0 %1872, %v1463
  %v1874 = vpop.permute.xlu0 %1873
  %v1876 = vmul.f32 %v1862, %v1844
  %v1877 = vmul.f32 %v1862, %v1845
  %v1878 = vmul.f32 %v1862, %v1846
  %v1879 = vmul.f32 %v1862, %v1847
  %v1880 = vmul.f32 %v1866, %v1848
  %v1881 = vmul.f32 %v1866, %v1849
  %v1882 = vmul.f32 %v1866, %v1850
  %v1883 = vmul.f32 %v1866, %v1851
  %v1884 = vmul.f32 %v1870, %v1852
  %v1885 = vmul.f32 %v1870, %v1853
  %v1886 = vmul.f32 %v1870, %v1854
  %v1887 = vmul.f32 %v1870, %v1855
  %v1888 = vmul.f32 %v1874, %v1856
  %v1889 = vmul.f32 %v1874, %v1857
  %v1890 = vmul.f32 %v1874, %v1858
  %v1891 = vmul.f32 %v1874, %v1859
  %v1892 = vadd.f32 %v1756, %v1876
  %v1893 = vadd.f32 %v1757, %v1877
  %v1894 = vadd.f32 %v1758, %v1878
  %v1895 = vadd.f32 %v1759, %v1879
  %v1896 = vadd.f32 %v1760, %v1880
  %v1897 = vadd.f32 %v1761, %v1881
  %v1898 = vadd.f32 %v1762, %v1882
  %v1899 = vadd.f32 %v1763, %v1883
  %v1900 = vadd.f32 %v1764, %v1884
  %v1901 = vadd.f32 %v1765, %v1885
  %v1902 = vadd.f32 %v1766, %v1886
  %v1903 = vadd.f32 %v1767, %v1887
  %v1904 = vadd.f32 %v1768, %v1888
  %v1905 = vadd.f32 %v1769, %v1889
  %v1906 = vadd.f32 %v1770, %v1890
  %v1907 = vadd.f32 %v1771, %v1891
  %1908 = vrot.lane.b32.xlu0 %v266, 2
  %v1909 = vpop.permute.xlu0 %1908
  %1910 = vrot.lane.b32.xlu0 %v270, 2
  %v1911 = vpop.permute.xlu0 %1910
  %1912 = vrot.lane.b32.xlu0 %v274, 2
  %v1913 = vpop.permute.xlu0 %1912
  %1914 = vrot.lane.b32.xlu0 %v278, 2
  %v1915 = vpop.permute.xlu0 %1914
  %1916 = vrot.lane.b32.xlu0 %v267, 2
  %v1917 = vpop.permute.xlu0 %1916
  %1918 = vrot.lane.b32.xlu0 %v271, 2
  %v1919 = vpop.permute.xlu0 %1918
  %1920 = vrot.lane.b32.xlu0 %v275, 2
  %v1921 = vpop.permute.xlu0 %1920
  %1922 = vrot.lane.b32.xlu0 %v279, 2
  %v1923 = vpop.permute.xlu0 %1922
  %1924 = vrot.lane.b32.xlu0 %v268, 2
  %v1925 = vpop.permute.xlu0 %1924
  %1926 = vrot.lane.b32.xlu0 %v272, 2
  %v1927 = vpop.permute.xlu0 %1926
  %1928 = vrot.lane.b32.xlu0 %v276, 2
  %v1929 = vpop.permute.xlu0 %1928
  %1930 = vrot.lane.b32.xlu0 %v280, 2
  %v1931 = vpop.permute.xlu0 %1930
  %1932 = vrot.lane.b32.xlu0 %v269, 2
  %v1933 = vpop.permute.xlu0 %1932
  %1934 = vrot.lane.b32.xlu0 %v273, 2
  %v1935 = vpop.permute.xlu0 %1934
  %1936 = vrot.lane.b32.xlu0 %v277, 2
  %v1937 = vpop.permute.xlu0 %1936
  %1938 = vrot.lane.b32.xlu0 %v281, 2
  %v1939 = vpop.permute.xlu0 %1938
  %vm1940 = vcmp.lt.s32.totalorder %v355, 2
  %v1941 = vsel %vm1940, %v1925, %v1933
  %v1942 = vsel %vm1940, %v1927, %v1935
  %v1943 = vsel %vm1940, %v1929, %v1937
  %v1944 = vsel %vm1940, %v1931, %v1939
  %v1945 = vsel %vm1940, %v1917, %v1925
  %v1946 = vsel %vm1940, %v1919, %v1927
  %v1947 = vsel %vm1940, %v1921, %v1929
  %v1948 = vsel %vm1940, %v1923, %v1931
  %v1949 = vsel %vm1940, %v1909, %v1917
  %v1950 = vsel %vm1940, %v1911, %v1919
  %v1951 = vsel %vm1940, %v1913, %v1921
  %v1952 = vsel %vm1940, %v1915, %v1923
  %v1953 = vsel %vm1940, %v1933, %v1909
  %v1954 = vsel %vm1940, %v1935, %v1911
  %v1955 = vsel %vm1940, %v1937, %v1913
  %v1956 = vsel %vm1940, %v1939, %v1915
  %s1957 = scalar_lea.vmem %s1549, 3
  %v1958 = vld [vmem:[%s1957] ss:$8 sm:$0xf]
  %v1960 = vlaneseq
  %v1961 = vshrl.u32 %v1960, 7
  %v1962 = vsub.s32 0, %v1961
  %v1963 = vrot.slane %v1958, %v1962
  %v1964 = vlaneseq
  %v1965 = vshrl.u32 %v1964, 7
  %v1966 = vsub.s32 1, %v1965
  %v1967 = vrot.slane %v1958, %v1966
  %v1968 = vlaneseq
  %v1969 = vshrl.u32 %v1968, 7
  %v1970 = vsub.s32 2, %v1969
  %v1971 = vrot.slane %v1958, %v1970
  %v1972 = vlaneseq
  %v1973 = vshrl.u32 %v1972, 7
  %v1974 = vsub.s32 3, %v1973
  %v1975 = vrot.slane %v1958, %v1974
  %v1980 = vmul.f32 %v1963, %v1953
  %v1981 = vmul.f32 %v1967, %v1949
  %v1982 = vmul.f32 %v1971, %v1945
  %v1983 = vmul.f32 %v1975, %v1941
  %v1984 = vmul.f32 %v1963, %v1954
  %v1985 = vmul.f32 %v1967, %v1950
  %v1986 = vmul.f32 %v1971, %v1946
  %v1987 = vmul.f32 %v1975, %v1942
  %v1988 = vmul.f32 %v1963, %v1955
  %v1989 = vmul.f32 %v1967, %v1951
  %v1990 = vmul.f32 %v1971, %v1947
  %v1991 = vmul.f32 %v1975, %v1943
  %v1992 = vmul.f32 %v1963, %v1956
  %v1993 = vmul.f32 %v1967, %v1952
  %v1994 = vmul.f32 %v1971, %v1948
  %v1995 = vmul.f32 %v1975, %v1944
  %1996 = vset.pattern.permute.xlu0 3
  %1997 = vperm.xlu0 %1996, %v1460
  %v1998 = vpop.permute.xlu0 %1997
  %2000 = vset.pattern.permute.xlu0 3
  %2001 = vperm.xlu0 %2000, %v1461
  %v2002 = vpop.permute.xlu0 %2001
  %2004 = vset.pattern.permute.xlu0 3
  %2005 = vperm.xlu0 %2004, %v1462
  %v2006 = vpop.permute.xlu0 %2005
  %2008 = vset.pattern.permute.xlu0 3
  %2009 = vperm.xlu0 %2008, %v1463
  %v2010 = vpop.permute.xlu0 %2009
  %v2012 = vmul.f32 %v1998, %v1980
  %v2013 = vmul.f32 %v1998, %v1981
  %v2014 = vmul.f32 %v1998, %v1982
  %v2015 = vmul.f32 %v1998, %v1983
  %v2016 = vmul.f32 %v2002, %v1984
  %v2017 = vmul.f32 %v2002, %v1985
  %v2018 = vmul.f32 %v2002, %v1986
  %v2019 = vmul.f32 %v2002, %v1987
  %v2020 = vmul.f32 %v2006, %v1988
  %v2021 = vmul.f32 %v2006, %v1989
  %v2022 = vmul.f32 %v2006, %v1990
  %v2023 = vmul.f32 %v2006, %v1991
  %v2024 = vmul.f32 %v2010, %v1992
  %v2025 = vmul.f32 %v2010, %v1993
  %v2026 = vmul.f32 %v2010, %v1994
  %v2027 = vmul.f32 %v2010, %v1995
  %v2028 = vadd.f32 %v1892, %v2012
  %v2029 = vadd.f32 %v1893, %v2013
  %v2030 = vadd.f32 %v1894, %v2014
  %v2031 = vadd.f32 %v1895, %v2015
  %v2032 = vadd.f32 %v1896, %v2016
  %v2033 = vadd.f32 %v1897, %v2017
  %v2034 = vadd.f32 %v1898, %v2018
  %v2035 = vadd.f32 %v1899, %v2019
  %v2036 = vadd.f32 %v1900, %v2020
  %v2037 = vadd.f32 %v1901, %v2021
  %v2038 = vadd.f32 %v1902, %v2022
  %v2039 = vadd.f32 %v1903, %v2023
  %v2040 = vadd.f32 %v1904, %v2024
  %v2041 = vadd.f32 %v1905, %v2025
  %v2042 = vadd.f32 %v1906, %v2026
  %v2043 = vadd.f32 %v1907, %v2027
  %2044 = vrot.lane.b32.xlu0 %v266, 126
  %v2045 = vpop.permute.xlu0 %2044
  %2046 = vrot.lane.b32.xlu0 %v270, 126
  %v2047 = vpop.permute.xlu0 %2046
  %2048 = vrot.lane.b32.xlu0 %v274, 126
  %v2049 = vpop.permute.xlu0 %2048
  %2050 = vrot.lane.b32.xlu0 %v278, 126
  %v2051 = vpop.permute.xlu0 %2050
  %2052 = vrot.lane.b32.xlu0 %v267, 126
  %v2053 = vpop.permute.xlu0 %2052
  %2054 = vrot.lane.b32.xlu0 %v271, 126
  %v2055 = vpop.permute.xlu0 %2054
  %2056 = vrot.lane.b32.xlu0 %v275, 126
  %v2057 = vpop.permute.xlu0 %2056
  %2058 = vrot.lane.b32.xlu0 %v279, 126
  %v2059 = vpop.permute.xlu0 %2058
  %2060 = vrot.lane.b32.xlu0 %v268, 126
  %v2061 = vpop.permute.xlu0 %2060
  %2062 = vrot.lane.b32.xlu0 %v272, 126
  %v2063 = vpop.permute.xlu0 %2062
  %2064 = vrot.lane.b32.xlu0 %v276, 126
  %v2065 = vpop.permute.xlu0 %2064
  %2066 = vrot.lane.b32.xlu0 %v280, 126
  %v2067 = vpop.permute.xlu0 %2066
  %2068 = vrot.lane.b32.xlu0 %v269, 126
  %v2069 = vpop.permute.xlu0 %2068
  %2070 = vrot.lane.b32.xlu0 %v273, 126
  %v2071 = vpop.permute.xlu0 %2070
  %2072 = vrot.lane.b32.xlu0 %v277, 126
  %v2073 = vpop.permute.xlu0 %2072
  %2074 = vrot.lane.b32.xlu0 %v281, 126
  %v2075 = vpop.permute.xlu0 %2074
  %vm2076 = vcmp.lt.s32.totalorder %v355, 126
  %v2077 = vsel %vm2076, %v2061, %v2069
  %v2078 = vsel %vm2076, %v2063, %v2071
  %v2079 = vsel %vm2076, %v2065, %v2073
  %v2080 = vsel %vm2076, %v2067, %v2075
  %v2081 = vsel %vm2076, %v2053, %v2061
  %v2082 = vsel %vm2076, %v2055, %v2063
  %v2083 = vsel %vm2076, %v2057, %v2065
  %v2084 = vsel %vm2076, %v2059, %v2067
  %v2085 = vsel %vm2076, %v2045, %v2053
  %v2086 = vsel %vm2076, %v2047, %v2055
  %v2087 = vsel %vm2076, %v2049, %v2057
  %v2088 = vsel %vm2076, %v2051, %v2059
  %v2089 = vsel %vm2076, %v2069, %v2045
  %v2090 = vsel %vm2076, %v2071, %v2047
  %v2091 = vsel %vm2076, %v2073, %v2049
  %v2092 = vsel %vm2076, %v2075, %v2051
  %s2093 = scalar_lea.vmem %s1549, 5
  %v2094 = vld [vmem:[%s2093] ss:$8 sm:$0xf]
  %v2096 = vlaneseq
  %v2097 = vshrl.u32 %v2096, 7
  %v2098 = vsub.s32 0, %v2097
  %v2099 = vrot.slane %v2094, %v2098
  %v2100 = vlaneseq
  %v2101 = vshrl.u32 %v2100, 7
  %v2102 = vsub.s32 1, %v2101
  %v2103 = vrot.slane %v2094, %v2102
  %v2104 = vlaneseq
  %v2105 = vshrl.u32 %v2104, 7
  %v2106 = vsub.s32 2, %v2105
  %v2107 = vrot.slane %v2094, %v2106
  %v2108 = vlaneseq
  %v2109 = vshrl.u32 %v2108, 7
  %v2110 = vsub.s32 3, %v2109
  %v2111 = vrot.slane %v2094, %v2110
  %v2116 = vmul.f32 %v2099, %v2085
  %v2117 = vmul.f32 %v2103, %v2081
  %v2118 = vmul.f32 %v2107, %v2077
  %v2119 = vmul.f32 %v2111, %v2089
  %v2120 = vmul.f32 %v2099, %v2086
  %v2121 = vmul.f32 %v2103, %v2082
  %v2122 = vmul.f32 %v2107, %v2078
  %v2123 = vmul.f32 %v2111, %v2090
  %v2124 = vmul.f32 %v2099, %v2087
  %v2125 = vmul.f32 %v2103, %v2083
  %v2126 = vmul.f32 %v2107, %v2079
  %v2127 = vmul.f32 %v2111, %v2091
  %v2128 = vmul.f32 %v2099, %v2088
  %v2129 = vmul.f32 %v2103, %v2084
  %v2130 = vmul.f32 %v2107, %v2080
  %v2131 = vmul.f32 %v2111, %v2092
  %2132 = vset.pattern.permute.xlu0 5
  %2133 = vperm.xlu0 %2132, %v1460
  %v2134 = vpop.permute.xlu0 %2133
  %2136 = vset.pattern.permute.xlu0 5
  %2137 = vperm.xlu0 %2136, %v1461
  %v2138 = vpop.permute.xlu0 %2137
  %2140 = vset.pattern.permute.xlu0 5
  %2141 = vperm.xlu0 %2140, %v1462
  %v2142 = vpop.permute.xlu0 %2141
  %2144 = vset.pattern.permute.xlu0 5
  %2145 = vperm.xlu0 %2144, %v1463
  %v2146 = vpop.permute.xlu0 %2145
  %v2148 = vmul.f32 %v2134, %v2116
  %v2149 = vmul.f32 %v2134, %v2117
  %v2150 = vmul.f32 %v2134, %v2118
  %v2151 = vmul.f32 %v2134, %v2119
  %v2152 = vmul.f32 %v2138, %v2120
  %v2153 = vmul.f32 %v2138, %v2121
  %v2154 = vmul.f32 %v2138, %v2122
  %v2155 = vmul.f32 %v2138, %v2123
  %v2156 = vmul.f32 %v2142, %v2124
  %v2157 = vmul.f32 %v2142, %v2125
  %v2158 = vmul.f32 %v2142, %v2126
  %v2159 = vmul.f32 %v2142, %v2127
  %v2160 = vmul.f32 %v2146, %v2128
  %v2161 = vmul.f32 %v2146, %v2129
  %v2162 = vmul.f32 %v2146, %v2130
  %v2163 = vmul.f32 %v2146, %v2131
  %v2164 = vadd.f32 %v2028, %v2148
  %v2165 = vadd.f32 %v2029, %v2149
  %v2166 = vadd.f32 %v2030, %v2150
  %v2167 = vadd.f32 %v2031, %v2151
  %v2168 = vadd.f32 %v2032, %v2152
  %v2169 = vadd.f32 %v2033, %v2153
  %v2170 = vadd.f32 %v2034, %v2154
  %v2171 = vadd.f32 %v2035, %v2155
  %v2172 = vadd.f32 %v2036, %v2156
  %v2173 = vadd.f32 %v2037, %v2157
  %v2174 = vadd.f32 %v2038, %v2158
  %v2175 = vadd.f32 %v2039, %v2159
  %v2176 = vadd.f32 %v2040, %v2160
  %v2177 = vadd.f32 %v2041, %v2161
  %v2178 = vadd.f32 %v2042, %v2162
  %v2179 = vadd.f32 %v2043, %v2163
  %2180 = vrot.lane.b32.xlu0 %v266, 98
  %v2181 = vpop.permute.xlu0 %2180
  %2182 = vrot.lane.b32.xlu0 %v270, 98
  %v2183 = vpop.permute.xlu0 %2182
  %2184 = vrot.lane.b32.xlu0 %v274, 98
  %v2185 = vpop.permute.xlu0 %2184
  %2186 = vrot.lane.b32.xlu0 %v278, 98
  %v2187 = vpop.permute.xlu0 %2186
  %2188 = vrot.lane.b32.xlu0 %v267, 98
  %v2189 = vpop.permute.xlu0 %2188
  %2190 = vrot.lane.b32.xlu0 %v271, 98
  %v2191 = vpop.permute.xlu0 %2190
  %2192 = vrot.lane.b32.xlu0 %v275, 98
  %v2193 = vpop.permute.xlu0 %2192
  %2194 = vrot.lane.b32.xlu0 %v279, 98
  %v2195 = vpop.permute.xlu0 %2194
  %2196 = vrot.lane.b32.xlu0 %v268, 98
  %v2197 = vpop.permute.xlu0 %2196
  %2198 = vrot.lane.b32.xlu0 %v272, 98
  %v2199 = vpop.permute.xlu0 %2198
  %2200 = vrot.lane.b32.xlu0 %v276, 98
  %v2201 = vpop.permute.xlu0 %2200
  %2202 = vrot.lane.b32.xlu0 %v280, 98
  %v2203 = vpop.permute.xlu0 %2202
  %2204 = vrot.lane.b32.xlu0 %v269, 98
  %v2205 = vpop.permute.xlu0 %2204
  %2206 = vrot.lane.b32.xlu0 %v273, 98
  %v2207 = vpop.permute.xlu0 %2206
  %2208 = vrot.lane.b32.xlu0 %v277, 98
  %v2209 = vpop.permute.xlu0 %2208
  %2210 = vrot.lane.b32.xlu0 %v281, 98
  %v2211 = vpop.permute.xlu0 %2210
  %vm2212 = vcmp.lt.s32.totalorder %v355, 98
  %v2213 = vsel %vm2212, %v2197, %v2205
  %v2214 = vsel %vm2212, %v2199, %v2207
  %v2215 = vsel %vm2212, %v2201, %v2209
  %v2216 = vsel %vm2212, %v2203, %v2211
  %v2217 = vsel %vm2212, %v2189, %v2197
  %v2218 = vsel %vm2212, %v2191, %v2199
  %v2219 = vsel %vm2212, %v2193, %v2201
  %v2220 = vsel %vm2212, %v2195, %v2203
  %v2221 = vsel %vm2212, %v2181, %v2189
  %v2222 = vsel %vm2212, %v2183, %v2191
  %v2223 = vsel %vm2212, %v2185, %v2193
  %v2224 = vsel %vm2212, %v2187, %v2195
  %v2225 = vsel %vm2212, %v2205, %v2181
  %v2226 = vsel %vm2212, %v2207, %v2183
  %v2227 = vsel %vm2212, %v2209, %v2185
  %v2228 = vsel %vm2212, %v2211, %v2187
  %s2229 = scalar_lea.vmem %s1549, 6
  %v2230 = vld [vmem:[%s2229] ss:$8 sm:$0xf]
  %v2232 = vlaneseq
  %v2233 = vshrl.u32 %v2232, 7
  %v2234 = vsub.s32 0, %v2233
  %v2235 = vrot.slane %v2230, %v2234
  %v2236 = vlaneseq
  %v2237 = vshrl.u32 %v2236, 7
  %v2238 = vsub.s32 1, %v2237
  %v2239 = vrot.slane %v2230, %v2238
  %v2240 = vlaneseq
  %v2241 = vshrl.u32 %v2240, 7
  %v2242 = vsub.s32 2, %v2241
  %v2243 = vrot.slane %v2230, %v2242
  %v2244 = vlaneseq
  %v2245 = vshrl.u32 %v2244, 7
  %v2246 = vsub.s32 3, %v2245
  %v2247 = vrot.slane %v2230, %v2246
  %v2252 = vmul.f32 %v2235, %v2221
  %v2253 = vmul.f32 %v2239, %v2217
  %v2254 = vmul.f32 %v2243, %v2213
  %v2255 = vmul.f32 %v2247, %v2225
  %v2256 = vmul.f32 %v2235, %v2222
  %v2257 = vmul.f32 %v2239, %v2218
  %v2258 = vmul.f32 %v2243, %v2214
  %v2259 = vmul.f32 %v2247, %v2226
  %v2260 = vmul.f32 %v2235, %v2223
  %v2261 = vmul.f32 %v2239, %v2219
  %v2262 = vmul.f32 %v2243, %v2215
  %v2263 = vmul.f32 %v2247, %v2227
  %v2264 = vmul.f32 %v2235, %v2224
  %v2265 = vmul.f32 %v2239, %v2220
  %v2266 = vmul.f32 %v2243, %v2216
  %v2267 = vmul.f32 %v2247, %v2228
  %2268 = vset.pattern.permute.xlu0 6
  %2269 = vperm.xlu0 %2268, %v1460
  %v2270 = vpop.permute.xlu0 %2269
  %2272 = vset.pattern.permute.xlu0 6
  %2273 = vperm.xlu0 %2272, %v1461
  %v2274 = vpop.permute.xlu0 %2273
  %2276 = vset.pattern.permute.xlu0 6
  %2277 = vperm.xlu0 %2276, %v1462
  %v2278 = vpop.permute.xlu0 %2277
  %2280 = vset.pattern.permute.xlu0 6
  %2281 = vperm.xlu0 %2280, %v1463
  %v2282 = vpop.permute.xlu0 %2281
  %v2284 = vmul.f32 %v2270, %v2252
  %v2285 = vmul.f32 %v2270, %v2253
  %v2286 = vmul.f32 %v2270, %v2254
  %v2287 = vmul.f32 %v2270, %v2255
  %v2288 = vmul.f32 %v2274, %v2256
  %v2289 = vmul.f32 %v2274, %v2257
  %v2290 = vmul.f32 %v2274, %v2258
  %v2291 = vmul.f32 %v2274, %v2259
  %v2292 = vmul.f32 %v2278, %v2260
  %v2293 = vmul.f32 %v2278, %v2261
  %v2294 = vmul.f32 %v2278, %v2262
  %v2295 = vmul.f32 %v2278, %v2263
  %v2296 = vmul.f32 %v2282, %v2264
  %v2297 = vmul.f32 %v2282, %v2265
  %v2298 = vmul.f32 %v2282, %v2266
  %v2299 = vmul.f32 %v2282, %v2267
  %v2300 = vadd.f32 %v2164, %v2284
  %v2301 = vadd.f32 %v2165, %v2285
  %v2302 = vadd.f32 %v2166, %v2286
  %v2303 = vadd.f32 %v2167, %v2287
  %v2304 = vadd.f32 %v2168, %v2288
  %v2305 = vadd.f32 %v2169, %v2289
  %v2306 = vadd.f32 %v2170, %v2290
  %v2307 = vadd.f32 %v2171, %v2291
  %v2308 = vadd.f32 %v2172, %v2292
  %v2309 = vadd.f32 %v2173, %v2293
  %v2310 = vadd.f32 %v2174, %v2294
  %v2311 = vadd.f32 %v2175, %v2295
  %v2312 = vadd.f32 %v2176, %v2296
  %v2313 = vadd.f32 %v2177, %v2297
  %v2314 = vadd.f32 %v2178, %v2298
  %v2315 = vadd.f32 %v2179, %v2299
  %2316 = vrot.lane.b32.xlu0 %v266, 96
  %v2317 = vpop.permute.xlu0 %2316
  %2318 = vrot.lane.b32.xlu0 %v270, 96
  %v2319 = vpop.permute.xlu0 %2318
  %2320 = vrot.lane.b32.xlu0 %v274, 96
  %v2321 = vpop.permute.xlu0 %2320
  %2322 = vrot.lane.b32.xlu0 %v278, 96
  %v2323 = vpop.permute.xlu0 %2322
  %2324 = vrot.lane.b32.xlu0 %v267, 96
  %v2325 = vpop.permute.xlu0 %2324
  %2326 = vrot.lane.b32.xlu0 %v271, 96
  %v2327 = vpop.permute.xlu0 %2326
  %2328 = vrot.lane.b32.xlu0 %v275, 96
  %v2329 = vpop.permute.xlu0 %2328
  %2330 = vrot.lane.b32.xlu0 %v279, 96
  %v2331 = vpop.permute.xlu0 %2330
  %2332 = vrot.lane.b32.xlu0 %v268, 96
  %v2333 = vpop.permute.xlu0 %2332
  %2334 = vrot.lane.b32.xlu0 %v272, 96
  %v2335 = vpop.permute.xlu0 %2334
  %2336 = vrot.lane.b32.xlu0 %v276, 96
  %v2337 = vpop.permute.xlu0 %2336
  %2338 = vrot.lane.b32.xlu0 %v280, 96
  %v2339 = vpop.permute.xlu0 %2338
  %2340 = vrot.lane.b32.xlu0 %v269, 96
  %v2341 = vpop.permute.xlu0 %2340
  %2342 = vrot.lane.b32.xlu0 %v273, 96
  %v2343 = vpop.permute.xlu0 %2342
  %2344 = vrot.lane.b32.xlu0 %v277, 96
  %v2345 = vpop.permute.xlu0 %2344
  %2346 = vrot.lane.b32.xlu0 %v281, 96
  %v2347 = vpop.permute.xlu0 %2346
  %vm2348 = vcmp.lt.s32.totalorder %v355, 96
  %v2349 = vsel %vm2348, %v2333, %v2341
  %v2350 = vsel %vm2348, %v2335, %v2343
  %v2351 = vsel %vm2348, %v2337, %v2345
  %v2352 = vsel %vm2348, %v2339, %v2347
  %v2353 = vsel %vm2348, %v2325, %v2333
  %v2354 = vsel %vm2348, %v2327, %v2335
  %v2355 = vsel %vm2348, %v2329, %v2337
  %v2356 = vsel %vm2348, %v2331, %v2339
  %v2357 = vsel %vm2348, %v2317, %v2325
  %v2358 = vsel %vm2348, %v2319, %v2327
  %v2359 = vsel %vm2348, %v2321, %v2329
  %v2360 = vsel %vm2348, %v2323, %v2331
  %v2361 = vsel %vm2348, %v2341, %v2317
  %v2362 = vsel %vm2348, %v2343, %v2319
  %v2363 = vsel %vm2348, %v2345, %v2321
  %v2364 = vsel %vm2348, %v2347, %v2323
  %s2365 = scalar_lea.vmem %s1549, 7
  %v2366 = vld [vmem:[%s2365] ss:$8 sm:$0xf]
  %v2368 = vlaneseq
  %v2369 = vshrl.u32 %v2368, 7
  %v2370 = vsub.s32 0, %v2369
  %v2371 = vrot.slane %v2366, %v2370
  %v2372 = vlaneseq
  %v2373 = vshrl.u32 %v2372, 7
  %v2374 = vsub.s32 1, %v2373
  %v2375 = vrot.slane %v2366, %v2374
  %v2376 = vlaneseq
  %v2377 = vshrl.u32 %v2376, 7
  %v2378 = vsub.s32 2, %v2377
  %v2379 = vrot.slane %v2366, %v2378
  %v2380 = vlaneseq
  %v2381 = vshrl.u32 %v2380, 7
  %v2382 = vsub.s32 3, %v2381
  %v2383 = vrot.slane %v2366, %v2382
  %v2388 = vmul.f32 %v2371, %v2357
  %v2389 = vmul.f32 %v2375, %v2353
  %v2390 = vmul.f32 %v2379, %v2349
  %v2391 = vmul.f32 %v2383, %v2361
  %v2392 = vmul.f32 %v2371, %v2358
  %v2393 = vmul.f32 %v2375, %v2354
  %v2394 = vmul.f32 %v2379, %v2350
  %v2395 = vmul.f32 %v2383, %v2362
  %v2396 = vmul.f32 %v2371, %v2359
  %v2397 = vmul.f32 %v2375, %v2355
  %v2398 = vmul.f32 %v2379, %v2351
  %v2399 = vmul.f32 %v2383, %v2363
  %v2400 = vmul.f32 %v2371, %v2360
  %v2401 = vmul.f32 %v2375, %v2356
  %v2402 = vmul.f32 %v2379, %v2352
  %v2403 = vmul.f32 %v2383, %v2364
  %2404 = vset.pattern.permute.xlu0 7
  %2405 = vperm.xlu0 %2404, %v1460
  %v2406 = vpop.permute.xlu0 %2405
  %2408 = vset.pattern.permute.xlu0 7
  %2409 = vperm.xlu0 %2408, %v1461
  %v2410 = vpop.permute.xlu0 %2409
  %2412 = vset.pattern.permute.xlu0 7
  %2413 = vperm.xlu0 %2412, %v1462
  %v2414 = vpop.permute.xlu0 %2413
  %2416 = vset.pattern.permute.xlu0 7
  %2417 = vperm.xlu0 %2416, %v1463
  %v2418 = vpop.permute.xlu0 %2417
  %v2420 = vmul.f32 %v2406, %v2388
  %v2421 = vmul.f32 %v2406, %v2389
  %v2422 = vmul.f32 %v2406, %v2390
  %v2423 = vmul.f32 %v2406, %v2391
  %v2424 = vmul.f32 %v2410, %v2392
  %v2425 = vmul.f32 %v2410, %v2393
  %v2426 = vmul.f32 %v2410, %v2394
  %v2427 = vmul.f32 %v2410, %v2395
  %v2428 = vmul.f32 %v2414, %v2396
  %v2429 = vmul.f32 %v2414, %v2397
  %v2430 = vmul.f32 %v2414, %v2398
  %v2431 = vmul.f32 %v2414, %v2399
  %v2432 = vmul.f32 %v2418, %v2400
  %v2433 = vmul.f32 %v2418, %v2401
  %v2434 = vmul.f32 %v2418, %v2402
  %v2435 = vmul.f32 %v2418, %v2403
  %v2436 = vadd.f32 %v2300, %v2420
  %v2437 = vadd.f32 %v2301, %v2421
  %v2438 = vadd.f32 %v2302, %v2422
  %v2439 = vadd.f32 %v2303, %v2423
  %v2440 = vadd.f32 %v2304, %v2424
  %v2441 = vadd.f32 %v2305, %v2425
  %v2442 = vadd.f32 %v2306, %v2426
  %v2443 = vadd.f32 %v2307, %v2427
  %v2444 = vadd.f32 %v2308, %v2428
  %v2445 = vadd.f32 %v2309, %v2429
  %v2446 = vadd.f32 %v2310, %v2430
  %v2447 = vadd.f32 %v2311, %v2431
  %v2448 = vadd.f32 %v2312, %v2432
  %v2449 = vadd.f32 %v2313, %v2433
  %v2450 = vadd.f32 %v2314, %v2434
  %v2451 = vadd.f32 %v2315, %v2435
  %2452 = vrot.lane.b32.xlu0 %v266, 94
  %v2453 = vpop.permute.xlu0 %2452
  %2454 = vrot.lane.b32.xlu0 %v270, 94
  %v2455 = vpop.permute.xlu0 %2454
  %2456 = vrot.lane.b32.xlu0 %v274, 94
  %v2457 = vpop.permute.xlu0 %2456
  %2458 = vrot.lane.b32.xlu0 %v278, 94
  %v2459 = vpop.permute.xlu0 %2458
  %2460 = vrot.lane.b32.xlu0 %v267, 94
  %v2461 = vpop.permute.xlu0 %2460
  %2462 = vrot.lane.b32.xlu0 %v271, 94
  %v2463 = vpop.permute.xlu0 %2462
  %2464 = vrot.lane.b32.xlu0 %v275, 94
  %v2465 = vpop.permute.xlu0 %2464
  %2466 = vrot.lane.b32.xlu0 %v279, 94
  %v2467 = vpop.permute.xlu0 %2466
  %2468 = vrot.lane.b32.xlu0 %v268, 94
  %v2469 = vpop.permute.xlu0 %2468
  %2470 = vrot.lane.b32.xlu0 %v272, 94
  %v2471 = vpop.permute.xlu0 %2470
  %2472 = vrot.lane.b32.xlu0 %v276, 94
  %v2473 = vpop.permute.xlu0 %2472
  %2474 = vrot.lane.b32.xlu0 %v280, 94
  %v2475 = vpop.permute.xlu0 %2474
  %2476 = vrot.lane.b32.xlu0 %v269, 94
  %v2477 = vpop.permute.xlu0 %2476
  %2478 = vrot.lane.b32.xlu0 %v273, 94
  %v2479 = vpop.permute.xlu0 %2478
  %2480 = vrot.lane.b32.xlu0 %v277, 94
  %v2481 = vpop.permute.xlu0 %2480
  %2482 = vrot.lane.b32.xlu0 %v281, 94
  %v2483 = vpop.permute.xlu0 %2482
  %vm2484 = vcmp.lt.s32.totalorder %v355, 94
  %v2485 = vsel %vm2484, %v2469, %v2477
  %v2486 = vsel %vm2484, %v2471, %v2479
  %v2487 = vsel %vm2484, %v2473, %v2481
  %v2488 = vsel %vm2484, %v2475, %v2483
  %v2489 = vsel %vm2484, %v2461, %v2469
  %v2490 = vsel %vm2484, %v2463, %v2471
  %v2491 = vsel %vm2484, %v2465, %v2473
  %v2492 = vsel %vm2484, %v2467, %v2475
  %v2493 = vsel %vm2484, %v2453, %v2461
  %v2494 = vsel %vm2484, %v2455, %v2463
  %v2495 = vsel %vm2484, %v2457, %v2465
  %v2496 = vsel %vm2484, %v2459, %v2467
  %v2497 = vsel %vm2484, %v2477, %v2453
  %v2498 = vsel %vm2484, %v2479, %v2455
  %v2499 = vsel %vm2484, %v2481, %v2457
  %v2500 = vsel %vm2484, %v2483, %v2459
  %s2501 = scalar_lea.vmem %s1549, 32
  %v2502 = vld [vmem:[%s2501] ss:$8 sm:$0xf]
  %v2504 = vlaneseq
  %v2505 = vshrl.u32 %v2504, 7
  %v2506 = vsub.s32 0, %v2505
  %v2507 = vrot.slane %v2502, %v2506
  %v2508 = vlaneseq
  %v2509 = vshrl.u32 %v2508, 7
  %v2510 = vsub.s32 1, %v2509
  %v2511 = vrot.slane %v2502, %v2510
  %v2512 = vlaneseq
  %v2513 = vshrl.u32 %v2512, 7
  %v2514 = vsub.s32 2, %v2513
  %v2515 = vrot.slane %v2502, %v2514
  %v2516 = vlaneseq
  %v2517 = vshrl.u32 %v2516, 7
  %v2518 = vsub.s32 3, %v2517
  %v2519 = vrot.slane %v2502, %v2518
  %v2524 = vmul.f32 %v2507, %v2493
  %v2525 = vmul.f32 %v2511, %v2489
  %v2526 = vmul.f32 %v2515, %v2485
  %v2527 = vmul.f32 %v2519, %v2497
  %v2528 = vmul.f32 %v2507, %v2494
  %v2529 = vmul.f32 %v2511, %v2490
  %v2530 = vmul.f32 %v2515, %v2486
  %v2531 = vmul.f32 %v2519, %v2498
  %v2532 = vmul.f32 %v2507, %v2495
  %v2533 = vmul.f32 %v2511, %v2491
  %v2534 = vmul.f32 %v2515, %v2487
  %v2535 = vmul.f32 %v2519, %v2499
  %v2536 = vmul.f32 %v2507, %v2496
  %v2537 = vmul.f32 %v2511, %v2492
  %v2538 = vmul.f32 %v2515, %v2488
  %v2539 = vmul.f32 %v2519, %v2500
  %2540 = vset.pattern.permute.xlu0 8
  %2541 = vperm.xlu0 %2540, %v1460
  %v2542 = vpop.permute.xlu0 %2541
  %2544 = vset.pattern.permute.xlu0 8
  %2545 = vperm.xlu0 %2544, %v1461
  %v2546 = vpop.permute.xlu0 %2545
  %2548 = vset.pattern.permute.xlu0 8
  %2549 = vperm.xlu0 %2548, %v1462
  %v2550 = vpop.permute.xlu0 %2549
  %2552 = vset.pattern.permute.xlu0 8
  %2553 = vperm.xlu0 %2552, %v1463
  %v2554 = vpop.permute.xlu0 %2553
  %v2556 = vmul.f32 %v2542, %v2524
  %v2557 = vmul.f32 %v2542, %v2525
  %v2558 = vmul.f32 %v2542, %v2526
  %v2559 = vmul.f32 %v2542, %v2527
  %v2560 = vmul.f32 %v2546, %v2528
  %v2561 = vmul.f32 %v2546, %v2529
  %v2562 = vmul.f32 %v2546, %v2530
  %v2563 = vmul.f32 %v2546, %v2531
  %v2564 = vmul.f32 %v2550, %v2532
  %v2565 = vmul.f32 %v2550, %v2533
  %v2566 = vmul.f32 %v2550, %v2534
  %v2567 = vmul.f32 %v2550, %v2535
  %v2568 = vmul.f32 %v2554, %v2536
  %v2569 = vmul.f32 %v2554, %v2537
  %v2570 = vmul.f32 %v2554, %v2538
  %v2571 = vmul.f32 %v2554, %v2539
  %v2572 = vadd.f32 %v2436, %v2556
  %v2573 = vadd.f32 %v2437, %v2557
  %v2574 = vadd.f32 %v2438, %v2558
  %v2575 = vadd.f32 %v2439, %v2559
  %v2576 = vadd.f32 %v2440, %v2560
  %v2577 = vadd.f32 %v2441, %v2561
  %v2578 = vadd.f32 %v2442, %v2562
  %v2579 = vadd.f32 %v2443, %v2563
  %v2580 = vadd.f32 %v2444, %v2564
  %v2581 = vadd.f32 %v2445, %v2565
  %v2582 = vadd.f32 %v2446, %v2566
  %v2583 = vadd.f32 %v2447, %v2567
  %v2584 = vadd.f32 %v2448, %v2568
  %v2585 = vadd.f32 %v2449, %v2569
  %v2586 = vadd.f32 %v2450, %v2570
  %v2587 = vadd.f32 %v2451, %v2571
  %2588 = vset.pattern.permute.xlu0 2
  %2589 = vperm.xlu0 %2588, %v38
  %v2590 = vpop.permute.xlu0 %2589
  %2592 = vset.pattern.permute.xlu0 2
  %2593 = vperm.xlu0 %2592, %v39
  %v2594 = vpop.permute.xlu0 %2593
  %2596 = vset.pattern.permute.xlu0 2
  %2597 = vperm.xlu0 %2596, %v40
  %v2598 = vpop.permute.xlu0 %2597
  %2600 = vset.pattern.permute.xlu0 2
  %2601 = vperm.xlu0 %2600, %v41
  %v2602 = vpop.permute.xlu0 %2601
  %v2604 = vadd.f32 %v2572, %v2590
  %v2605 = vadd.f32 %v2573, %v2590
  %v2606 = vadd.f32 %v2574, %v2590
  %v2607 = vadd.f32 %v2575, %v2590
  %v2608 = vadd.f32 %v2576, %v2594
  %v2609 = vadd.f32 %v2577, %v2594
  %v2610 = vadd.f32 %v2578, %v2594
  %v2611 = vadd.f32 %v2579, %v2594
  %v2612 = vadd.f32 %v2580, %v2598
  %v2613 = vadd.f32 %v2581, %v2598
  %v2614 = vadd.f32 %v2582, %v2598
  %v2615 = vadd.f32 %v2583, %v2598
  %v2616 = vadd.f32 %v2584, %v2602
  %v2617 = vadd.f32 %v2585, %v2602
  %v2618 = vadd.f32 %v2586, %v2602
  %v2619 = vadd.f32 %v2587, %v2602
  %v2620 = vmax.f32 %v2604, 0.0
  %v2621 = vmax.f32 %v2605, 0.0
  %v2622 = vmax.f32 %v2606, 0.0
  %v2623 = vmax.f32 %v2607, 0.0
  %v2624 = vmax.f32 %v2608, 0.0
  %v2625 = vmax.f32 %v2609, 0.0
  %v2626 = vmax.f32 %v2610, 0.0
  %v2627 = vmax.f32 %v2611, 0.0
  %v2628 = vmax.f32 %v2612, 0.0
  %v2629 = vmax.f32 %v2613, 0.0
  %v2630 = vmax.f32 %v2614, 0.0
  %v2631 = vmax.f32 %v2615, 0.0
  %v2632 = vmax.f32 %v2616, 0.0
  %v2633 = vmax.f32 %v2617, 0.0
  %v2634 = vmax.f32 %v2618, 0.0
  %v2635 = vmax.f32 %v2619, 0.0
  %v2636 = vld [vmem:[%s3] sm:$0xf]
  %v2637 = vld [vmem:[%s3 + $0x4] sm:$0xf]
  %v2638 = vld [vmem:[%s3 + $0x8] sm:$0xf]
  %v2639 = vld [vmem:[%s3 + $0xc] sm:$0xf]
  %v2640 = vld [vmem:[%s4] sm:$0xf]
  %v2641 = vld [vmem:[%s4 + $0x4] sm:$0xf]
  %v2642 = vld [vmem:[%s4 + $0x8] sm:$0xf]
  %v2643 = vld [vmem:[%s4 + $0xc] sm:$0xf]
  %v2644 = vld [vmem:[%s4 + $0x10] sm:$0xf]
  %v2645 = vld [vmem:[%s4 + $0x14] sm:$0xf]
  %v2646 = vld [vmem:[%s4 + $0x18] sm:$0xf]
  %v2647 = vld [vmem:[%s4 + $0x1c] sm:$0xf]
  %v2648 = vld [vmem:[%s5] sm:$0xf]
  %v2649 = vadd.f32 %v1443, %v2620
  %v2650 = vadd.f32 %v1444, %v2621
  %v2651 = vadd.f32 %v1447, %v2624
  %v2652 = vadd.f32 %v1448, %v2625
  %v2653 = vadd.f32 %v1451, %v2628
  %v2654 = vadd.f32 %v1452, %v2629
  %v2655 = vadd.f32 %v1455, %v2632
  %v2656 = vadd.f32 %v1456, %v2633
  %v2657 = vadd.f32 %v2649, %v2650
  %2658 = vadd.xlane.f32.xlu0 %v2657
  %v2659 = vpop.xlane.xlu0 %2658
  %v2660 = vadd.f32 %v2651, %v2652
  %2661 = vadd.xlane.f32.xlu0 %v2660
  %v2662 = vpop.xlane.xlu0 %2661
  %v2663 = vadd.f32 %v2653, %v2654
  %2664 = vadd.xlane.f32.xlu0 %v2663
  %v2665 = vpop.xlane.xlu0 %2664
  %v2666 = vadd.f32 %v2655, %v2656
  %2667 = vadd.xlane.f32.xlu0 %v2666
  %v2668 = vpop.xlane.xlu0 %2667
  %v2669 = vmul.f32 %v2659, 0.00390625
  %v2670 = vmul.f32 %v2662, 0.00390625
  %v2671 = vmul.f32 %v2665, 0.00390625
  %v2672 = vmul.f32 %v2668, 0.00390625
  %v2673 = vpack.c.bf16 %v2670, %v2669
  %v2674 = vpack.c.bf16 %v2672, %v2671
  %v2679 = vunpack.c.l.b16 %v2636
  %v2680 = vunpack.c.l.b16 %v2637
  %v2681 = vunpack.c.l.b16 %v2638
  %v2682 = vunpack.c.l.b16 %v2639
  %v2683 = vpack.c.b16 %v2680, %v2679
  %v2684 = vpack.c.b16 %v2682, %v2681
  %2685 = vrot.lane.b32.xlu0 %v38, 125
  %v2686 = vpop.permute.xlu0 %2685
  %2687 = vrot.lane.b32.xlu0 %v39, 125
  %v2688 = vpop.permute.xlu0 %2687
  %2689 = vrot.lane.b32.xlu0 %v40, 125
  %v2690 = vpop.permute.xlu0 %2689
  %2691 = vrot.lane.b32.xlu0 %v41, 125
  %v2692 = vpop.permute.xlu0 %2691
  %vm2697 = vcmask 261120
  %v2699 = vsel %vm2697, %v2683, 0
  %v2702 = vsel %vm2697, %v2684, 0
  %2704 = vmatprep.subr.bf16.mxu0 0
  %2705 = vmatpush1.bf16.msra.mxu0 %v2673
  %2706 = vmatprep.subr.bf16.mxu0 0
  %2707 = vmatpush1.bf16.msra.mxu0 %v2674
  %2708 = vmatprep.subr.bf16.mxu0 0
  %2709 = vmatpush1.bf16.msra.mxu0 0
  %2710 = vmatprep.subr.bf16.mxu0 0
  %2711 = vmatpush1.bf16.msra.mxu0 0
  %2712 = vmatprep.subr.bf16.mxu0 0
  %2713 = vmatpush1.bf16.msra.mxu0 0
  %2714 = vmatprep.subr.bf16.mxu0 0
  %2715 = vmatpush1.bf16.msra.mxu0 0
  %2716 = vmatprep.subr.bf16.mxu0 0
  %2717 = vmatpush1.bf16.msra.mxu0 0
  %2718 = vmatprep.subr.bf16.mxu0 0
  %2719 = vmatpush1.bf16.msra.mxu0 0
  %2720 = vmatprep.subr.bf16.mxu0 0
  %2721 = vmatpush1.bf16.msra.mxu0 0
  %2722 = vmatprep.subr.bf16.mxu0 0
  %2723 = vmatpush1.bf16.msra.mxu0 0
  %2724 = vmatprep.subr.bf16.mxu0 0
  %2725 = vmatpush1.bf16.msra.mxu0 0
  %2726 = vmatprep.subr.bf16.mxu0 0
  %2727 = vmatpush1.bf16.msra.mxu0 0
  %2728 = vmatprep.subr.bf16.mxu0 0
  %2729 = vmatpush1.bf16.msra.mxu0 0
  %2730 = vmatprep.subr.bf16.mxu0 0
  %2731 = vmatpush1.bf16.msra.mxu0 0
  %2732 = vmatprep.subr.bf16.mxu0 0
  %2733 = vmatpush1.bf16.msra.mxu0 0
  %2734 = vmatprep.subr.bf16.mxu0 0
  %2735 = vmatpush1.bf16.msra.mxu0 0
  %2736 = vmatprep.mubr.bf16.mxu0 0
  %2737 = vmatmul.mubr.bf16.gmra.mrb[0].mxu0 %v2699
  %v2738 = vpop.f32.mrb[0].mxu0
  %v2739 = vadd.f32 %v2686, %v2738
  %v2740 = vpop.f32.mrb[0].mxu0
  %v2741 = vpop.f32.mrb[0].mxu0
  %v2742 = vadd.f32 %v2688, %v2741
  %v2743 = vpop.f32.mrb[0].mxu0
  %2744 = vmatprep.mubr.bf16.mxu0 0
  %2745 = vmatmul.mubr.bf16.gmra.mrb[0].mxu0 %v2702
  %v2746 = vpop.f32.mrb[0].mxu0
  %v2747 = vadd.f32 %v2690, %v2746
  %v2748 = vpop.f32.mrb[0].mxu0
  %v2749 = vpop.f32.mrb[0].mxu0
  %v2750 = vadd.f32 %v2692, %v2749
  %v2751 = vpop.f32.mrb[0].mxu0
  %2752 = vdwg.mxu0
  %v2753 = vmax.f32 %v2739, 0.0
  %v2754 = vmax.f32 %v2742, 0.0
  %v2755 = vmax.f32 %v2747, 0.0
  %v2756 = vmax.f32 %v2750, 0.0
  %v2757 = vpack.c.bf16 %v2754, %v2753
  %v2758 = vpack.c.bf16 %v2756, %v2755
  %v2767 = vunpack.c.l.b16 %v2640
  %v2768 = vunpack.c.l.b16 %v2641
  %v2769 = vunpack.c.l.b16 %v2642
  %v2770 = vunpack.c.l.b16 %v2643
  %v2771 = vunpack.c.l.b16 %v2644
  %v2772 = vunpack.c.l.b16 %v2645
  %v2773 = vunpack.c.l.b16 %v2646
  %v2774 = vunpack.c.l.b16 %v2647
  %v2775 = vpack.c.b16 %v2768, %v2767
  %v2776 = vpack.c.b16 %v2770, %v2769
  %v2777 = vpack.c.b16 %v2772, %v2771
  %v2778 = vpack.c.b16 %v2774, %v2773
  %v2780 = vsel %vm2697, %v2775, 0
  %v2783 = vsel %vm2697, %v2776, 0
  %v2786 = vsel %vm2697, %v2777, 0
  %v2789 = vsel %vm2697, %v2778, 0
  %2791 = vmatprep.subr.bf16.mxu0 0
  %2792 = vmatpush1.bf16.msra.mxu0 %v2757
  %2793 = vmatprep.subr.bf16.mxu0 0
  %2794 = vmatpush1.bf16.msra.mxu0 %v2758
  %2795 = vmatprep.subr.bf16.mxu0 0
  %2796 = vmatpush1.bf16.msra.mxu0 0
  %2797 = vmatprep.subr.bf16.mxu0 0
  %2798 = vmatpush1.bf16.msra.mxu0 0
  %2799 = vmatprep.subr.bf16.mxu0 0
  %2800 = vmatpush1.bf16.msra.mxu0 0
  %2801 = vmatprep.subr.bf16.mxu0 0
  %2802 = vmatpush1.bf16.msra.mxu0 0
  %2803 = vmatprep.subr.bf16.mxu0 0
  %2804 = vmatpush1.bf16.msra.mxu0 0
  %2805 = vmatprep.subr.bf16.mxu0 0
  %2806 = vmatpush1.bf16.msra.mxu0 0
  %2807 = vmatprep.subr.bf16.mxu0 0
  %2808 = vmatpush1.bf16.msra.mxu0 0
  %2809 = vmatprep.subr.bf16.mxu0 0
  %2810 = vmatpush1.bf16.msra.mxu0 0
  %2811 = vmatprep.subr.bf16.mxu0 0
  %2812 = vmatpush1.bf16.msra.mxu0 0
  %2813 = vmatprep.subr.bf16.mxu0 0
  %2814 = vmatpush1.bf16.msra.mxu0 0
  %2815 = vmatprep.subr.bf16.mxu0 0
  %2816 = vmatpush1.bf16.msra.mxu0 0
  %2817 = vmatprep.subr.bf16.mxu0 0
  %2818 = vmatpush1.bf16.msra.mxu0 0
  %2819 = vmatprep.subr.bf16.mxu0 0
  %2820 = vmatpush1.bf16.msra.mxu0 0
  %2821 = vmatprep.subr.bf16.mxu0 0
  %2822 = vmatpush1.bf16.msra.mxu0 0
  %2823 = vmatprep.mubr.bf16.mxu0 0
  %2824 = vmatmul.mubr.bf16.gmra.mrb[0].mxu0 %v2780
  %v2825 = vpop.f32.mrb[0].mxu0
  %v2826 = vadd.f32 0.0, %v2825
  %v2827 = vpop.f32.mrb[0].mxu0
  %v2828 = vpop.f32.mrb[0].mxu0
  %v2829 = vadd.f32 0.0, %v2828
  %v2830 = vpop.f32.mrb[0].mxu0
  %2831 = vmatprep.mubr.bf16.mxu0 0
  %2832 = vmatmul.mubr.bf16.gmra.mrb[0].mxu0 %v2783
  %v2833 = vpop.f32.mrb[0].mxu0
  %v2834 = vadd.f32 0.0, %v2833
  %v2835 = vpop.f32.mrb[0].mxu0
  %v2836 = vpop.f32.mrb[0].mxu0
  %v2837 = vadd.f32 0.0, %v2836
  %v2838 = vpop.f32.mrb[0].mxu0
  %2839 = vmatprep.mubr.bf16.mxu0 0
  %2840 = vmatmul.mubr.bf16.gmra.mrb[0].mxu0 %v2786
  %v2841 = vpop.f32.mrb[0].mxu0
  %v2842 = vadd.f32 0.0, %v2841
  %v2843 = vpop.f32.mrb[0].mxu0
  %v2844 = vpop.f32.mrb[0].mxu0
  %v2845 = vadd.f32 0.0, %v2844
  %v2846 = vpop.f32.mrb[0].mxu0
  %2847 = vmatprep.mubr.bf16.mxu0 0
  %2848 = vmatmul.mubr.bf16.gmra.mrb[0].mxu0 %v2789
  %v2849 = vpop.f32.mrb[0].mxu0
  %v2850 = vadd.f32 0.0, %v2849
  %v2851 = vpop.f32.mrb[0].mxu0
  %v2852 = vpop.f32.mrb[0].mxu0
  %v2853 = vadd.f32 0.0, %v2852
  %v2854 = vpop.f32.mrb[0].mxu0
  %2855 = vdwg.mxu0
  %v2856 = vsub.f32 %v2826, %v2842
  %v2857 = vsub.f32 %v2829, %v2845
  %v2858 = vsub.f32 %v2834, %v2850
  %v2859 = vsub.f32 %v2837, %v2853
  %v2860 = vxor.u32 %v2856, 2147483648
  %v2861 = vxor.u32 %v2857, 2147483648
  %v2862 = vxor.u32 %v2858, 2147483648
  %v2863 = vxor.u32 %v2859, 2147483648
  %v2864 = vmul.f32 %v2860, 1.442695
  %v2865 = vpow.pop %v2864
  %v2866 = vmul.f32 %v2861, 1.442695
  %v2867 = vpow.pop %v2866
  %v2868 = vmul.f32 %v2862, 1.442695
  %v2869 = vpow.pop %v2868
  %v2870 = vmul.f32 %v2863, 1.442695
  %v2871 = vpow.pop %v2870
  %v2872 = vadd.f32 %v2865, 1.0
  %v2873 = vadd.f32 %v2867, 1.0
  %v2874 = vadd.f32 %v2869, 1.0
  %v2875 = vadd.f32 %v2871, 1.0
  %v2876 = vrcp.pop %v2872
  %v2877 = vmul.f32 1.0, %v2876
  %v2878 = vrcp.pop %v2873
  %v2879 = vmul.f32 1.0, %v2878
  %v2880 = vrcp.pop %v2874
  %v2881 = vmul.f32 1.0, %v2880
  %v2882 = vrcp.pop %v2875
  %v2883 = vmul.f32 1.0, %v2882
  %v2884 = vsub.f32 %v1443, %v2620
  %v2885 = vsub.f32 %v1444, %v2621
  %v2886 = vsub.f32 %v1447, %v2624
  %v2887 = vsub.f32 %v1448, %v2625
  %v2888 = vsub.f32 %v1451, %v2628
  %v2889 = vsub.f32 %v1452, %v2629
  %v2890 = vsub.f32 %v1455, %v2632
  %v2891 = vsub.f32 %v1456, %v2633
  %2893 = vset.pattern.permute.xlu0 0
  %2894 = vperm.xlu0 %2893, %v2877
  %v2895 = vpop.permute.xlu0 %2894
  %2898 = vset.pattern.permute.xlu0 0
  %2899 = vperm.xlu0 %2898, %v2879
  %v2900 = vpop.permute.xlu0 %2899
  %2903 = vset.pattern.permute.xlu0 0
  %2904 = vperm.xlu0 %2903, %v2881
  %v2905 = vpop.permute.xlu0 %2904
  %2908 = vset.pattern.permute.xlu0 0
  %2909 = vperm.xlu0 %2908, %v2883
  %v2910 = vpop.permute.xlu0 %2909
  %v2912 = vmul.f32 %v2895, %v2884
  %v2913 = vmul.f32 %v2895, %v2885
  %v2914 = vmul.f32 %v2900, %v2886
  %v2915 = vmul.f32 %v2900, %v2887
  %v2916 = vmul.f32 %v2905, %v2888
  %v2917 = vmul.f32 %v2905, %v2889
  %v2918 = vmul.f32 %v2910, %v2890
  %v2919 = vmul.f32 %v2910, %v2891
  %v2920 = vadd.f32 %v2620, %v2912
  %v2921 = vadd.f32 %v2621, %v2913
  %v2922 = vadd.f32 %v2624, %v2914
  %v2923 = vadd.f32 %v2625, %v2915
  %v2924 = vadd.f32 %v2628, %v2916
  %v2925 = vadd.f32 %v2629, %v2917
  %v2926 = vadd.f32 %v2632, %v2918
  %v2927 = vadd.f32 %v2633, %v2919
  %v2928 = vpack.c.bf16 %v2922, %v2920
  %v2929 = vpack.c.bf16 %v2923, %v2921
  %v2930 = vpack.c.bf16 %v2926, %v2924
  %v2931 = vpack.c.bf16 %v2927, %v2925
  %2932 = vset.pattern.permute.xlu0 4
  %2933 = vperm.xlu0 %2932, %v38
  %v2934 = vpop.permute.xlu0 %2933
  %v2937 = vsel %vm2697, %v2648, 0
  %2939 = vmatprep.subr.bf16.mxu0 %v2929
  %2940 = vmatpush1.bf16.msra.mxu0 %v2928
  %2941 = vmatprep.subr.bf16.mxu0 %v2931
  %2942 = vmatpush1.bf16.msra.mxu0 %v2930
  %2943 = vmatprep.subr.bf16.mxu0 0
  %2944 = vmatpush1.bf16.msra.mxu0 0
  %2945 = vmatprep.subr.bf16.mxu0 0
  %2946 = vmatpush1.bf16.msra.mxu0 0
  %2947 = vmatprep.subr.bf16.mxu0 0
  %2948 = vmatpush1.bf16.msra.mxu0 0
  %2949 = vmatprep.subr.bf16.mxu0 0
  %2950 = vmatpush1.bf16.msra.mxu0 0
  %2951 = vmatprep.subr.bf16.mxu0 0
  %2952 = vmatpush1.bf16.msra.mxu0 0
  %2953 = vmatprep.subr.bf16.mxu0 0
  %2954 = vmatpush1.bf16.msra.mxu0 0
  %2955 = vmatprep.subr.bf16.mxu0 0
  %2956 = vmatpush1.bf16.msra.mxu0 0
  %2957 = vmatprep.subr.bf16.mxu0 0
  %2958 = vmatpush1.bf16.msra.mxu0 0
  %2959 = vmatprep.subr.bf16.mxu0 0
  %2960 = vmatpush1.bf16.msra.mxu0 0
  %2961 = vmatprep.subr.bf16.mxu0 0
  %2962 = vmatpush1.bf16.msra.mxu0 0
  %2963 = vmatprep.subr.bf16.mxu0 0
  %2964 = vmatpush1.bf16.msra.mxu0 0
  %2965 = vmatprep.subr.bf16.mxu0 0
  %2966 = vmatpush1.bf16.msra.mxu0 0
  %2967 = vmatprep.subr.bf16.mxu0 0
  %2968 = vmatpush1.bf16.msra.mxu0 0
  %2969 = vmatprep.subr.bf16.mxu0 0
  %2970 = vmatpush1.bf16.msra.mxu0 0
  %2971 = vmatprep.mubr.bf16.mxu0 0
  %2972 = vmatmul.mubr.bf16.gmra.mrb[0].mxu0 %v2937
  %v2973 = vpop.f32.mrb[0].mxu0
  %v2974 = vadd.f32 %v2934, %v2973
  %v2975 = vpop.f32.mrb[0].mxu0
  %v2976 = vadd.f32 %v2934, %v2975
  %v2977 = vpop.f32.mrb[0].mxu0
  %v2978 = vpop.f32.mrb[0].mxu0
  %2979 = vdwg.mxu0
  %v2980 = vadd.f32 %v30, %v2974
  %v2981 = vadd.f32 %v31, %v2976
  %2982 = vst [vmem:[%s8] sm:$0xff] %v2980
  %2983 = vst [vmem:[%s8 + $0x8] sm:$0xff] %v2981
  %v2984 = vadd.f32 %v1445, %v2622
  %v2985 = vadd.f32 %v1446, %v2623
  %v2986 = vadd.f32 %v1449, %v2626
  %v2987 = vadd.f32 %v1450, %v2627
  %v2988 = vadd.f32 %v1453, %v2630
  %v2989 = vadd.f32 %v1454, %v2631
  %v2990 = vadd.f32 %v1457, %v2634
  %v2991 = vadd.f32 %v1458, %v2635
  %v2992 = vadd.f32 %v2984, %v2985
  %2993 = vadd.xlane.f32.xlu0 %v2992
  %v2994 = vpop.xlane.xlu0 %2993
  %v2995 = vadd.f32 %v2986, %v2987
  %2996 = vadd.xlane.f32.xlu0 %v2995
  %v2997 = vpop.xlane.xlu0 %2996
  %v2998 = vadd.f32 %v2988, %v2989
  %2999 = vadd.xlane.f32.xlu0 %v2998
  %v3000 = vpop.xlane.xlu0 %2999
  %v3001 = vadd.f32 %v2990, %v2991
  %3002 = vadd.xlane.f32.xlu0 %v3001
  %v3003 = vpop.xlane.xlu0 %3002
  %v3004 = vmul.f32 %v2994, 0.00390625
  %v3005 = vmul.f32 %v2997, 0.00390625
  %v3006 = vmul.f32 %v3000, 0.00390625
  %v3007 = vmul.f32 %v3003, 0.00390625
  %v3008 = vpack.c.bf16 %v3005, %v3004
  %v3009 = vpack.c.bf16 %v3007, %v3006
  %3010 = vmatprep.subr.bf16.mxu0 0
  %3011 = vmatpush1.bf16.msra.mxu0 %v3008
  %3012 = vmatprep.subr.bf16.mxu0 0
  %3013 = vmatpush1.bf16.msra.mxu0 %v3009
  %3014 = vmatprep.subr.bf16.mxu0 0
  %3015 = vmatpush1.bf16.msra.mxu0 0
  %3016 = vmatprep.subr.bf16.mxu0 0
  %3017 = vmatpush1.bf16.msra.mxu0 0
  %3018 = vmatprep.subr.bf16.mxu0 0
  %3019 = vmatpush1.bf16.msra.mxu0 0
  %3020 = vmatprep.subr.bf16.mxu0 0
  %3021 = vmatpush1.bf16.msra.mxu0 0
  %3022 = vmatprep.subr.bf16.mxu0 0
  %3023 = vmatpush1.bf16.msra.mxu0 0
  %3024 = vmatprep.subr.bf16.mxu0 0
  %3025 = vmatpush1.bf16.msra.mxu0 0
  %3026 = vmatprep.subr.bf16.mxu0 0
  %3027 = vmatpush1.bf16.msra.mxu0 0
  %3028 = vmatprep.subr.bf16.mxu0 0
  %3029 = vmatpush1.bf16.msra.mxu0 0
  %3030 = vmatprep.subr.bf16.mxu0 0
  %3031 = vmatpush1.bf16.msra.mxu0 0
  %3032 = vmatprep.subr.bf16.mxu0 0
  %3033 = vmatpush1.bf16.msra.mxu0 0
  %3034 = vmatprep.subr.bf16.mxu0 0
  %3035 = vmatpush1.bf16.msra.mxu0 0
  %3036 = vmatprep.subr.bf16.mxu0 0
  %3037 = vmatpush1.bf16.msra.mxu0 0
  %3038 = vmatprep.subr.bf16.mxu0 0
  %3039 = vmatpush1.bf16.msra.mxu0 0
  %3040 = vmatprep.subr.bf16.mxu0 0
  %3041 = vmatpush1.bf16.msra.mxu0 0
  %3042 = vmatprep.mubr.bf16.mxu0 0
  %3043 = vmatmul.mubr.bf16.gmra.mrb[0].mxu0 %v2699
  %v3044 = vpop.f32.mrb[0].mxu0
  %v3045 = vadd.f32 %v2686, %v3044
  %v3046 = vpop.f32.mrb[0].mxu0
  %v3047 = vpop.f32.mrb[0].mxu0
  %v3048 = vadd.f32 %v2688, %v3047
  %v3049 = vpop.f32.mrb[0].mxu0
  %3050 = vmatprep.mubr.bf16.mxu0 0
  %3051 = vmatmul.mubr.bf16.gmra.mrb[0].mxu0 %v2702
  %v3052 = vpop.f32.mrb[0].mxu0
  %v3053 = vadd.f32 %v2690, %v3052
  %v3054 = vpop.f32.mrb[0].mxu0
  %v3055 = vpop.f32.mrb[0].mxu0
  %v3056 = vadd.f32 %v2692, %v3055
  %v3057 = vpop.f32.mrb[0].mxu0
  %3058 = vdwg.mxu0
  %v3059 = vmax.f32 %v3045, 0.0
  %v3060 = vmax.f32 %v3048, 0.0
  %v3061 = vmax.f32 %v3053, 0.0
  %v3062 = vmax.f32 %v3056, 0.0
  %v3063 = vpack.c.bf16 %v3060, %v3059
  %v3064 = vpack.c.bf16 %v3062, %v3061
  %3065 = vmatprep.subr.bf16.mxu0 0
  %3066 = vmatpush1.bf16.msra.mxu0 %v3063
  %3067 = vmatprep.subr.bf16.mxu0 0
  %3068 = vmatpush1.bf16.msra.mxu0 %v3064
  %3069 = vmatprep.subr.bf16.mxu0 0
  %3070 = vmatpush1.bf16.msra.mxu0 0
  %3071 = vmatprep.subr.bf16.mxu0 0
  %3072 = vmatpush1.bf16.msra.mxu0 0
  %3073 = vmatprep.subr.bf16.mxu0 0
  %3074 = vmatpush1.bf16.msra.mxu0 0
  %3075 = vmatprep.subr.bf16.mxu0 0
  %3076 = vmatpush1.bf16.msra.mxu0 0
  %3077 = vmatprep.subr.bf16.mxu0 0
  %3078 = vmatpush1.bf16.msra.mxu0 0
  %3079 = vmatprep.subr.bf16.mxu0 0
  %3080 = vmatpush1.bf16.msra.mxu0 0
  %3081 = vmatprep.subr.bf16.mxu0 0
  %3082 = vmatpush1.bf16.msra.mxu0 0
  %3083 = vmatprep.subr.bf16.mxu0 0
  %3084 = vmatpush1.bf16.msra.mxu0 0
  %3085 = vmatprep.subr.bf16.mxu0 0
  %3086 = vmatpush1.bf16.msra.mxu0 0
  %3087 = vmatprep.subr.bf16.mxu0 0
  %3088 = vmatpush1.bf16.msra.mxu0 0
  %3089 = vmatprep.subr.bf16.mxu0 0
  %3090 = vmatpush1.bf16.msra.mxu0 0
  %3091 = vmatprep.subr.bf16.mxu0 0
  %3092 = vmatpush1.bf16.msra.mxu0 0
  %3093 = vmatprep.subr.bf16.mxu0 0
  %3094 = vmatpush1.bf16.msra.mxu0 0
  %3095 = vmatprep.subr.bf16.mxu0 0
  %3096 = vmatpush1.bf16.msra.mxu0 0
  %3097 = vmatprep.mubr.bf16.mxu0 0
  %3098 = vmatmul.mubr.bf16.gmra.mrb[0].mxu0 %v2780
  %v3099 = vpop.f32.mrb[0].mxu0
  %v3100 = vadd.f32 0.0, %v3099
  %v3101 = vpop.f32.mrb[0].mxu0
  %v3102 = vpop.f32.mrb[0].mxu0
  %v3103 = vadd.f32 0.0, %v3102
  %v3104 = vpop.f32.mrb[0].mxu0
  %3105 = vmatprep.mubr.bf16.mxu0 0
  %3106 = vmatmul.mubr.bf16.gmra.mrb[0].mxu0 %v2783
  %v3107 = vpop.f32.mrb[0].mxu0
  %v3108 = vadd.f32 0.0, %v3107
  %v3109 = vpop.f32.mrb[0].mxu0
  %v3110 = vpop.f32.mrb[0].mxu0
  %v3111 = vadd.f32 0.0, %v3110
  %v3112 = vpop.f32.mrb[0].mxu0
  %3113 = vmatprep.mubr.bf16.mxu0 0
  %3114 = vmatmul.mubr.bf16.gmra.mrb[0].mxu0 %v2786
  %v3115 = vpop.f32.mrb[0].mxu0
  %v3116 = vadd.f32 0.0, %v3115
  %v3117 = vpop.f32.mrb[0].mxu0
  %v3118 = vpop.f32.mrb[0].mxu0
  %v3119 = vadd.f32 0.0, %v3118
  %v3120 = vpop.f32.mrb[0].mxu0
  %3121 = vmatprep.mubr.bf16.mxu0 0
  %3122 = vmatmul.mubr.bf16.gmra.mrb[0].mxu0 %v2789
  %v3123 = vpop.f32.mrb[0].mxu0
  %v3124 = vadd.f32 0.0, %v3123
  %v3125 = vpop.f32.mrb[0].mxu0
  %v3126 = vpop.f32.mrb[0].mxu0
  %v3127 = vadd.f32 0.0, %v3126
  %v3128 = vpop.f32.mrb[0].mxu0
  %3129 = vdwg.mxu0
  %v3130 = vsub.f32 %v3100, %v3116
  %v3131 = vsub.f32 %v3103, %v3119
  %v3132 = vsub.f32 %v3108, %v3124
  %v3133 = vsub.f32 %v3111, %v3127
  %v3134 = vxor.u32 %v3130, 2147483648
  %v3135 = vxor.u32 %v3131, 2147483648
  %v3136 = vxor.u32 %v3132, 2147483648
  %v3137 = vxor.u32 %v3133, 2147483648
  %v3138 = vmul.f32 %v3134, 1.442695
  %v3139 = vpow.pop %v3138
  %v3140 = vmul.f32 %v3135, 1.442695
  %v3141 = vpow.pop %v3140
  %v3142 = vmul.f32 %v3136, 1.442695
  %v3143 = vpow.pop %v3142
  %v3144 = vmul.f32 %v3137, 1.442695
  %v3145 = vpow.pop %v3144
  %v3146 = vadd.f32 %v3139, 1.0
  %v3147 = vadd.f32 %v3141, 1.0
  %v3148 = vadd.f32 %v3143, 1.0
  %v3149 = vadd.f32 %v3145, 1.0
  %v3150 = vrcp.pop %v3146
  %v3151 = vmul.f32 1.0, %v3150
  %v3152 = vrcp.pop %v3147
  %v3153 = vmul.f32 1.0, %v3152
  %v3154 = vrcp.pop %v3148
  %v3155 = vmul.f32 1.0, %v3154
  %v3156 = vrcp.pop %v3149
  %v3157 = vmul.f32 1.0, %v3156
  %v3158 = vsub.f32 %v1445, %v2622
  %v3159 = vsub.f32 %v1446, %v2623
  %v3160 = vsub.f32 %v1449, %v2626
  %v3161 = vsub.f32 %v1450, %v2627
  %v3162 = vsub.f32 %v1453, %v2630
  %v3163 = vsub.f32 %v1454, %v2631
  %v3164 = vsub.f32 %v1457, %v2634
  %v3165 = vsub.f32 %v1458, %v2635
  %3167 = vset.pattern.permute.xlu0 0
  %3168 = vperm.xlu0 %3167, %v3151
  %v3169 = vpop.permute.xlu0 %3168
  %3172 = vset.pattern.permute.xlu0 0
  %3173 = vperm.xlu0 %3172, %v3153
  %v3174 = vpop.permute.xlu0 %3173
  %3177 = vset.pattern.permute.xlu0 0
  %3178 = vperm.xlu0 %3177, %v3155
  %v3179 = vpop.permute.xlu0 %3178
  %3182 = vset.pattern.permute.xlu0 0
  %3183 = vperm.xlu0 %3182, %v3157
  %v3184 = vpop.permute.xlu0 %3183
  %v3186 = vmul.f32 %v3169, %v3158
  %v3187 = vmul.f32 %v3169, %v3159
  %v3188 = vmul.f32 %v3174, %v3160
  %v3189 = vmul.f32 %v3174, %v3161
  %v3190 = vmul.f32 %v3179, %v3162
  %v3191 = vmul.f32 %v3179, %v3163
  %v3192 = vmul.f32 %v3184, %v3164
  %v3193 = vmul.f32 %v3184, %v3165
  %v3194 = vadd.f32 %v2622, %v3186
  %v3195 = vadd.f32 %v2623, %v3187
  %v3196 = vadd.f32 %v2626, %v3188
  %v3197 = vadd.f32 %v2627, %v3189
  %v3198 = vadd.f32 %v2630, %v3190
  %v3199 = vadd.f32 %v2631, %v3191
  %v3200 = vadd.f32 %v2634, %v3192
  %v3201 = vadd.f32 %v2635, %v3193
  %v3202 = vpack.c.bf16 %v3196, %v3194
  %v3203 = vpack.c.bf16 %v3197, %v3195
  %v3204 = vpack.c.bf16 %v3200, %v3198
  %v3205 = vpack.c.bf16 %v3201, %v3199
  %3206 = vmatprep.subr.bf16.mxu0 %v3203
  %3207 = vmatpush1.bf16.msra.mxu0 %v3202
  %3208 = vmatprep.subr.bf16.mxu0 %v3205
  %3209 = vmatpush1.bf16.msra.mxu0 %v3204
  %3210 = vmatprep.subr.bf16.mxu0 0
  %3211 = vmatpush1.bf16.msra.mxu0 0
  %3212 = vmatprep.subr.bf16.mxu0 0
  %3213 = vmatpush1.bf16.msra.mxu0 0
  %3214 = vmatprep.subr.bf16.mxu0 0
  %3215 = vmatpush1.bf16.msra.mxu0 0
  %3216 = vmatprep.subr.bf16.mxu0 0
  %3217 = vmatpush1.bf16.msra.mxu0 0
  %3218 = vmatprep.subr.bf16.mxu0 0
  %3219 = vmatpush1.bf16.msra.mxu0 0
  %3220 = vmatprep.subr.bf16.mxu0 0
  %3221 = vmatpush1.bf16.msra.mxu0 0
  %3222 = vmatprep.subr.bf16.mxu0 0
  %3223 = vmatpush1.bf16.msra.mxu0 0
  %3224 = vmatprep.subr.bf16.mxu0 0
  %3225 = vmatpush1.bf16.msra.mxu0 0
  %3226 = vmatprep.subr.bf16.mxu0 0
  %3227 = vmatpush1.bf16.msra.mxu0 0
  %3228 = vmatprep.subr.bf16.mxu0 0
  %3229 = vmatpush1.bf16.msra.mxu0 0
  %3230 = vmatprep.subr.bf16.mxu0 0
  %3231 = vmatpush1.bf16.msra.mxu0 0
  %3232 = vmatprep.subr.bf16.mxu0 0
  %3233 = vmatpush1.bf16.msra.mxu0 0
  %3234 = vmatprep.subr.bf16.mxu0 0
  %3235 = vmatpush1.bf16.msra.mxu0 0
  %3236 = vmatprep.subr.bf16.mxu0 0
  %3237 = vmatpush1.bf16.msra.mxu0 0
  %3238 = vmatprep.mubr.bf16.mxu0 0
  %3239 = vmatmul.mubr.bf16.gmra.mrb[0].mxu0 %v2937
  %v3240 = vpop.f32.mrb[0].mxu0
  %v3241 = vadd.f32 %v2934, %v3240
  %v3242 = vpop.f32.mrb[0].mxu0
  %v3243 = vadd.f32 %v2934, %v3242
  %v3244 = vpop.f32.mrb[0].mxu0
  %v3245 = vpop.f32.mrb[0].mxu0
  %3246 = vdwg.mxu0
  %v3247 = vadd.f32 %v32, %v3241
  %v3248 = vadd.f32 %v33, %v3243
  %3249 = vst [vmem:[%s8 + $0x10] sm:$0xff] %v3247
  %3250 = vst [vmem:[%s8 + $0x18] sm:$0xff] %v3248
  // Predicated region
  $region34: #{mbconv_forward.1} parent=0 // pred_check
    _
  $region35: #{mbconv_forward.1} parent=0 // pred_check_branch
    %3252 = sbr.rel (0) target = $region37
  $region36: #{mbconv_forward.1} parent=0 // pred_region
    _
  $region37: #{mbconv_forward.1} parent=0 // pred_fallthru
    _
  // Predicated region
  $region38: #{mbconv_forward.1} parent=0 // pred_check
    _
  $region39: #{mbconv_forward.1} parent=0 // pred_check_branch
    %3254 = sbr.rel (0) target = $region41
  $region40: #{mbconv_forward.1} parent=0 // pred_region
    _
  $region41: #{mbconv_forward.1} parent=0 // pred_fallthru
    _

</llo_original>
